<compile_context>
chip_gen: v5e
topology: v5e:2x2
jax: 0.10.0
libtpu: 0.0.40
codegen_flags: <defaults>
</compile_context>

<pallas_src>
import functools

import jax
import jax.numpy as jnp
import numpy as np
from jax import lax
from jax.experimental import pallas as pl
from jax.experimental.pallas import tpu as pltpu

_LANE = 128
_SUBLANE_BF16 = 16   # bf16 packs 2 rows per sublane -> min bf16 tile is (16, 128)


def _round_up(x, m):
    return (x + m - 1) // m * m


def _tensorcores_per_chip():
    """Best-effort detection of megacore chips (2 TensorCores presented as 1 device)."""
    try:
        kind = jax.devices()[0].device_kind.lower()
    except Exception:
        return 1
    if "v7" in kind or "7x" in kind or "v4" in kind or "v3" in kind:
        return 2
    return 1


def _fused_lstm_kernel(x_ref, wih_ref, whh_ref, b_ref,
                       out_ref, hN_ref, cN_ref,
                       h_scr, c_scr, act_scr, xg_scr,
                       *, num_layers, hid_pad, t_chunk, seq_len, unroll):
    """Fused multi-layer LSTM over one (batch block, time chunk) grid cell.

    Grid: (batch_blocks [parallel], time_chunks [arbitrary / sequential]).
    h/c live in VMEM scratch and persist across time chunks; all layers of a chunk are
    processed in one invocation, so inter-layer activations never touch HBM.
    """
    chunk = pl.program_id(1)
    num_chunks = pl.num_programs(1)
    H = hid_pad
    G = 4 * H
    B = h_scr.shape[1]
    d_max = act_scr.shape[-1]
    pad_tail = (seq_len % t_chunk) != 0          # static

    # Fresh state at the start of every batch block's time sweep.
    @pl.when(chunk == 0)
    def _():
        h_scr[...] = jnp.zeros_like(h_scr)
        c_scr[...] = jnp.zeros_like(c_scr)
        # The (never written) feature-padding region of the inter-layer buffer must be
        # zero so uninitialized scratch cannot leak into the next layer's matmul.
        # It is only needed once per batch block (that region is never overwritten).
        if d_max > H and num_layers > 1:
            act_scr[:, :, H:] = jnp.zeros((t_chunk, B, d_max - H), act_scr.dtype)

    for layer in range(num_layers):
        w_ih = wih_ref[layer]                    # (d_max, 4H)  bf16, pre-transposed
        w_hh = whh_ref[layer]                    # (H, 4H)      bf16, pre-transposed
        bias = b_ref[layer]                      # (1, 4H)      f32

        if layer == 0:
            x_in = x_ref[...]                    # (t_chunk, B, d_max) bf16
        else:
            x_in = act_scr[...]                  # (t_chunk, B, d_max) bf16

        # Sequence-independent input projection + bias, hoisted out of the recurrence:
        # one large, lane-dense MXU matmul per layer per chunk. Stored bf16 (xg_scr) and
        # upcast per step; gate math stays f32.
        xg = jnp.dot(x_in.reshape(t_chunk * B, d_max), w_ih,
                     preferred_element_type=jnp.float32)
        xg_scr[...] = (xg.reshape(t_chunk, B, G) + bias).astype(xg_scr.dtype)

        last_layer = layer == num_layers - 1

        def step(t, carry, _w_hh=w_hh, _last=last_layer):
            h_prev, c_prev = carry               # (B, H) f32 carried in vregs
            gates = xg_scr[t].astype(jnp.float32) + jnp.dot(
                h_prev.astype(jnp.bfloat16), _w_hh,
                preferred_element_type=jnp.float32)
            # PyTorch gate order [i, f, g, o]; slices are 128-lane aligned.
            i_g = jax.nn.sigmoid(gates[:, 0 * H:1 * H])
            f_g = jax.nn.sigmoid(gates[:, 1 * H:2 * H])
            g_g = jnp.tanh(gates[:, 2 * H:3 * H])
            o_g = jax.nn.sigmoid(gates[:, 3 * H:4 * H])
            c_new = f_g * c_prev + i_g * g_g
            h_new = o_g * jnp.tanh(c_new)
            if pad_tail:
                # Padded tail time steps must not update the recurrent state
                # (protects h_n / c_n); padded output rows are cropped by the wrapper.
                valid = (chunk * t_chunk + t) < seq_len
                h_new = jnp.where(valid, h_new, h_prev)
                c_new = jnp.where(valid, c_new, c_prev)
            if _last:
                out_ref[t] = h_new.astype(out_ref.dtype)
            else:
                if d_max == H:
                    act_scr[t] = h_new.astype(act_scr.dtype)
                else:
                    act_scr[t, :, 0:H] = h_new.astype(act_scr.dtype)
            return (h_new, c_new)

        h0 = h_scr[layer]
        c0 = c_scr[layer]
        h_fin, c_fin = lax.fori_loop(0, t_chunk, step, (h0, c0), unroll=unroll)
        # Spill the carried state to the persistent VMEM scratch once per chunk.
        h_scr[layer] = h_fin
        c_scr[layer] = c_fin

    @pl.when(chunk == num_chunks - 1)
    def _():
        hN_ref[...] = h_scr[...].astype(hN_ref.dtype)
        cN_ref[...] = c_scr[...].astype(cN_ref.dtype)


def lstm_forward_pallas(x_emb, layers):
    """x_emb: (T, B, E) f32. layers: list of (w_ih (4H,Din), w_hh (4H,H), bias (4H,)).
    Returns out (T,B,H) f32, h_n (L,B,H) f32, c_n (L,B,H) f32."""
    T, B, E = x_emb.shape
    L = len(layers)
    H = layers[0][1].shape[1]

    H_pad = _round_up(H, _LANE)
    G = 4 * H_pad
    E_pad = _round_up(E, _LANE)
    D_max = max(E_pad, H_pad)

    # ---- batch blocking: 16-row granule (bf16 tile), whole batch in one block on
    #      single-TC chips, >=2 blocks on megacore chips so both cores get work ----
    B16 = _round_up(B, _SUBLANE_BF16)
    n_tc = _tensorcores_per_chip()
    if n_tc > 1 and B16 >= 2 * _SUBLANE_BF16:
        b_blk = _round_up(-(-B16 // n_tc), _SUBLANE_BF16)
    else:
        b_blk = min(B16, 256)
    B_pad = _round_up(B16, b_blk)
    num_b_blocks = B_pad // b_blk

    t_chunk = min(T, 32)
    num_chunks = -(-T // t_chunk)
    T_pad = num_chunks * t_chunk

    # Cap unroll so the unrolled recurrence (carried h/c + gate temporaries) does not
    # blow the 64-vreg file at large b_blk * H_pad.
    carry_vregs = (2 * b_blk * H_pad) // 1024
    unroll = int(t_chunk) if carry_vregs <= 16 else min(8, int(t_chunk))

    # ---- pack & pad parameters (trace-time; constant under jit) ----
    # Pre-transpose to (D_in, 4H) / (H, 4H); pad each gate block H -> H_pad so the
    # kernel's gate slices stay 128-lane aligned; cast weights to bf16 for the MXU.
    wih_l, whh_l, b_l = [], [], []
    for (w_ih, w_hh, bias) in layers:
        d_in = w_ih.shape[1]
        wi = w_ih.T.reshape(d_in, 4, H)
        wi = jnp.pad(wi, ((0, D_max - d_in), (0, 0), (0, H_pad - H)))
        wih_l.append(wi.reshape(D_max, G))
        wh = w_hh.T.reshape(H, 4, H)
        wh = jnp.pad(wh, ((0, H_pad - H), (0, 0), (0, H_pad - H)))
        whh_l.append(wh.reshape(H_pad, G))
        bb = jnp.pad(bias.reshape(4, H), ((0, 0), (0, H_pad - H)))
        b_l.append(bb.reshape(1, G))
    wih_stack = jnp.stack(wih_l, 0).astype(jnp.bfloat16)    # (L, D_max, G)
    whh_stack = jnp.stack(whh_l, 0).astype(jnp.bfloat16)    # (L, H_pad, G)
    bias_stack = jnp.stack(b_l, 0).astype(jnp.float32)      # (L, 1, G)

    # ---- pad the embedded input and cast to bf16 ----
    x = jnp.pad(x_emb, ((0, T_pad - T), (0, B_pad - B), (0, D_max - E)))
    x = x.astype(jnp.bfloat16)

    kernel = functools.partial(
        _fused_lstm_kernel,
        num_layers=L, hid_pad=H_pad, t_chunk=t_chunk, seq_len=T, unroll=unroll)

    out, h_n, c_n = pl.pallas_call(
        kernel,
        out_shape=(
            jax.ShapeDtypeStruct((T_pad, B_pad, H_pad), jnp.float32),
            jax.ShapeDtypeStruct((L, B_pad, H_pad), jnp.float32),
            jax.ShapeDtypeStruct((L, B_pad, H_pad), jnp.float32),
        ),
        grid_spec=pltpu.PrefetchScalarGridSpec(
            num_scalar_prefetch=0,
            grid=(num_b_blocks, num_chunks),
            in_specs=[
                pl.BlockSpec((t_chunk, b_blk, D_max), lambda b, c: (c, b, 0)),
                # Weights / bias: whole-array resident in VMEM, fetched once and
                # single-buffered (constant across the grid, so no pipelining needed).
                pl.BlockSpec(memory_space=pltpu.MemorySpace.VMEM),
                pl.BlockSpec(memory_space=pltpu.MemorySpace.VMEM),
                pl.BlockSpec(memory_space=pltpu.MemorySpace.VMEM),
            ],
            out_specs=[
                pl.BlockSpec((t_chunk, b_blk, H_pad), lambda b, c: (c, b, 0)),
                pl.BlockSpec((L, b_blk, H_pad), lambda b, c: (0, b, 0)),
                pl.BlockSpec((L, b_blk, H_pad), lambda b, c: (0, b, 0)),
            ],
            scratch_shapes=[
                pltpu.VMEM((L, b_blk, H_pad), jnp.float32),        # h carry
                pltpu.VMEM((L, b_blk, H_pad), jnp.float32),        # c carry
                pltpu.VMEM((t_chunk, b_blk, D_max), jnp.bfloat16), # inter-layer acts
                pltpu.VMEM((t_chunk, b_blk, G), jnp.bfloat16),     # hoisted x@W_ih + b
            ],
        ),
        compiler_params=pltpu.CompilerParams(
            dimension_semantics=("parallel", "arbitrary"),
        ),
    )(x, wih_stack, whh_stack, bias_stack)

    return out[:T, :B, :H], h_n[:, :B, :H], c_n[:, :B, :H]


def init_params(key, emb_dim, hid_dim, v_size, num_layers):
    """Deterministic parameter init mirroring nn.Embedding / nn.LSTM shapes."""
    params = {}
    k_emb, key = jax.random.split(key)
    params["embedding"] = jax.random.normal(k_emb, (v_size, emb_dim), jnp.float32)
    bound = 1.0 / np.sqrt(hid_dim)
    layers = []
    for layer in range(num_layers):
        d_in = emb_dim if layer == 0 else hid_dim
        k1, k2, k3, k4, key = jax.random.split(key, 5)
        w_ih = jax.random.uniform(k1, (4 * hid_dim, d_in), jnp.float32, -bound, bound)
        w_hh = jax.random.uniform(k2, (4 * hid_dim, hid_dim), jnp.float32, -bound, bound)
        b_ih = jax.random.uniform(k3, (4 * hid_dim,), jnp.float32, -bound, bound)
        b_hh = jax.random.uniform(k4, (4 * hid_dim,), jnp.float32, -bound, bound)
        layers.append((w_ih, w_hh, b_ih + b_hh))
    params["lstm"] = layers
    return params


@jax.jit
def encoder_attention_forward(params, text):
    """text: (T, B) int32.  Returns (output, (h_n, c_n)) like the PyTorch module."""
    # TODO(synk): embedding gather could be fused into the kernel via scalar-prefetch
    #             row gather; kept as a plain JAX take for now.
    embedding = jnp.take(params["embedding"], text, axis=0)   # (T, B, emb_dim)
    out, h_n, c_n = lstm_forward_pallas(embedding, params["lstm"])
    return out, (h_n, c_n)


def _reference_forward(params, text):
    """Pure-JAX f32 reference (lax.scan) for verification."""
    embedding = jnp.take(params["embedding"], text, axis=0)
    x = embedding
    h_list, c_list = [], []
    for (w_ih, w_hh, bias) in params["lstm"]:
        H = w_hh.shape[1]
        B = x.shape[1]
        h0 = jnp.zeros((B, H), jnp.float32)
        c0 = jnp.zeros((B, H), jnp.float32)

        def step(carry, x_t, w_ih=w_ih, w_hh=w_hh, bias=bias, H=H):
            h, c = carry
            gates = (jnp.dot(x_t, w_ih.T, precision=lax.Precision.HIGHEST)
                     + jnp.dot(h, w_hh.T, precision=lax.Precision.HIGHEST)
                     + bias)
            i = jax.nn.sigmoid(gates[:, 0 * H:1 * H])
            f = jax.nn.sigmoid(gates[:, 1 * H:2 * H])
            g = jnp.tanh(gates[:, 2 * H:3 * H])
            o = jax.nn.sigmoid(gates[:, 3 * H:4 * H])
            c_new = f * c + i * g
            h_new = o * jnp.tanh(c_new)
            return (h_new, c_new), h_new

        (h_n, c_n), out = lax.scan(step, (h0, c0), x)
        x = out
        h_list.append(h_n)
        c_list.append(c_n)
    return x, (jnp.stack(h_list, 0), jnp.stack(c_list, 0))


if __name__ == "__main__":
    # Small shapes consistent with the module: seq=8, batch=2, emb=16, hid=32, vocab=50, layers=2
    T, B = 8, 2
    EMB_DIM, HID_DIM, V_SIZE, NUM_LAYERS = 16, 32, 50, 2

    key = jax.random.PRNGKey(0)
    k_params, k_text = jax.random.split(key)
    params = init_params(k_params, EMB_DIM, HID_DIM, V_SIZE, NUM_LAYERS)
    text = jax.random.randint(k_text, (T, B), 0, V_SIZE, dtype=jnp.int32)  # (T, B), batch_first=False

    output, (h_n, c_n) = encoder_attention_forward(params, text)
    jax.block_until_ready((output, h_n, c_n))

    # Verify against pure-JAX f32 reference. Kernel matmuls use bf16 weights/inputs with
    # f32 accumulation, and the hoisted input projection is stored in bf16, so
    # tolerances are loosened accordingly.
    ref_out, (ref_h, ref_c) = _reference_forward(params, text)
    np.testing.assert_allclose(np.asarray(output), np.asarray(ref_out), atol=3e-2, rtol=3e-2)
    np.testing.assert_allclose(np.asarray(h_n), np.asarray(ref_h), atol=3e-2, rtol=3e-2)
    np.testing.assert_allclose(np.asarray(c_n), np.asarray(ref_c), atol=3e-2, rtol=3e-2)

    assert output.shape == (T, B, HID_DIM)
    assert h_n.shape == (NUM_LAYERS, B, HID_DIM)
    assert c_n.shape == (NUM_LAYERS, B, HID_DIM)

    print("KERNEL_OK")
</pallas_src>

<mosaic_0001>
module attributes {stable_mosaic.version = 11 : i64} {
  func.func @_fused_lstm_kernel(%arg0: i32, %arg1: i32, %arg2: memref<8x16x128xbf16, #tpu.memory_space<vmem>>, %arg3: memref<2x128x512xbf16, #tpu.memory_space<vmem>>, %arg4: memref<2x128x512xbf16, #tpu.memory_space<vmem>>, %arg5: memref<2x1x512xf32, #tpu.memory_space<vmem>>, %arg6: memref<8x16x128xf32, #tpu.memory_space<vmem>>, %arg7: memref<2x16x128xf32, #tpu.memory_space<vmem>>, %arg8: memref<2x16x128xf32, #tpu.memory_space<vmem>>, %arg9: memref<2x16x128xf32, #tpu.memory_space<vmem>>, %arg10: memref<2x16x128xf32, #tpu.memory_space<vmem>>, %arg11: memref<8x16x128xbf16, #tpu.memory_space<vmem>>, %arg12: memref<8x16x512xbf16, #tpu.memory_space<vmem>>) attributes {dimension_semantics = [#tpu.dimension_semantics<parallel>, #tpu.dimension_semantics<arbitrary>], iteration_bounds = array<i64: 1, 1>, scalar_prefetch = 0 : i64, scratch_operands = 4 : i64, tpu.core_type = #tpu.core_type<tc>, window_params = [{transform_indices = @transform_0, window_bounds = array<i64: 8, 16, 128>}, {pipeline_mode = #tpu.pipeline_mode<synchronous>, transform_indices = @transform_1, window_bounds = array<i64: 2, 128, 512>}, {pipeline_mode = #tpu.pipeline_mode<synchronous>, transform_indices = @transform_2, window_bounds = array<i64: 2, 128, 512>}, {pipeline_mode = #tpu.pipeline_mode<synchronous>, transform_indices = @transform_3, window_bounds = array<i64: 2, 1, 512>}, {transform_indices = @transform_4, window_bounds = array<i64: 8, 16, 128>}, {transform_indices = @transform_5, window_bounds = array<i64: 2, 16, 128>}, {transform_indices = @transform_6, window_bounds = array<i64: 2, 16, 128>}]} {
    %c0_i32 = arith.constant 0 : i32
    %0 = arith.cmpi eq, %arg1, %c0_i32 : i32
    %1 = arith.extui %0 : i1 to i32
    %c0_i32_0 = arith.constant 0 : i32
    %2 = arith.cmpi ne, %1, %c0_i32_0 : i32
    scf.if %2 {
      %cst_194 = arith.constant 0.000000e+00 : f32
      %640 = vector.broadcast %cst_194 : f32 to vector<2x16x128xf32>
      %c0_195 = arith.constant 0 : index
      %c0_196 = arith.constant 0 : index
      %c0_197 = arith.constant 0 : index
      %641 = vector.load %arg9[%c0_195, %c0_196, %c0_197] : memref<2x16x128xf32, #tpu.memory_space<vmem>>, vector<2x16x128xf32>
      tpu.vector_store %arg9[%c0_195, %c0_196, %c0_197], %640 {strides = array<i32>} : memref<2x16x128xf32, #tpu.memory_space<vmem>>, vector<2x16x128xf32>,
      %cst_198 = arith.constant 0.000000e+00 : f32
      %642 = vector.broadcast %cst_198 : f32 to vector<2x16x128xf32>
      %c0_199 = arith.constant 0 : index
      %c0_200 = arith.constant 0 : index
      %c0_201 = arith.constant 0 : index
      %643 = vector.load %arg10[%c0_199, %c0_200, %c0_201] : memref<2x16x128xf32, #tpu.memory_space<vmem>>, vector<2x16x128xf32>
      tpu.vector_store %arg10[%c0_199, %c0_200, %c0_201], %642 {strides = array<i32>} : memref<2x16x128xf32, #tpu.memory_space<vmem>>, vector<2x16x128xf32>,
    } else {
    }
    %c0 = arith.constant 0 : index
    %c0_1 = arith.constant 0 : index
    %c0_2 = arith.constant 0 : index
    %3 = vector.load %arg3[%c0, %c0_1, %c0_2] : memref<2x128x512xbf16, #tpu.memory_space<vmem>>, vector<1x128x512xbf16>
    %4 = vector.shape_cast %3 : vector<1x128x512xbf16> to vector<128x512xbf16>
    %c0_3 = arith.constant 0 : index
    %c0_4 = arith.constant 0 : index
    %c0_5 = arith.constant 0 : index
    %5 = vector.load %arg4[%c0_3, %c0_4, %c0_5] : memref<2x128x512xbf16, #tpu.memory_space<vmem>>, vector<1x128x512xbf16>
    %6 = vector.shape_cast %5 : vector<1x128x512xbf16> to vector<128x512xbf16>
    %c0_6 = arith.constant 0 : index
    %c0_7 = arith.constant 0 : index
    %c0_8 = arith.constant 0 : index
    %7 = vector.load %arg5[%c0_6, %c0_7, %c0_8] : memref<2x1x512xf32, #tpu.memory_space<vmem>>, vector<1x1x512xf32>
    %8 = vector.shape_cast %7 : vector<1x1x512xf32> to vector<1x512xf32>
    %c0_9 = arith.constant 0 : index
    %c0_10 = arith.constant 0 : index
    %c0_11 = arith.constant 0 : index
    %9 = vector.load %arg2[%c0_9, %c0_10, %c0_11] : memref<8x16x128xbf16, #tpu.memory_space<vmem>>, vector<8x16x128xbf16>
    %10 = vector.shape_cast %9 : vector<8x16x128xbf16> to vector<128x128xbf16>
    %cst = arith.constant dense<0.000000e+00> : vector<128x512xf32>
    %11 = tpu.matmul %10, %4, %cst {dimension_numbers = #tpu.dot_dimension_numbers<[1], [0], [0], [1], [0, 0, 1, 1], [], []>} : vector<128x128xbf16>, vector<128x512xbf16>, vector<128x512xf32> -> vector<128x512xf32>
    %12 = vector.shape_cast %11 : vector<128x512xf32> to vector<8x16x512xf32>
    %13 = vector.shape_cast %8 : vector<1x512xf32> to vector<1x1x512xf32>
    %14 = vector.broadcast %13 : vector<1x1x512xf32> to vector<8x16x512xf32>
    %15 = arith.addf %12, %14 : vector<8x16x512xf32>
    %16 = arith.truncf %15 : vector<8x16x512xf32> to vector<8x16x512xbf16>
    %c0_12 = arith.constant 0 : index
    %c0_13 = arith.constant 0 : index
    %c0_14 = arith.constant 0 : index
    %17 = vector.load %arg12[%c0_12, %c0_13, %c0_14] : memref<8x16x512xbf16, #tpu.memory_space<vmem>>, vector<8x16x512xbf16>
    tpu.vector_store %arg12[%c0_12, %c0_13, %c0_14], %16 {strides = array<i32>} : memref<8x16x512xbf16, #tpu.memory_space<vmem>>, vector<8x16x512xbf16>,
    %c0_15 = arith.constant 0 : index
    %c0_16 = arith.constant 0 : index
    %c0_17 = arith.constant 0 : index
    %18 = vector.load %arg9[%c0_15, %c0_16, %c0_17] : memref<2x16x128xf32, #tpu.memory_space<vmem>>, vector<1x16x128xf32>
    %19 = vector.shape_cast %18 : vector<1x16x128xf32> to vector<16x128xf32>
    %c0_18 = arith.constant 0 : index
    %c0_19 = arith.constant 0 : index
    %c0_20 = arith.constant 0 : index
    %20 = vector.load %arg10[%c0_18, %c0_19, %c0_20] : memref<2x16x128xf32, #tpu.memory_space<vmem>>, vector<1x16x128xf32>
    %21 = vector.shape_cast %20 : vector<1x16x128xf32> to vector<16x128xf32>
    %c0_i32_21 = arith.constant 0 : i32
    %22 = arith.index_cast %c0_i32_21 : i32 to index
    %c0_22 = arith.constant 0 : index
    %c0_23 = arith.constant 0 : index
    %23 = vector.load %arg12[%22, %c0_22, %c0_23] : memref<8x16x512xbf16, #tpu.memory_space<vmem>>, vector<1x16x512xbf16>
    %24 = vector.shape_cast %23 : vector<1x16x512xbf16> to vector<16x512xbf16>
    %25 = arith.extf %24 : vector<16x512xbf16> to vector<16x512xf32>
    %26 = arith.truncf %19 : vector<16x128xf32> to vector<16x128xbf16>
    %cst_24 = arith.constant dense<0.000000e+00> : vector<16x512xf32>
    %27 = tpu.matmul %26, %6, %cst_24 {dimension_numbers = #tpu.dot_dimension_numbers<[1], [0], [0], [1], [0, 0, 1, 1], [], []>} : vector<16x128xbf16>, vector<128x512xbf16>, vector<16x512xf32> -> vector<16x512xf32>
    %28 = arith.addf %25, %27 : vector<16x512xf32>
    %29 = vector.extract_strided_slice %28 {offsets = [0, 0], sizes = [16, 128], strides = [1, 1]} : vector<16x512xf32> to vector<16x128xf32>
    %30 = arith.negf %29 : vector<16x128xf32>
    %31 = math.exp %30 : vector<16x128xf32>
    %cst_25 = arith.constant 1.000000e+00 : f32
    %32 = vector.broadcast %cst_25 : f32 to vector<16x128xf32>
    %33 = arith.addf %32, %31 : vector<16x128xf32>
    %34 = arith.divf %32, %33 : vector<16x128xf32>
    %35 = vector.extract_strided_slice %28 {offsets = [0, 128], sizes = [16, 128], strides = [1, 1]} : vector<16x512xf32> to vector<16x128xf32>
    %36 = arith.negf %35 : vector<16x128xf32>
    %37 = math.exp %36 : vector<16x128xf32>
    %cst_26 = arith.constant 1.000000e+00 : f32
    %38 = vector.broadcast %cst_26 : f32 to vector<16x128xf32>
    %39 = arith.addf %38, %37 : vector<16x128xf32>
    %40 = arith.divf %38, %39 : vector<16x128xf32>
    %41 = vector.extract_strided_slice %28 {offsets = [0, 256], sizes = [16, 128], strides = [1, 1]} : vector<16x512xf32> to vector<16x128xf32>
    %42 = math.tanh %41 : vector<16x128xf32>
    %43 = vector.extract_strided_slice %28 {offsets = [0, 384], sizes = [16, 128], strides = [1, 1]} : vector<16x512xf32> to vector<16x128xf32>
    %44 = arith.negf %43 : vector<16x128xf32>
    %45 = math.exp %44 : vector<16x128xf32>
    %cst_27 = arith.constant 1.000000e+00 : f32
    %46 = vector.broadcast %cst_27 : f32 to vector<16x128xf32>
    %47 = arith.addf %46, %45 : vector<16x128xf32>
    %48 = arith.divf %46, %47 : vector<16x128xf32>
    %49 = arith.mulf %40, %21 : vector<16x128xf32>
    %50 = arith.mulf %34, %42 : vector<16x128xf32>
    %51 = arith.addf %49, %50 : vector<16x128xf32>
    %52 = math.tanh %51 : vector<16x128xf32>
    %53 = arith.mulf %48, %52 : vector<16x128xf32>
    %54 = arith.truncf %53 : vector<16x128xf32> to vector<16x128xbf16>
    %55 = arith.index_cast %c0_i32_21 : i32 to index
    %c0_28 = arith.constant 0 : index
    %c0_29 = arith.constant 0 : index
    %56 = vector.load %arg11[%55, %c0_28, %c0_29] : memref<8x16x128xbf16, #tpu.memory_space<vmem>>, vector<1x16x128xbf16>
    %57 = vector.shape_cast %56 : vector<1x16x128xbf16> to vector<16x128xbf16>
    %58 = vector.shape_cast %54 : vector<16x128xbf16> to vector<1x16x128xbf16>
    tpu.vector_store %arg11[%55, %c0_28, %c0_29], %58 {strides = array<i32>} : memref<8x16x128xbf16, #tpu.memory_space<vmem>>, vector<1x16x128xbf16>,
    %c1_i32 = arith.constant 1 : i32
    %59 = arith.index_cast %c1_i32 : i32 to index
    %c0_30 = arith.constant 0 : index
    %c0_31 = arith.constant 0 : index
    %60 = vector.load %arg12[%59, %c0_30, %c0_31] : memref<8x16x512xbf16, #tpu.memory_space<vmem>>, vector<1x16x512xbf16>
    %61 = vector.shape_cast %60 : vector<1x16x512xbf16> to vector<16x512xbf16>
    %62 = arith.extf %61 : vector<16x512xbf16> to vector<16x512xf32>
    %63 = arith.truncf %53 : vector<16x128xf32> to vector<16x128xbf16>
    %cst_32 = arith.constant dense<0.000000e+00> : vector<16x512xf32>
    %64 = tpu.matmul %63, %6, %cst_32 {dimension_numbers = #tpu.dot_dimension_numbers<[1], [0], [0], [1], [0, 0, 1, 1], [], []>} : vector<16x128xbf16>, vector<128x512xbf16>, vector<16x512xf32> -> vector<16x512xf32>
    %65 = arith.addf %62, %64 : vector<16x512xf32>
    %66 = vector.extract_strided_slice %65 {offsets = [0, 0], sizes = [16, 128], strides = [1, 1]} : vector<16x512xf32> to vector<16x128xf32>
    %67 = arith.negf %66 : vector<16x128xf32>
    %68 = math.exp %67 : vector<16x128xf32>
    %cst_33 = arith.constant 1.000000e+00 : f32
    %69 = vector.broadcast %cst_33 : f32 to vector<16x128xf32>
    %70 = arith.addf %69, %68 : vector<16x128xf32>
    %71 = arith.divf %69, %70 : vector<16x128xf32>
    %72 = vector.extract_strided_slice %65 {offsets = [0, 128], sizes = [16, 128], strides = [1, 1]} : vector<16x512xf32> to vector<16x128xf32>
    %73 = arith.negf %72 : vector<16x128xf32>
    %74 = math.exp %73 : vector<16x128xf32>
    %cst_34 = arith.constant 1.000000e+00 : f32
    %75 = vector.broadcast %cst_34 : f32 to vector<16x128xf32>
    %76 = arith.addf %75, %74 : vector<16x128xf32>
    %77 = arith.divf %75, %76 : vector<16x128xf32>
    %78 = vector.extract_strided_slice %65 {offsets = [0, 256], sizes = [16, 128], strides = [1, 1]} : vector<16x512xf32> to vector<16x128xf32>
    %79 = math.tanh %78 : vector<16x128xf32>
    %80 = vector.extract_strided_slice %65 {offsets = [0, 384], sizes = [16, 128], strides = [1, 1]} : vector<16x512xf32> to vector<16x128xf32>
    %81 = arith.negf %80 : vector<16x128xf32>
    %82 = math.exp %81 : vector<16x128xf32>
    %cst_35 = arith.constant 1.000000e+00 : f32
    %83 = vector.broadcast %cst_35 : f32 to vector<16x128xf32>
    %84 = arith.addf %83, %82 : vector<16x128xf32>
    %85 = arith.divf %83, %84 : vector<16x128xf32>
    %86 = arith.mulf %77, %51 : vector<16x128xf32>
    %87 = arith.mulf %71, %79 : vector<16x128xf32>
    %88 = arith.addf %86, %87 : vector<16x128xf32>
    %89 = math.tanh %88 : vector<16x128xf32>
    %90 = arith.mulf %85, %89 : vector<16x128xf32>
    %91 = arith.truncf %90 : vector<16x128xf32> to vector<16x128xbf16>
    %92 = arith.index_cast %c1_i32 : i32 to index
    %c0_36 = arith.constant 0 : index
    %c0_37 = arith.constant 0 : index
    %93 = vector.load %arg11[%92, %c0_36, %c0_37] : memref<8x16x128xbf16, #tpu.memory_space<vmem>>, vector<1x16x128xbf16>
    %94 = vector.shape_cast %93 : vector<1x16x128xbf16> to vector<16x128xbf16>
    %95 = vector.shape_cast %91 : vector<16x128xbf16> to vector<1x16x128xbf16>
    tpu.vector_store %arg11[%92, %c0_36, %c0_37], %95 {strides = array<i32>} : memref<8x16x128xbf16, #tpu.memory_space<vmem>>, vector<1x16x128xbf16>,
    %c2_i32 = arith.constant 2 : i32
    %96 = arith.index_cast %c2_i32 : i32 to index
    %c0_38 = arith.constant 0 : index
    %c0_39 = arith.constant 0 : index
    %97 = vector.load %arg12[%96, %c0_38, %c0_39] : memref<8x16x512xbf16, #tpu.memory_space<vmem>>, vector<1x16x512xbf16>
    %98 = vector.shape_cast %97 : vector<1x16x512xbf16> to vector<16x512xbf16>
    %99 = arith.extf %98 : vector<16x512xbf16> to vector<16x512xf32>
    %100 = arith.truncf %90 : vector<16x128xf32> to vector<16x128xbf16>
    %cst_40 = arith.constant dense<0.000000e+00> : vector<16x512xf32>
    %101 = tpu.matmul %100, %6, %cst_40 {dimension_numbers = #tpu.dot_dimension_numbers<[1], [0], [0], [1], [0, 0, 1, 1], [], []>} : vector<16x128xbf16>, vector<128x512xbf16>, vector<16x512xf32> -> vector<16x512xf32>
    %102 = arith.addf %99, %101 : vector<16x512xf32>
    %103 = vector.extract_strided_slice %102 {offsets = [0, 0], sizes = [16, 128], strides = [1, 1]} : vector<16x512xf32> to vector<16x128xf32>
    %104 = arith.negf %103 : vector<16x128xf32>
    %105 = math.exp %104 : vector<16x128xf32>
    %cst_41 = arith.constant 1.000000e+00 : f32
    %106 = vector.broadcast %cst_41 : f32 to vector<16x128xf32>
    %107 = arith.addf %106, %105 : vector<16x128xf32>
    %108 = arith.divf %106, %107 : vector<16x128xf32>
    %109 = vector.extract_strided_slice %102 {offsets = [0, 128], sizes = [16, 128], strides = [1, 1]} : vector<16x512xf32> to vector<16x128xf32>
    %110 = arith.negf %109 : vector<16x128xf32>
    %111 = math.exp %110 : vector<16x128xf32>
    %cst_42 = arith.constant 1.000000e+00 : f32
    %112 = vector.broadcast %cst_42 : f32 to vector<16x128xf32>
    %113 = arith.addf %112, %111 : vector<16x128xf32>
    %114 = arith.divf %112, %113 : vector<16x128xf32>
    %115 = vector.extract_strided_slice %102 {offsets = [0, 256], sizes = [16, 128], strides = [1, 1]} : vector<16x512xf32> to vector<16x128xf32>
    %116 = math.tanh %115 : vector<16x128xf32>
    %117 = vector.extract_strided_slice %102 {offsets = [0, 384], sizes = [16, 128], strides = [1, 1]} : vector<16x512xf32> to vector<16x128xf32>
    %118 = arith.negf %117 : vector<16x128xf32>
    %119 = math.exp %118 : vector<16x128xf32>
    %cst_43 = arith.constant 1.000000e+00 : f32
    %120 = vector.broadcast %cst_43 : f32 to vector<16x128xf32>
    %121 = arith.addf %120, %119 : vector<16x128xf32>
    %122 = arith.divf %120, %121 : vector<16x128xf32>
    %123 = arith.mulf %114, %88 : vector<16x128xf32>
    %124 = arith.mulf %108, %116 : vector<16x128xf32>
    %125 = arith.addf %123, %124 : vector<16x128xf32>
    %126 = math.tanh %125 : vector<16x128xf32>
    %127 = arith.mulf %122, %126 : vector<16x128xf32>
    %128 = arith.truncf %127 : vector<16x128xf32> to vector<16x128xbf16>
    %129 = arith.index_cast %c2_i32 : i32 to index
    %c0_44 = arith.constant 0 : index
    %c0_45 = arith.constant 0 : index
    %130 = vector.load %arg11[%129, %c0_44, %c0_45] : memref<8x16x128xbf16, #tpu.memory_space<vmem>>, vector<1x16x128xbf16>
    %131 = vector.shape_cast %130 : vector<1x16x128xbf16> to vector<16x128xbf16>
    %132 = vector.shape_cast %128 : vector<16x128xbf16> to vector<1x16x128xbf16>
    tpu.vector_store %arg11[%129, %c0_44, %c0_45], %132 {strides = array<i32>} : memref<8x16x128xbf16, #tpu.memory_space<vmem>>, vector<1x16x128xbf16>,
    %c3_i32 = arith.constant 3 : i32
    %133 = arith.index_cast %c3_i32 : i32 to index
    %c0_46 = arith.constant 0 : index
    %c0_47 = arith.constant 0 : index
    %134 = vector.load %arg12[%133, %c0_46, %c0_47] : memref<8x16x512xbf16, #tpu.memory_space<vmem>>, vector<1x16x512xbf16>
    %135 = vector.shape_cast %134 : vector<1x16x512xbf16> to vector<16x512xbf16>
    %136 = arith.extf %135 : vector<16x512xbf16> to vector<16x512xf32>
    %137 = arith.truncf %127 : vector<16x128xf32> to vector<16x128xbf16>
    %cst_48 = arith.constant dense<0.000000e+00> : vector<16x512xf32>
    %138 = tpu.matmul %137, %6, %cst_48 {dimension_numbers = #tpu.dot_dimension_numbers<[1], [0], [0], [1], [0, 0, 1, 1], [], []>} : vector<16x128xbf16>, vector<128x512xbf16>, vector<16x512xf32> -> vector<16x512xf32>
    %139 = arith.addf %136, %138 : vector<16x512xf32>
    %140 = vector.extract_strided_slice %139 {offsets = [0, 0], sizes = [16, 128], strides = [1, 1]} : vector<16x512xf32> to vector<16x128xf32>
    %141 = arith.negf %140 : vector<16x128xf32>
    %142 = math.exp %141 : vector<16x128xf32>
    %cst_49 = arith.constant 1.000000e+00 : f32
    %143 = vector.broadcast %cst_49 : f32 to vector<16x128xf32>
    %144 = arith.addf %143, %142 : vector<16x128xf32>
    %145 = arith.divf %143, %144 : vector<16x128xf32>
    %146 = vector.extract_strided_slice %139 {offsets = [0, 128], sizes = [16, 128], strides = [1, 1]} : vector<16x512xf32> to vector<16x128xf32>
    %147 = arith.negf %146 : vector<16x128xf32>
    %148 = math.exp %147 : vector<16x128xf32>
    %cst_50 = arith.constant 1.000000e+00 : f32
    %149 = vector.broadcast %cst_50 : f32 to vector<16x128xf32>
    %150 = arith.addf %149, %148 : vector<16x128xf32>
    %151 = arith.divf %149, %150 : vector<16x128xf32>
    %152 = vector.extract_strided_slice %139 {offsets = [0, 256], sizes = [16, 128], strides = [1, 1]} : vector<16x512xf32> to vector<16x128xf32>
    %153 = math.tanh %152 : vector<16x128xf32>
    %154 = vector.extract_strided_slice %139 {offsets = [0, 384], sizes = [16, 128], strides = [1, 1]} : vector<16x512xf32> to vector<16x128xf32>
    %155 = arith.negf %154 : vector<16x128xf32>
    %156 = math.exp %155 : vector<16x128xf32>
    %cst_51 = arith.constant 1.000000e+00 : f32
    %157 = vector.broadcast %cst_51 : f32 to vector<16x128xf32>
    %158 = arith.addf %157, %156 : vector<16x128xf32>
    %159 = arith.divf %157, %158 : vector<16x128xf32>
    %160 = arith.mulf %151, %125 : vector<16x128xf32>
    %161 = arith.mulf %145, %153 : vector<16x128xf32>
    %162 = arith.addf %160, %161 : vector<16x128xf32>
    %163 = math.tanh %162 : vector<16x128xf32>
    %164 = arith.mulf %159, %163 : vector<16x128xf32>
    %165 = arith.truncf %164 : vector<16x128xf32> to vector<16x128xbf16>
    %166 = arith.index_cast %c3_i32 : i32 to index
    %c0_52 = arith.constant 0 : index
    %c0_53 = arith.constant 0 : index
    %167 = vector.load %arg11[%166, %c0_52, %c0_53] : memref<8x16x128xbf16, #tpu.memory_space<vmem>>, vector<1x16x128xbf16>
    %168 = vector.shape_cast %167 : vector<1x16x128xbf16> to vector<16x128xbf16>
    %169 = vector.shape_cast %165 : vector<16x128xbf16> to vector<1x16x128xbf16>
    tpu.vector_store %arg11[%166, %c0_52, %c0_53], %169 {strides = array<i32>} : memref<8x16x128xbf16, #tpu.memory_space<vmem>>, vector<1x16x128xbf16>,
    %c4_i32 = arith.constant 4 : i32
    %170 = arith.index_cast %c4_i32 : i32 to index
    %c0_54 = arith.constant 0 : index
    %c0_55 = arith.constant 0 : index
    %171 = vector.load %arg12[%170, %c0_54, %c0_55] : memref<8x16x512xbf16, #tpu.memory_space<vmem>>, vector<1x16x512xbf16>
    %172 = vector.shape_cast %171 : vector<1x16x512xbf16> to vector<16x512xbf16>
    %173 = arith.extf %172 : vector<16x512xbf16> to vector<16x512xf32>
    %174 = arith.truncf %164 : vector<16x128xf32> to vector<16x128xbf16>
    %cst_56 = arith.constant dense<0.000000e+00> : vector<16x512xf32>
    %175 = tpu.matmul %174, %6, %cst_56 {dimension_numbers = #tpu.dot_dimension_numbers<[1], [0], [0], [1], [0, 0, 1, 1], [], []>} : vector<16x128xbf16>, vector<128x512xbf16>, vector<16x512xf32> -> vector<16x512xf32>
    %176 = arith.addf %173, %175 : vector<16x512xf32>
    %177 = vector.extract_strided_slice %176 {offsets = [0, 0], sizes = [16, 128], strides = [1, 1]} : vector<16x512xf32> to vector<16x128xf32>
    %178 = arith.negf %177 : vector<16x128xf32>
    %179 = math.exp %178 : vector<16x128xf32>
    %cst_57 = arith.constant 1.000000e+00 : f32
    %180 = vector.broadcast %cst_57 : f32 to vector<16x128xf32>
    %181 = arith.addf %180, %179 : vector<16x128xf32>
    %182 = arith.divf %180, %181 : vector<16x128xf32>
    %183 = vector.extract_strided_slice %176 {offsets = [0, 128], sizes = [16, 128], strides = [1, 1]} : vector<16x512xf32> to vector<16x128xf32>
    %184 = arith.negf %183 : vector<16x128xf32>
    %185 = math.exp %184 : vector<16x128xf32>
    %cst_58 = arith.constant 1.000000e+00 : f32
    %186 = vector.broadcast %cst_58 : f32 to vector<16x128xf32>
    %187 = arith.addf %186, %185 : vector<16x128xf32>
    %188 = arith.divf %186, %187 : vector<16x128xf32>
    %189 = vector.extract_strided_slice %176 {offsets = [0, 256], sizes = [16, 128], strides = [1, 1]} : vector<16x512xf32> to vector<16x128xf32>
    %190 = math.tanh %189 : vector<16x128xf32>
    %191 = vector.extract_strided_slice %176 {offsets = [0, 384], sizes = [16, 128], strides = [1, 1]} : vector<16x512xf32> to vector<16x128xf32>
    %192 = arith.negf %191 : vector<16x128xf32>
    %193 = math.exp %192 : vector<16x128xf32>
    %cst_59 = arith.constant 1.000000e+00 : f32
    %194 = vector.broadcast %cst_59 : f32 to vector<16x128xf32>
    %195 = arith.addf %194, %193 : vector<16x128xf32>
    %196 = arith.divf %194, %195 : vector<16x128xf32>
    %197 = arith.mulf %188, %162 : vector<16x128xf32>
    %198 = arith.mulf %182, %190 : vector<16x128xf32>
    %199 = arith.addf %197, %198 : vector<16x128xf32>
    %200 = math.tanh %199 : vector<16x128xf32>
    %201 = arith.mulf %196, %200 : vector<16x128xf32>
    %202 = arith.truncf %201 : vector<16x128xf32> to vector<16x128xbf16>
    %203 = arith.index_cast %c4_i32 : i32 to index
    %c0_60 = arith.constant 0 : index
    %c0_61 = arith.constant 0 : index
    %204 = vector.load %arg11[%203, %c0_60, %c0_61] : memref<8x16x128xbf16, #tpu.memory_space<vmem>>, vector<1x16x128xbf16>
    %205 = vector.shape_cast %204 : vector<1x16x128xbf16> to vector<16x128xbf16>
    %206 = vector.shape_cast %202 : vector<16x128xbf16> to vector<1x16x128xbf16>
    tpu.vector_store %arg11[%203, %c0_60, %c0_61], %206 {strides = array<i32>} : memref<8x16x128xbf16, #tpu.memory_space<vmem>>, vector<1x16x128xbf16>,
    %c5_i32 = arith.constant 5 : i32
    %207 = arith.index_cast %c5_i32 : i32 to index
    %c0_62 = arith.constant 0 : index
    %c0_63 = arith.constant 0 : index
    %208 = vector.load %arg12[%207, %c0_62, %c0_63] : memref<8x16x512xbf16, #tpu.memory_space<vmem>>, vector<1x16x512xbf16>
    %209 = vector.shape_cast %208 : vector<1x16x512xbf16> to vector<16x512xbf16>
    %210 = arith.extf %209 : vector<16x512xbf16> to vector<16x512xf32>
    %211 = arith.truncf %201 : vector<16x128xf32> to vector<16x128xbf16>
    %cst_64 = arith.constant dense<0.000000e+00> : vector<16x512xf32>
    %212 = tpu.matmul %211, %6, %cst_64 {dimension_numbers = #tpu.dot_dimension_numbers<[1], [0], [0], [1], [0, 0, 1, 1], [], []>} : vector<16x128xbf16>, vector<128x512xbf16>, vector<16x512xf32> -> vector<16x512xf32>
    %213 = arith.addf %210, %212 : vector<16x512xf32>
    %214 = vector.extract_strided_slice %213 {offsets = [0, 0], sizes = [16, 128], strides = [1, 1]} : vector<16x512xf32> to vector<16x128xf32>
    %215 = arith.negf %214 : vector<16x128xf32>
    %216 = math.exp %215 : vector<16x128xf32>
    %cst_65 = arith.constant 1.000000e+00 : f32
    %217 = vector.broadcast %cst_65 : f32 to vector<16x128xf32>
    %218 = arith.addf %217, %216 : vector<16x128xf32>
    %219 = arith.divf %217, %218 : vector<16x128xf32>
    %220 = vector.extract_strided_slice %213 {offsets = [0, 128], sizes = [16, 128], strides = [1, 1]} : vector<16x512xf32> to vector<16x128xf32>
    %221 = arith.negf %220 : vector<16x128xf32>
    %222 = math.exp %221 : vector<16x128xf32>
    %cst_66 = arith.constant 1.000000e+00 : f32
    %223 = vector.broadcast %cst_66 : f32 to vector<16x128xf32>
    %224 = arith.addf %223, %222 : vector<16x128xf32>
    %225 = arith.divf %223, %224 : vector<16x128xf32>
    %226 = vector.extract_strided_slice %213 {offsets = [0, 256], sizes = [16, 128], strides = [1, 1]} : vector<16x512xf32> to vector<16x128xf32>
    %227 = math.tanh %226 : vector<16x128xf32>
    %228 = vector.extract_strided_slice %213 {offsets = [0, 384], sizes = [16, 128], strides = [1, 1]} : vector<16x512xf32> to vector<16x128xf32>
    %229 = arith.negf %228 : vector<16x128xf32>
    %230 = math.exp %229 : vector<16x128xf32>
    %cst_67 = arith.constant 1.000000e+00 : f32
    %231 = vector.broadcast %cst_67 : f32 to vector<16x128xf32>
    %232 = arith.addf %231, %230 : vector<16x128xf32>
    %233 = arith.divf %231, %232 : vector<16x128xf32>
    %234 = arith.mulf %225, %199 : vector<16x128xf32>
    %235 = arith.mulf %219, %227 : vector<16x128xf32>
    %236 = arith.addf %234, %235 : vector<16x128xf32>
    %237 = math.tanh %236 : vector<16x128xf32>
    %238 = arith.mulf %233, %237 : vector<16x128xf32>
    %239 = arith.truncf %238 : vector<16x128xf32> to vector<16x128xbf16>
    %240 = arith.index_cast %c5_i32 : i32 to index
    %c0_68 = arith.constant 0 : index
    %c0_69 = arith.constant 0 : index
    %241 = vector.load %arg11[%240, %c0_68, %c0_69] : memref<8x16x128xbf16, #tpu.memory_space<vmem>>, vector<1x16x128xbf16>
    %242 = vector.shape_cast %241 : vector<1x16x128xbf16> to vector<16x128xbf16>
    %243 = vector.shape_cast %239 : vector<16x128xbf16> to vector<1x16x128xbf16>
    tpu.vector_store %arg11[%240, %c0_68, %c0_69], %243 {strides = array<i32>} : memref<8x16x128xbf16, #tpu.memory_space<vmem>>, vector<1x16x128xbf16>,
    %c6_i32 = arith.constant 6 : i32
    %244 = arith.index_cast %c6_i32 : i32 to index
    %c0_70 = arith.constant 0 : index
    %c0_71 = arith.constant 0 : index
    %245 = vector.load %arg12[%244, %c0_70, %c0_71] : memref<8x16x512xbf16, #tpu.memory_space<vmem>>, vector<1x16x512xbf16>
    %246 = vector.shape_cast %245 : vector<1x16x512xbf16> to vector<16x512xbf16>
    %247 = arith.extf %246 : vector<16x512xbf16> to vector<16x512xf32>
    %248 = arith.truncf %238 : vector<16x128xf32> to vector<16x128xbf16>
    %cst_72 = arith.constant dense<0.000000e+00> : vector<16x512xf32>
    %249 = tpu.matmul %248, %6, %cst_72 {dimension_numbers = #tpu.dot_dimension_numbers<[1], [0], [0], [1], [0, 0, 1, 1], [], []>} : vector<16x128xbf16>, vector<128x512xbf16>, vector<16x512xf32> -> vector<16x512xf32>
    %250 = arith.addf %247, %249 : vector<16x512xf32>
    %251 = vector.extract_strided_slice %250 {offsets = [0, 0], sizes = [16, 128], strides = [1, 1]} : vector<16x512xf32> to vector<16x128xf32>
    %252 = arith.negf %251 : vector<16x128xf32>
    %253 = math.exp %252 : vector<16x128xf32>
    %cst_73 = arith.constant 1.000000e+00 : f32
    %254 = vector.broadcast %cst_73 : f32 to vector<16x128xf32>
    %255 = arith.addf %254, %253 : vector<16x128xf32>
    %256 = arith.divf %254, %255 : vector<16x128xf32>
    %257 = vector.extract_strided_slice %250 {offsets = [0, 128], sizes = [16, 128], strides = [1, 1]} : vector<16x512xf32> to vector<16x128xf32>
    %258 = arith.negf %257 : vector<16x128xf32>
    %259 = math.exp %258 : vector<16x128xf32>
    %cst_74 = arith.constant 1.000000e+00 : f32
    %260 = vector.broadcast %cst_74 : f32 to vector<16x128xf32>
    %261 = arith.addf %260, %259 : vector<16x128xf32>
    %262 = arith.divf %260, %261 : vector<16x128xf32>
    %263 = vector.extract_strided_slice %250 {offsets = [0, 256], sizes = [16, 128], strides = [1, 1]} : vector<16x512xf32> to vector<16x128xf32>
    %264 = math.tanh %263 : vector<16x128xf32>
    %265 = vector.extract_strided_slice %250 {offsets = [0, 384], sizes = [16, 128], strides = [1, 1]} : vector<16x512xf32> to vector<16x128xf32>
    %266 = arith.negf %265 : vector<16x128xf32>
    %267 = math.exp %266 : vector<16x128xf32>
    %cst_75 = arith.constant 1.000000e+00 : f32
    %268 = vector.broadcast %cst_75 : f32 to vector<16x128xf32>
    %269 = arith.addf %268, %267 : vector<16x128xf32>
    %270 = arith.divf %268, %269 : vector<16x128xf32>
    %271 = arith.mulf %262, %236 : vector<16x128xf32>
    %272 = arith.mulf %256, %264 : vector<16x128xf32>
    %273 = arith.addf %271, %272 : vector<16x128xf32>
    %274 = math.tanh %273 : vector<16x128xf32>
    %275 = arith.mulf %270, %274 : vector<16x128xf32>
    %276 = arith.truncf %275 : vector<16x128xf32> to vector<16x128xbf16>
    %277 = arith.index_cast %c6_i32 : i32 to index
    %c0_76 = arith.constant 0 : index
    %c0_77 = arith.constant 0 : index
    %278 = vector.load %arg11[%277, %c0_76, %c0_77] : memref<8x16x128xbf16, #tpu.memory_space<vmem>>, vector<1x16x128xbf16>
    %279 = vector.shape_cast %278 : vector<1x16x128xbf16> to vector<16x128xbf16>
    %280 = vector.shape_cast %276 : vector<16x128xbf16> to vector<1x16x128xbf16>
    tpu.vector_store %arg11[%277, %c0_76, %c0_77], %280 {strides = array<i32>} : memref<8x16x128xbf16, #tpu.memory_space<vmem>>, vector<1x16x128xbf16>,
    %c7_i32 = arith.constant 7 : i32
    %281 = arith.index_cast %c7_i32 : i32 to index
    %c0_78 = arith.constant 0 : index
    %c0_79 = arith.constant 0 : index
    %282 = vector.load %arg12[%281, %c0_78, %c0_79] : memref<8x16x512xbf16, #tpu.memory_space<vmem>>, vector<1x16x512xbf16>
    %283 = vector.shape_cast %282 : vector<1x16x512xbf16> to vector<16x512xbf16>
    %284 = arith.extf %283 : vector<16x512xbf16> to vector<16x512xf32>
    %285 = arith.truncf %275 : vector<16x128xf32> to vector<16x128xbf16>
    %cst_80 = arith.constant dense<0.000000e+00> : vector<16x512xf32>
    %286 = tpu.matmul %285, %6, %cst_80 {dimension_numbers = #tpu.dot_dimension_numbers<[1], [0], [0], [1], [0, 0, 1, 1], [], []>} : vector<16x128xbf16>, vector<128x512xbf16>, vector<16x512xf32> -> vector<16x512xf32>
    %287 = arith.addf %284, %286 : vector<16x512xf32>
    %288 = vector.extract_strided_slice %287 {offsets = [0, 0], sizes = [16, 128], strides = [1, 1]} : vector<16x512xf32> to vector<16x128xf32>
    %289 = arith.negf %288 : vector<16x128xf32>
    %290 = math.exp %289 : vector<16x128xf32>
    %cst_81 = arith.constant 1.000000e+00 : f32
    %291 = vector.broadcast %cst_81 : f32 to vector<16x128xf32>
    %292 = arith.addf %291, %290 : vector<16x128xf32>
    %293 = arith.divf %291, %292 : vector<16x128xf32>
    %294 = vector.extract_strided_slice %287 {offsets = [0, 128], sizes = [16, 128], strides = [1, 1]} : vector<16x512xf32> to vector<16x128xf32>
    %295 = arith.negf %294 : vector<16x128xf32>
    %296 = math.exp %295 : vector<16x128xf32>
    %cst_82 = arith.constant 1.000000e+00 : f32
    %297 = vector.broadcast %cst_82 : f32 to vector<16x128xf32>
    %298 = arith.addf %297, %296 : vector<16x128xf32>
    %299 = arith.divf %297, %298 : vector<16x128xf32>
    %300 = vector.extract_strided_slice %287 {offsets = [0, 256], sizes = [16, 128], strides = [1, 1]} : vector<16x512xf32> to vector<16x128xf32>
    %301 = math.tanh %300 : vector<16x128xf32>
    %302 = vector.extract_strided_slice %287 {offsets = [0, 384], sizes = [16, 128], strides = [1, 1]} : vector<16x512xf32> to vector<16x128xf32>
    %303 = arith.negf %302 : vector<16x128xf32>
    %304 = math.exp %303 : vector<16x128xf32>
    %cst_83 = arith.constant 1.000000e+00 : f32
    %305 = vector.broadcast %cst_83 : f32 to vector<16x128xf32>
    %306 = arith.addf %305, %304 : vector<16x128xf32>
    %307 = arith.divf %305, %306 : vector<16x128xf32>
    %308 = arith.mulf %299, %273 : vector<16x128xf32>
    %309 = arith.mulf %293, %301 : vector<16x128xf32>
    %310 = arith.addf %308, %309 : vector<16x128xf32>
    %311 = math.tanh %310 : vector<16x128xf32>
    %312 = arith.mulf %307, %311 : vector<16x128xf32>
    %313 = arith.truncf %312 : vector<16x128xf32> to vector<16x128xbf16>
    %314 = arith.index_cast %c7_i32 : i32 to index
    %c0_84 = arith.constant 0 : index
    %c0_85 = arith.constant 0 : index
    %315 = vector.load %arg11[%314, %c0_84, %c0_85] : memref<8x16x128xbf16, #tpu.memory_space<vmem>>, vector<1x16x128xbf16>
    %316 = vector.shape_cast %315 : vector<1x16x128xbf16> to vector<16x128xbf16>
    %317 = vector.shape_cast %313 : vector<16x128xbf16> to vector<1x16x128xbf16>
    tpu.vector_store %arg11[%314, %c0_84, %c0_85], %317 {strides = array<i32>} : memref<8x16x128xbf16, #tpu.memory_space<vmem>>, vector<1x16x128xbf16>,
    %c8_i32 = arith.constant 8 : i32
    %c0_86 = arith.constant 0 : index
    %c0_87 = arith.constant 0 : index
    %c0_88 = arith.constant 0 : index
    %318 = vector.load %arg9[%c0_86, %c0_87, %c0_88] : memref<2x16x128xf32, #tpu.memory_space<vmem>>, vector<1x16x128xf32>
    %319 = vector.shape_cast %318 : vector<1x16x128xf32> to vector<16x128xf32>
    %320 = vector.shape_cast %312 : vector<16x128xf32> to vector<1x16x128xf32>
    tpu.vector_store %arg9[%c0_86, %c0_87, %c0_88], %320 {strides = array<i32>} : memref<2x16x128xf32, #tpu.memory_space<vmem>>, vector<1x16x128xf32>,
    %c0_89 = arith.constant 0 : index
    %c0_90 = arith.constant 0 : index
    %c0_91 = arith.constant 0 : index
    %321 = vector.load %arg10[%c0_89, %c0_90, %c0_91] : memref<2x16x128xf32, #tpu.memory_space<vmem>>, vector<1x16x128xf32>
    %322 = vector.shape_cast %321 : vector<1x16x128xf32> to vector<16x128xf32>
    %323 = vector.shape_cast %310 : vector<16x128xf32> to vector<1x16x128xf32>
    tpu.vector_store %arg10[%c0_89, %c0_90, %c0_91], %323 {strides = array<i32>} : memref<2x16x128xf32, #tpu.memory_space<vmem>>, vector<1x16x128xf32>,
    %c1 = arith.constant 1 : index
    %c0_92 = arith.constant 0 : index
    %c0_93 = arith.constant 0 : index
    %324 = vector.load %arg3[%c1, %c0_92, %c0_93] : memref<2x128x512xbf16, #tpu.memory_space<vmem>>, vector<1x128x512xbf16>
    %325 = vector.shape_cast %324 : vector<1x128x512xbf16> to vector<128x512xbf16>
    %c1_94 = arith.constant 1 : index
    %c0_95 = arith.constant 0 : index
    %c0_96 = arith.constant 0 : index
    %326 = vector.load %arg4[%c1_94, %c0_95, %c0_96] : memref<2x128x512xbf16, #tpu.memory_space<vmem>>, vector<1x128x512xbf16>
    %327 = vector.shape_cast %326 : vector<1x128x512xbf16> to vector<128x512xbf16>
    %c1_97 = arith.constant 1 : index
    %c0_98 = arith.constant 0 : index
    %c0_99 = arith.constant 0 : index
    %328 = vector.load %arg5[%c1_97, %c0_98, %c0_99] : memref<2x1x512xf32, #tpu.memory_space<vmem>>, vector<1x1x512xf32>
    %329 = vector.shape_cast %328 : vector<1x1x512xf32> to vector<1x512xf32>
    %c0_100 = arith.constant 0 : index
    %c0_101 = arith.constant 0 : index
    %c0_102 = arith.constant 0 : index
    %330 = vector.load %arg11[%c0_100, %c0_101, %c0_102] : memref<8x16x128xbf16, #tpu.memory_space<vmem>>, vector<8x16x128xbf16>
    %331 = vector.shape_cast %330 : vector<8x16x128xbf16> to vector<128x128xbf16>
    %cst_103 = arith.constant dense<0.000000e+00> : vector<128x512xf32>
    %332 = tpu.matmul %331, %325, %cst_103 {dimension_numbers = #tpu.dot_dimension_numbers<[1], [0], [0], [1], [0, 0, 1, 1], [], []>} : vector<128x128xbf16>, vector<128x512xbf16>, vector<128x512xf32> -> vector<128x512xf32>
    %333 = vector.shape_cast %332 : vector<128x512xf32> to vector<8x16x512xf32>
    %334 = vector.shape_cast %329 : vector<1x512xf32> to vector<1x1x512xf32>
    %335 = vector.broadcast %334 : vector<1x1x512xf32> to vector<8x16x512xf32>
    %336 = arith.addf %333, %335 : vector<8x16x512xf32>
    %337 = arith.truncf %336 : vector<8x16x512xf32> to vector<8x16x512xbf16>
    %c0_104 = arith.constant 0 : index
    %c0_105 = arith.constant 0 : index
    %c0_106 = arith.constant 0 : index
    %338 = vector.load %arg12[%c0_104, %c0_105, %c0_106] : memref<8x16x512xbf16, #tpu.memory_space<vmem>>, vector<8x16x512xbf16>
    tpu.vector_store %arg12[%c0_104, %c0_105, %c0_106], %337 {strides = array<i32>} : memref<8x16x512xbf16, #tpu.memory_space<vmem>>, vector<8x16x512xbf16>,
    %c1_107 = arith.constant 1 : index
    %c0_108 = arith.constant 0 : index
    %c0_109 = arith.constant 0 : index
    %339 = vector.load %arg9[%c1_107, %c0_108, %c0_109] : memref<2x16x128xf32, #tpu.memory_space<vmem>>, vector<1x16x128xf32>
    %340 = vector.shape_cast %339 : vector<1x16x128xf32> to vector<16x128xf32>
    %c1_110 = arith.constant 1 : index
    %c0_111 = arith.constant 0 : index
    %c0_112 = arith.constant 0 : index
    %341 = vector.load %arg10[%c1_110, %c0_111, %c0_112] : memref<2x16x128xf32, #tpu.memory_space<vmem>>, vector<1x16x128xf32>
    %342 = vector.shape_cast %341 : vector<1x16x128xf32> to vector<16x128xf32>
    %c0_i32_113 = arith.constant 0 : i32
    %343 = arith.index_cast %c0_i32_113 : i32 to index
    %c0_114 = arith.constant 0 : index
    %c0_115 = arith.constant 0 : index
    %344 = vector.load %arg12[%343, %c0_114, %c0_115] : memref<8x16x512xbf16, #tpu.memory_space<vmem>>, vector<1x16x512xbf16>
    %345 = vector.shape_cast %344 : vector<1x16x512xbf16> to vector<16x512xbf16>
    %346 = arith.extf %345 : vector<16x512xbf16> to vector<16x512xf32>
    %347 = arith.truncf %340 : vector<16x128xf32> to vector<16x128xbf16>
    %cst_116 = arith.constant dense<0.000000e+00> : vector<16x512xf32>
    %348 = tpu.matmul %347, %327, %cst_116 {dimension_numbers = #tpu.dot_dimension_numbers<[1], [0], [0], [1], [0, 0, 1, 1], [], []>} : vector<16x128xbf16>, vector<128x512xbf16>, vector<16x512xf32> -> vector<16x512xf32>
    %349 = arith.addf %346, %348 : vector<16x512xf32>
    %350 = vector.extract_strided_slice %349 {offsets = [0, 0], sizes = [16, 128], strides = [1, 1]} : vector<16x512xf32> to vector<16x128xf32>
    %351 = arith.negf %350 : vector<16x128xf32>
    %352 = math.exp %351 : vector<16x128xf32>
    %cst_117 = arith.constant 1.000000e+00 : f32
    %353 = vector.broadcast %cst_117 : f32 to vector<16x128xf32>
    %354 = arith.addf %353, %352 : vector<16x128xf32>
    %355 = arith.divf %353, %354 : vector<16x128xf32>
    %356 = vector.extract_strided_slice %349 {offsets = [0, 128], sizes = [16, 128], strides = [1, 1]} : vector<16x512xf32> to vector<16x128xf32>
    %357 = arith.negf %356 : vector<16x128xf32>
    %358 = math.exp %357 : vector<16x128xf32>
    %cst_118 = arith.constant 1.000000e+00 : f32
    %359 = vector.broadcast %cst_118 : f32 to vector<16x128xf32>
    %360 = arith.addf %359, %358 : vector<16x128xf32>
    %361 = arith.divf %359, %360 : vector<16x128xf32>
    %362 = vector.extract_strided_slice %349 {offsets = [0, 256], sizes = [16, 128], strides = [1, 1]} : vector<16x512xf32> to vector<16x128xf32>
    %363 = math.tanh %362 : vector<16x128xf32>
    %364 = vector.extract_strided_slice %349 {offsets = [0, 384], sizes = [16, 128], strides = [1, 1]} : vector<16x512xf32> to vector<16x128xf32>
    %365 = arith.negf %364 : vector<16x128xf32>
    %366 = math.exp %365 : vector<16x128xf32>
    %cst_119 = arith.constant 1.000000e+00 : f32
    %367 = vector.broadcast %cst_119 : f32 to vector<16x128xf32>
    %368 = arith.addf %367, %366 : vector<16x128xf32>
    %369 = arith.divf %367, %368 : vector<16x128xf32>
    %370 = arith.mulf %361, %342 : vector<16x128xf32>
    %371 = arith.mulf %355, %363 : vector<16x128xf32>
    %372 = arith.addf %370, %371 : vector<16x128xf32>
    %373 = math.tanh %372 : vector<16x128xf32>
    %374 = arith.mulf %369, %373 : vector<16x128xf32>
    %375 = arith.index_cast %c0_i32_113 : i32 to index
    %c0_120 = arith.constant 0 : index
    %c0_121 = arith.constant 0 : index
    %376 = vector.load %arg6[%375, %c0_120, %c0_121] : memref<8x16x128xf32, #tpu.memory_space<vmem>>, vector<1x16x128xf32>
    %377 = vector.shape_cast %376 : vector<1x16x128xf32> to vector<16x128xf32>
    %378 = vector.shape_cast %374 : vector<16x128xf32> to vector<1x16x128xf32>
    tpu.vector_store %arg6[%375, %c0_120, %c0_121], %378 {strides = array<i32>} : memref<8x16x128xf32, #tpu.memory_space<vmem>>, vector<1x16x128xf32>,
    %c1_i32_122 = arith.constant 1 : i32
    %379 = arith.index_cast %c1_i32_122 : i32 to index
    %c0_123 = arith.constant 0 : index
    %c0_124 = arith.constant 0 : index
    %380 = vector.load %arg12[%379, %c0_123, %c0_124] : memref<8x16x512xbf16, #tpu.memory_space<vmem>>, vector<1x16x512xbf16>
    %381 = vector.shape_cast %380 : vector<1x16x512xbf16> to vector<16x512xbf16>
    %382 = arith.extf %381 : vector<16x512xbf16> to vector<16x512xf32>
    %383 = arith.truncf %374 : vector<16x128xf32> to vector<16x128xbf16>
    %cst_125 = arith.constant dense<0.000000e+00> : vector<16x512xf32>
    %384 = tpu.matmul %383, %327, %cst_125 {dimension_numbers = #tpu.dot_dimension_numbers<[1], [0], [0], [1], [0, 0, 1, 1], [], []>} : vector<16x128xbf16>, vector<128x512xbf16>, vector<16x512xf32> -> vector<16x512xf32>
    %385 = arith.addf %382, %384 : vector<16x512xf32>
    %386 = vector.extract_strided_slice %385 {offsets = [0, 0], sizes = [16, 128], strides = [1, 1]} : vector<16x512xf32> to vector<16x128xf32>
    %387 = arith.negf %386 : vector<16x128xf32>
    %388 = math.exp %387 : vector<16x128xf32>
    %cst_126 = arith.constant 1.000000e+00 : f32
    %389 = vector.broadcast %cst_126 : f32 to vector<16x128xf32>
    %390 = arith.addf %389, %388 : vector<16x128xf32>
    %391 = arith.divf %389, %390 : vector<16x128xf32>
    %392 = vector.extract_strided_slice %385 {offsets = [0, 128], sizes = [16, 128], strides = [1, 1]} : vector<16x512xf32> to vector<16x128xf32>
    %393 = arith.negf %392 : vector<16x128xf32>
    %394 = math.exp %393 : vector<16x128xf32>
    %cst_127 = arith.constant 1.000000e+00 : f32
    %395 = vector.broadcast %cst_127 : f32 to vector<16x128xf32>
    %396 = arith.addf %395, %394 : vector<16x128xf32>
    %397 = arith.divf %395, %396 : vector<16x128xf32>
    %398 = vector.extract_strided_slice %385 {offsets = [0, 256], sizes = [16, 128], strides = [1, 1]} : vector<16x512xf32> to vector<16x128xf32>
    %399 = math.tanh %398 : vector<16x128xf32>
    %400 = vector.extract_strided_slice %385 {offsets = [0, 384], sizes = [16, 128], strides = [1, 1]} : vector<16x512xf32> to vector<16x128xf32>
    %401 = arith.negf %400 : vector<16x128xf32>
    %402 = math.exp %401 : vector<16x128xf32>
    %cst_128 = arith.constant 1.000000e+00 : f32
    %403 = vector.broadcast %cst_128 : f32 to vector<16x128xf32>
    %404 = arith.addf %403, %402 : vector<16x128xf32>
    %405 = arith.divf %403, %404 : vector<16x128xf32>
    %406 = arith.mulf %397, %372 : vector<16x128xf32>
    %407 = arith.mulf %391, %399 : vector<16x128xf32>
    %408 = arith.addf %406, %407 : vector<16x128xf32>
    %409 = math.tanh %408 : vector<16x128xf32>
    %410 = arith.mulf %405, %409 : vector<16x128xf32>
    %411 = arith.index_cast %c1_i32_122 : i32 to index
    %c0_129 = arith.constant 0 : index
    %c0_130 = arith.constant 0 : index
    %412 = vector.load %arg6[%411, %c0_129, %c0_130] : memref<8x16x128xf32, #tpu.memory_space<vmem>>, vector<1x16x128xf32>
    %413 = vector.shape_cast %412 : vector<1x16x128xf32> to vector<16x128xf32>
    %414 = vector.shape_cast %410 : vector<16x128xf32> to vector<1x16x128xf32>
    tpu.vector_store %arg6[%411, %c0_129, %c0_130], %414 {strides = array<i32>} : memref<8x16x128xf32, #tpu.memory_space<vmem>>, vector<1x16x128xf32>,
    %c2_i32_131 = arith.constant 2 : i32
    %415 = arith.index_cast %c2_i32_131 : i32 to index
    %c0_132 = arith.constant 0 : index
    %c0_133 = arith.constant 0 : index
    %416 = vector.load %arg12[%415, %c0_132, %c0_133] : memref<8x16x512xbf16, #tpu.memory_space<vmem>>, vector<1x16x512xbf16>
    %417 = vector.shape_cast %416 : vector<1x16x512xbf16> to vector<16x512xbf16>
    %418 = arith.extf %417 : vector<16x512xbf16> to vector<16x512xf32>
    %419 = arith.truncf %410 : vector<16x128xf32> to vector<16x128xbf16>
    %cst_134 = arith.constant dense<0.000000e+00> : vector<16x512xf32>
    %420 = tpu.matmul %419, %327, %cst_134 {dimension_numbers = #tpu.dot_dimension_numbers<[1], [0], [0], [1], [0, 0, 1, 1], [], []>} : vector<16x128xbf16>, vector<128x512xbf16>, vector<16x512xf32> -> vector<16x512xf32>
    %421 = arith.addf %418, %420 : vector<16x512xf32>
    %422 = vector.extract_strided_slice %421 {offsets = [0, 0], sizes = [16, 128], strides = [1, 1]} : vector<16x512xf32> to vector<16x128xf32>
    %423 = arith.negf %422 : vector<16x128xf32>
    %424 = math.exp %423 : vector<16x128xf32>
    %cst_135 = arith.constant 1.000000e+00 : f32
    %425 = vector.broadcast %cst_135 : f32 to vector<16x128xf32>
    %426 = arith.addf %425, %424 : vector<16x128xf32>
    %427 = arith.divf %425, %426 : vector<16x128xf32>
    %428 = vector.extract_strided_slice %421 {offsets = [0, 128], sizes = [16, 128], strides = [1, 1]} : vector<16x512xf32> to vector<16x128xf32>
    %429 = arith.negf %428 : vector<16x128xf32>
    %430 = math.exp %429 : vector<16x128xf32>
    %cst_136 = arith.constant 1.000000e+00 : f32
    %431 = vector.broadcast %cst_136 : f32 to vector<16x128xf32>
    %432 = arith.addf %431, %430 : vector<16x128xf32>
    %433 = arith.divf %431, %432 : vector<16x128xf32>
    %434 = vector.extract_strided_slice %421 {offsets = [0, 256], sizes = [16, 128], strides = [1, 1]} : vector<16x512xf32> to vector<16x128xf32>
    %435 = math.tanh %434 : vector<16x128xf32>
    %436 = vector.extract_strided_slice %421 {offsets = [0, 384], sizes = [16, 128], strides = [1, 1]} : vector<16x512xf32> to vector<16x128xf32>
    %437 = arith.negf %436 : vector<16x128xf32>
    %438 = math.exp %437 : vector<16x128xf32>
    %cst_137 = arith.constant 1.000000e+00 : f32
    %439 = vector.broadcast %cst_137 : f32 to vector<16x128xf32>
    %440 = arith.addf %439, %438 : vector<16x128xf32>
    %441 = arith.divf %439, %440 : vector<16x128xf32>
    %442 = arith.mulf %433, %408 : vector<16x128xf32>
    %443 = arith.mulf %427, %435 : vector<16x128xf32>
    %444 = arith.addf %442, %443 : vector<16x128xf32>
    %445 = math.tanh %444 : vector<16x128xf32>
    %446 = arith.mulf %441, %445 : vector<16x128xf32>
    %447 = arith.index_cast %c2_i32_131 : i32 to index
    %c0_138 = arith.constant 0 : index
    %c0_139 = arith.constant 0 : index
    %448 = vector.load %arg6[%447, %c0_138, %c0_139] : memref<8x16x128xf32, #tpu.memory_space<vmem>>, vector<1x16x128xf32>
    %449 = vector.shape_cast %448 : vector<1x16x128xf32> to vector<16x128xf32>
    %450 = vector.shape_cast %446 : vector<16x128xf32> to vector<1x16x128xf32>
    tpu.vector_store %arg6[%447, %c0_138, %c0_139], %450 {strides = array<i32>} : memref<8x16x128xf32, #tpu.memory_space<vmem>>, vector<1x16x128xf32>,
    %c3_i32_140 = arith.constant 3 : i32
    %451 = arith.index_cast %c3_i32_140 : i32 to index
    %c0_141 = arith.constant 0 : index
    %c0_142 = arith.constant 0 : index
    %452 = vector.load %arg12[%451, %c0_141, %c0_142] : memref<8x16x512xbf16, #tpu.memory_space<vmem>>, vector<1x16x512xbf16>
    %453 = vector.shape_cast %452 : vector<1x16x512xbf16> to vector<16x512xbf16>
    %454 = arith.extf %453 : vector<16x512xbf16> to vector<16x512xf32>
    %455 = arith.truncf %446 : vector<16x128xf32> to vector<16x128xbf16>
    %cst_143 = arith.constant dense<0.000000e+00> : vector<16x512xf32>
    %456 = tpu.matmul %455, %327, %cst_143 {dimension_numbers = #tpu.dot_dimension_numbers<[1], [0], [0], [1], [0, 0, 1, 1], [], []>} : vector<16x128xbf16>, vector<128x512xbf16>, vector<16x512xf32> -> vector<16x512xf32>
    %457 = arith.addf %454, %456 : vector<16x512xf32>
    %458 = vector.extract_strided_slice %457 {offsets = [0, 0], sizes = [16, 128], strides = [1, 1]} : vector<16x512xf32> to vector<16x128xf32>
    %459 = arith.negf %458 : vector<16x128xf32>
    %460 = math.exp %459 : vector<16x128xf32>
    %cst_144 = arith.constant 1.000000e+00 : f32
    %461 = vector.broadcast %cst_144 : f32 to vector<16x128xf32>
    %462 = arith.addf %461, %460 : vector<16x128xf32>
    %463 = arith.divf %461, %462 : vector<16x128xf32>
    %464 = vector.extract_strided_slice %457 {offsets = [0, 128], sizes = [16, 128], strides = [1, 1]} : vector<16x512xf32> to vector<16x128xf32>
    %465 = arith.negf %464 : vector<16x128xf32>
    %466 = math.exp %465 : vector<16x128xf32>
    %cst_145 = arith.constant 1.000000e+00 : f32
    %467 = vector.broadcast %cst_145 : f32 to vector<16x128xf32>
    %468 = arith.addf %467, %466 : vector<16x128xf32>
    %469 = arith.divf %467, %468 : vector<16x128xf32>
    %470 = vector.extract_strided_slice %457 {offsets = [0, 256], sizes = [16, 128], strides = [1, 1]} : vector<16x512xf32> to vector<16x128xf32>
    %471 = math.tanh %470 : vector<16x128xf32>
    %472 = vector.extract_strided_slice %457 {offsets = [0, 384], sizes = [16, 128], strides = [1, 1]} : vector<16x512xf32> to vector<16x128xf32>
    %473 = arith.negf %472 : vector<16x128xf32>
    %474 = math.exp %473 : vector<16x128xf32>
    %cst_146 = arith.constant 1.000000e+00 : f32
    %475 = vector.broadcast %cst_146 : f32 to vector<16x128xf32>
    %476 = arith.addf %475, %474 : vector<16x128xf32>
    %477 = arith.divf %475, %476 : vector<16x128xf32>
    %478 = arith.mulf %469, %444 : vector<16x128xf32>
    %479 = arith.mulf %463, %471 : vector<16x128xf32>
    %480 = arith.addf %478, %479 : vector<16x128xf32>
    %481 = math.tanh %480 : vector<16x128xf32>
    %482 = arith.mulf %477, %481 : vector<16x128xf32>
    %483 = arith.index_cast %c3_i32_140 : i32 to index
    %c0_147 = arith.constant 0 : index
    %c0_148 = arith.constant 0 : index
    %484 = vector.load %arg6[%483, %c0_147, %c0_148] : memref<8x16x128xf32, #tpu.memory_space<vmem>>, vector<1x16x128xf32>
    %485 = vector.shape_cast %484 : vector<1x16x128xf32> to vector<16x128xf32>
    %486 = vector.shape_cast %482 : vector<16x128xf32> to vector<1x16x128xf32>
    tpu.vector_store %arg6[%483, %c0_147, %c0_148], %486 {strides = array<i32>} : memref<8x16x128xf32, #tpu.memory_space<vmem>>, vector<1x16x128xf32>,
    %c4_i32_149 = arith.constant 4 : i32
    %487 = arith.index_cast %c4_i32_149 : i32 to index
    %c0_150 = arith.constant 0 : index
    %c0_151 = arith.constant 0 : index
    %488 = vector.load %arg12[%487, %c0_150, %c0_151] : memref<8x16x512xbf16, #tpu.memory_space<vmem>>, vector<1x16x512xbf16>
    %489 = vector.shape_cast %488 : vector<1x16x512xbf16> to vector<16x512xbf16>
    %490 = arith.extf %489 : vector<16x512xbf16> to vector<16x512xf32>
    %491 = arith.truncf %482 : vector<16x128xf32> to vector<16x128xbf16>
    %cst_152 = arith.constant dense<0.000000e+00> : vector<16x512xf32>
    %492 = tpu.matmul %491, %327, %cst_152 {dimension_numbers = #tpu.dot_dimension_numbers<[1], [0], [0], [1], [0, 0, 1, 1], [], []>} : vector<16x128xbf16>, vector<128x512xbf16>, vector<16x512xf32> -> vector<16x512xf32>
    %493 = arith.addf %490, %492 : vector<16x512xf32>
    %494 = vector.extract_strided_slice %493 {offsets = [0, 0], sizes = [16, 128], strides = [1, 1]} : vector<16x512xf32> to vector<16x128xf32>
    %495 = arith.negf %494 : vector<16x128xf32>
    %496 = math.exp %495 : vector<16x128xf32>
    %cst_153 = arith.constant 1.000000e+00 : f32
    %497 = vector.broadcast %cst_153 : f32 to vector<16x128xf32>
    %498 = arith.addf %497, %496 : vector<16x128xf32>
    %499 = arith.divf %497, %498 : vector<16x128xf32>
    %500 = vector.extract_strided_slice %493 {offsets = [0, 128], sizes = [16, 128], strides = [1, 1]} : vector<16x512xf32> to vector<16x128xf32>
    %501 = arith.negf %500 : vector<16x128xf32>
    %502 = math.exp %501 : vector<16x128xf32>
    %cst_154 = arith.constant 1.000000e+00 : f32
    %503 = vector.broadcast %cst_154 : f32 to vector<16x128xf32>
    %504 = arith.addf %503, %502 : vector<16x128xf32>
    %505 = arith.divf %503, %504 : vector<16x128xf32>
    %506 = vector.extract_strided_slice %493 {offsets = [0, 256], sizes = [16, 128], strides = [1, 1]} : vector<16x512xf32> to vector<16x128xf32>
    %507 = math.tanh %506 : vector<16x128xf32>
    %508 = vector.extract_strided_slice %493 {offsets = [0, 384], sizes = [16, 128], strides = [1, 1]} : vector<16x512xf32> to vector<16x128xf32>
    %509 = arith.negf %508 : vector<16x128xf32>
    %510 = math.exp %509 : vector<16x128xf32>
    %cst_155 = arith.constant 1.000000e+00 : f32
    %511 = vector.broadcast %cst_155 : f32 to vector<16x128xf32>
    %512 = arith.addf %511, %510 : vector<16x128xf32>
    %513 = arith.divf %511, %512 : vector<16x128xf32>
    %514 = arith.mulf %505, %480 : vector<16x128xf32>
    %515 = arith.mulf %499, %507 : vector<16x128xf32>
    %516 = arith.addf %514, %515 : vector<16x128xf32>
    %517 = math.tanh %516 : vector<16x128xf32>
    %518 = arith.mulf %513, %517 : vector<16x128xf32>
    %519 = arith.index_cast %c4_i32_149 : i32 to index
    %c0_156 = arith.constant 0 : index
    %c0_157 = arith.constant 0 : index
    %520 = vector.load %arg6[%519, %c0_156, %c0_157] : memref<8x16x128xf32, #tpu.memory_space<vmem>>, vector<1x16x128xf32>
    %521 = vector.shape_cast %520 : vector<1x16x128xf32> to vector<16x128xf32>
    %522 = vector.shape_cast %518 : vector<16x128xf32> to vector<1x16x128xf32>
    tpu.vector_store %arg6[%519, %c0_156, %c0_157], %522 {strides = array<i32>} : memref<8x16x128xf32, #tpu.memory_space<vmem>>, vector<1x16x128xf32>,
    %c5_i32_158 = arith.constant 5 : i32
    %523 = arith.index_cast %c5_i32_158 : i32 to index
    %c0_159 = arith.constant 0 : index
    %c0_160 = arith.constant 0 : index
    %524 = vector.load %arg12[%523, %c0_159, %c0_160] : memref<8x16x512xbf16, #tpu.memory_space<vmem>>, vector<1x16x512xbf16>
    %525 = vector.shape_cast %524 : vector<1x16x512xbf16> to vector<16x512xbf16>
    %526 = arith.extf %525 : vector<16x512xbf16> to vector<16x512xf32>
    %527 = arith.truncf %518 : vector<16x128xf32> to vector<16x128xbf16>
    %cst_161 = arith.constant dense<0.000000e+00> : vector<16x512xf32>
    %528 = tpu.matmul %527, %327, %cst_161 {dimension_numbers = #tpu.dot_dimension_numbers<[1], [0], [0], [1], [0, 0, 1, 1], [], []>} : vector<16x128xbf16>, vector<128x512xbf16>, vector<16x512xf32> -> vector<16x512xf32>
    %529 = arith.addf %526, %528 : vector<16x512xf32>
    %530 = vector.extract_strided_slice %529 {offsets = [0, 0], sizes = [16, 128], strides = [1, 1]} : vector<16x512xf32> to vector<16x128xf32>
    %531 = arith.negf %530 : vector<16x128xf32>
    %532 = math.exp %531 : vector<16x128xf32>
    %cst_162 = arith.constant 1.000000e+00 : f32
    %533 = vector.broadcast %cst_162 : f32 to vector<16x128xf32>
    %534 = arith.addf %533, %532 : vector<16x128xf32>
    %535 = arith.divf %533, %534 : vector<16x128xf32>
    %536 = vector.extract_strided_slice %529 {offsets = [0, 128], sizes = [16, 128], strides = [1, 1]} : vector<16x512xf32> to vector<16x128xf32>
    %537 = arith.negf %536 : vector<16x128xf32>
    %538 = math.exp %537 : vector<16x128xf32>
    %cst_163 = arith.constant 1.000000e+00 : f32
    %539 = vector.broadcast %cst_163 : f32 to vector<16x128xf32>
    %540 = arith.addf %539, %538 : vector<16x128xf32>
    %541 = arith.divf %539, %540 : vector<16x128xf32>
    %542 = vector.extract_strided_slice %529 {offsets = [0, 256], sizes = [16, 128], strides = [1, 1]} : vector<16x512xf32> to vector<16x128xf32>
    %543 = math.tanh %542 : vector<16x128xf32>
    %544 = vector.extract_strided_slice %529 {offsets = [0, 384], sizes = [16, 128], strides = [1, 1]} : vector<16x512xf32> to vector<16x128xf32>
    %545 = arith.negf %544 : vector<16x128xf32>
    %546 = math.exp %545 : vector<16x128xf32>
    %cst_164 = arith.constant 1.000000e+00 : f32
    %547 = vector.broadcast %cst_164 : f32 to vector<16x128xf32>
    %548 = arith.addf %547, %546 : vector<16x128xf32>
    %549 = arith.divf %547, %548 : vector<16x128xf32>
    %550 = arith.mulf %541, %516 : vector<16x128xf32>
    %551 = arith.mulf %535, %543 : vector<16x128xf32>
    %552 = arith.addf %550, %551 : vector<16x128xf32>
    %553 = math.tanh %552 : vector<16x128xf32>
    %554 = arith.mulf %549, %553 : vector<16x128xf32>
    %555 = arith.index_cast %c5_i32_158 : i32 to index
    %c0_165 = arith.constant 0 : index
    %c0_166 = arith.constant 0 : index
    %556 = vector.load %arg6[%555, %c0_165, %c0_166] : memref<8x16x128xf32, #tpu.memory_space<vmem>>, vector<1x16x128xf32>
    %557 = vector.shape_cast %556 : vector<1x16x128xf32> to vector<16x128xf32>
    %558 = vector.shape_cast %554 : vector<16x128xf32> to vector<1x16x128xf32>
    tpu.vector_store %arg6[%555, %c0_165, %c0_166], %558 {strides = array<i32>} : memref<8x16x128xf32, #tpu.memory_space<vmem>>, vector<1x16x128xf32>,
    %c6_i32_167 = arith.constant 6 : i32
    %559 = arith.index_cast %c6_i32_167 : i32 to index
    %c0_168 = arith.constant 0 : index
    %c0_169 = arith.constant 0 : index
    %560 = vector.load %arg12[%559, %c0_168, %c0_169] : memref<8x16x512xbf16, #tpu.memory_space<vmem>>, vector<1x16x512xbf16>
    %561 = vector.shape_cast %560 : vector<1x16x512xbf16> to vector<16x512xbf16>
    %562 = arith.extf %561 : vector<16x512xbf16> to vector<16x512xf32>
    %563 = arith.truncf %554 : vector<16x128xf32> to vector<16x128xbf16>
    %cst_170 = arith.constant dense<0.000000e+00> : vector<16x512xf32>
    %564 = tpu.matmul %563, %327, %cst_170 {dimension_numbers = #tpu.dot_dimension_numbers<[1], [0], [0], [1], [0, 0, 1, 1], [], []>} : vector<16x128xbf16>, vector<128x512xbf16>, vector<16x512xf32> -> vector<16x512xf32>
    %565 = arith.addf %562, %564 : vector<16x512xf32>
    %566 = vector.extract_strided_slice %565 {offsets = [0, 0], sizes = [16, 128], strides = [1, 1]} : vector<16x512xf32> to vector<16x128xf32>
    %567 = arith.negf %566 : vector<16x128xf32>
    %568 = math.exp %567 : vector<16x128xf32>
    %cst_171 = arith.constant 1.000000e+00 : f32
    %569 = vector.broadcast %cst_171 : f32 to vector<16x128xf32>
    %570 = arith.addf %569, %568 : vector<16x128xf32>
    %571 = arith.divf %569, %570 : vector<16x128xf32>
    %572 = vector.extract_strided_slice %565 {offsets = [0, 128], sizes = [16, 128], strides = [1, 1]} : vector<16x512xf32> to vector<16x128xf32>
    %573 = arith.negf %572 : vector<16x128xf32>
    %574 = math.exp %573 : vector<16x128xf32>
    %cst_172 = arith.constant 1.000000e+00 : f32
    %575 = vector.broadcast %cst_172 : f32 to vector<16x128xf32>
    %576 = arith.addf %575, %574 : vector<16x128xf32>
    %577 = arith.divf %575, %576 : vector<16x128xf32>
    %578 = vector.extract_strided_slice %565 {offsets = [0, 256], sizes = [16, 128], strides = [1, 1]} : vector<16x512xf32> to vector<16x128xf32>
    %579 = math.tanh %578 : vector<16x128xf32>
    %580 = vector.extract_strided_slice %565 {offsets = [0, 384], sizes = [16, 128], strides = [1, 1]} : vector<16x512xf32> to vector<16x128xf32>
    %581 = arith.negf %580 : vector<16x128xf32>
    %582 = math.exp %581 : vector<16x128xf32>
    %cst_173 = arith.constant 1.000000e+00 : f32
    %583 = vector.broadcast %cst_173 : f32 to vector<16x128xf32>
    %584 = arith.addf %583, %582 : vector<16x128xf32>
    %585 = arith.divf %583, %584 : vector<16x128xf32>
    %586 = arith.mulf %577, %552 : vector<16x128xf32>
    %587 = arith.mulf %571, %579 : vector<16x128xf32>
    %588 = arith.addf %586, %587 : vector<16x128xf32>
    %589 = math.tanh %588 : vector<16x128xf32>
    %590 = arith.mulf %585, %589 : vector<16x128xf32>
    %591 = arith.index_cast %c6_i32_167 : i32 to index
    %c0_174 = arith.constant 0 : index
    %c0_175 = arith.constant 0 : index
    %592 = vector.load %arg6[%591, %c0_174, %c0_175] : memref<8x16x128xf32, #tpu.memory_space<vmem>>, vector<1x16x128xf32>
    %593 = vector.shape_cast %592 : vector<1x16x128xf32> to vector<16x128xf32>
    %594 = vector.shape_cast %590 : vector<16x128xf32> to vector<1x16x128xf32>
    tpu.vector_store %arg6[%591, %c0_174, %c0_175], %594 {strides = array<i32>} : memref<8x16x128xf32, #tpu.memory_space<vmem>>, vector<1x16x128xf32>,
    %c7_i32_176 = arith.constant 7 : i32
    %595 = arith.index_cast %c7_i32_176 : i32 to index
    %c0_177 = arith.constant 0 : index
    %c0_178 = arith.constant 0 : index
    %596 = vector.load %arg12[%595, %c0_177, %c0_178] : memref<8x16x512xbf16, #tpu.memory_space<vmem>>, vector<1x16x512xbf16>
    %597 = vector.shape_cast %596 : vector<1x16x512xbf16> to vector<16x512xbf16>
    %598 = arith.extf %597 : vector<16x512xbf16> to vector<16x512xf32>
    %599 = arith.truncf %590 : vector<16x128xf32> to vector<16x128xbf16>
    %cst_179 = arith.constant dense<0.000000e+00> : vector<16x512xf32>
    %600 = tpu.matmul %599, %327, %cst_179 {dimension_numbers = #tpu.dot_dimension_numbers<[1], [0], [0], [1], [0, 0, 1, 1], [], []>} : vector<16x128xbf16>, vector<128x512xbf16>, vector<16x512xf32> -> vector<16x512xf32>
    %601 = arith.addf %598, %600 : vector<16x512xf32>
    %602 = vector.extract_strided_slice %601 {offsets = [0, 0], sizes = [16, 128], strides = [1, 1]} : vector<16x512xf32> to vector<16x128xf32>
    %603 = arith.negf %602 : vector<16x128xf32>
    %604 = math.exp %603 : vector<16x128xf32>
    %cst_180 = arith.constant 1.000000e+00 : f32
    %605 = vector.broadcast %cst_180 : f32 to vector<16x128xf32>
    %606 = arith.addf %605, %604 : vector<16x128xf32>
    %607 = arith.divf %605, %606 : vector<16x128xf32>
    %608 = vector.extract_strided_slice %601 {offsets = [0, 128], sizes = [16, 128], strides = [1, 1]} : vector<16x512xf32> to vector<16x128xf32>
    %609 = arith.negf %608 : vector<16x128xf32>
    %610 = math.exp %609 : vector<16x128xf32>
    %cst_181 = arith.constant 1.000000e+00 : f32
    %611 = vector.broadcast %cst_181 : f32 to vector<16x128xf32>
    %612 = arith.addf %611, %610 : vector<16x128xf32>
    %613 = arith.divf %611, %612 : vector<16x128xf32>
    %614 = vector.extract_strided_slice %601 {offsets = [0, 256], sizes = [16, 128], strides = [1, 1]} : vector<16x512xf32> to vector<16x128xf32>
    %615 = math.tanh %614 : vector<16x128xf32>
    %616 = vector.extract_strided_slice %601 {offsets = [0, 384], sizes = [16, 128], strides = [1, 1]} : vector<16x512xf32> to vector<16x128xf32>
    %617 = arith.negf %616 : vector<16x128xf32>
    %618 = math.exp %617 : vector<16x128xf32>
    %cst_182 = arith.constant 1.000000e+00 : f32
    %619 = vector.broadcast %cst_182 : f32 to vector<16x128xf32>
    %620 = arith.addf %619, %618 : vector<16x128xf32>
    %621 = arith.divf %619, %620 : vector<16x128xf32>
    %622 = arith.mulf %613, %588 : vector<16x128xf32>
    %623 = arith.mulf %607, %615 : vector<16x128xf32>
    %624 = arith.addf %622, %623 : vector<16x128xf32>
    %625 = math.tanh %624 : vector<16x128xf32>
    %626 = arith.mulf %621, %625 : vector<16x128xf32>
    %627 = arith.index_cast %c7_i32_176 : i32 to index
    %c0_183 = arith.constant 0 : index
    %c0_184 = arith.constant 0 : index
    %628 = vector.load %arg6[%627, %c0_183, %c0_184] : memref<8x16x128xf32, #tpu.memory_space<vmem>>, vector<1x16x128xf32>
    %629 = vector.shape_cast %628 : vector<1x16x128xf32> to vector<16x128xf32>
    %630 = vector.shape_cast %626 : vector<16x128xf32> to vector<1x16x128xf32>
    tpu.vector_store %arg6[%627, %c0_183, %c0_184], %630 {strides = array<i32>} : memref<8x16x128xf32, #tpu.memory_space<vmem>>, vector<1x16x128xf32>,
    %c8_i32_185 = arith.constant 8 : i32
    %c1_186 = arith.constant 1 : index
    %c0_187 = arith.constant 0 : index
    %c0_188 = arith.constant 0 : index
    %631 = vector.load %arg9[%c1_186, %c0_187, %c0_188] : memref<2x16x128xf32, #tpu.memory_space<vmem>>, vector<1x16x128xf32>
    %632 = vector.shape_cast %631 : vector<1x16x128xf32> to vector<16x128xf32>
    %633 = vector.shape_cast %626 : vector<16x128xf32> to vector<1x16x128xf32>
    tpu.vector_store %arg9[%c1_186, %c0_187, %c0_188], %633 {strides = array<i32>} : memref<2x16x128xf32, #tpu.memory_space<vmem>>, vector<1x16x128xf32>,
    %c1_189 = arith.constant 1 : index
    %c0_190 = arith.constant 0 : index
    %c0_191 = arith.constant 0 : index
    %634 = vector.load %arg10[%c1_189, %c0_190, %c0_191] : memref<2x16x128xf32, #tpu.memory_space<vmem>>, vector<1x16x128xf32>
    %635 = vector.shape_cast %634 : vector<1x16x128xf32> to vector<16x128xf32>
    %636 = vector.shape_cast %624 : vector<16x128xf32> to vector<1x16x128xf32>
    tpu.vector_store %arg10[%c1_189, %c0_190, %c0_191], %636 {strides = array<i32>} : memref<2x16x128xf32, #tpu.memory_space<vmem>>, vector<1x16x128xf32>,
    %c0_i32_192 = arith.constant 0 : i32
    %637 = arith.cmpi eq, %arg1, %c0_i32_192 : i32
    %638 = arith.extui %637 : i1 to i32
    %c0_i32_193 = arith.constant 0 : i32
    %639 = arith.cmpi ne, %638, %c0_i32_193 : i32
    scf.if %639 {
      %c0_194 = arith.constant 0 : index
      %c0_195 = arith.constant 0 : index
      %c0_196 = arith.constant 0 : index
      %640 = vector.load %arg9[%c0_194, %c0_195, %c0_196] : memref<2x16x128xf32, #tpu.memory_space<vmem>>, vector<2x16x128xf32>
      %c0_197 = arith.constant 0 : index
      %c0_198 = arith.constant 0 : index
      %c0_199 = arith.constant 0 : index
      %641 = vector.load %arg7[%c0_197, %c0_198, %c0_199] : memref<2x16x128xf32, #tpu.memory_space<vmem>>, vector<2x16x128xf32>
      tpu.vector_store %arg7[%c0_197, %c0_198, %c0_199], %640 {strides = array<i32>} : memref<2x16x128xf32, #tpu.memory_space<vmem>>, vector<2x16x128xf32>,
      %c0_200 = arith.constant 0 : index
      %c0_201 = arith.constant 0 : index
      %c0_202 = arith.constant 0 : index
      %642 = vector.load %arg10[%c0_200, %c0_201, %c0_202] : memref<2x16x128xf32, #tpu.memory_space<vmem>>, vector<2x16x128xf32>
      %c0_203 = arith.constant 0 : index
      %c0_204 = arith.constant 0 : index
      %c0_205 = arith.constant 0 : index
      %643 = vector.load %arg8[%c0_203, %c0_204, %c0_205] : memref<2x16x128xf32, #tpu.memory_space<vmem>>, vector<2x16x128xf32>
      tpu.vector_store %arg8[%c0_203, %c0_204, %c0_205], %642 {strides = array<i32>} : memref<2x16x128xf32, #tpu.memory_space<vmem>>, vector<2x16x128xf32>,
    } else {
    }
    return
  }
  func.func @transform_0(%arg0: i32, %arg1: i32) -> (i32, i32, i32) {
    %c0_i32 = arith.constant 0 : i32
    %c0_i32_0 = arith.constant 0 : i32
    return %arg1, %arg0, %c0_i32 : i32, i32, i32
  }
  func.func @transform_1(%arg0: i32, %arg1: i32) -> (i32, i32, i32) {
    %c0_i32 = arith.constant 0 : i32
    %c0_i32_0 = arith.constant 0 : i32
    %c0_i32_1 = arith.constant 0 : i32
    %c0_i32_2 = arith.constant 0 : i32
    return %c0_i32, %c0_i32_0, %c0_i32_1 : i32, i32, i32
  }
  func.func @transform_2(%arg0: i32, %arg1: i32) -> (i32, i32, i32) {
    %c0_i32 = arith.constant 0 : i32
    %c0_i32_0 = arith.constant 0 : i32
    %c0_i32_1 = arith.constant 0 : i32
    %c0_i32_2 = arith.constant 0 : i32
    return %c0_i32, %c0_i32_0, %c0_i32_1 : i32, i32, i32
  }
  func.func @transform_3(%arg0: i32, %arg1: i32) -> (i32, i32, i32) {
    %c0_i32 = arith.constant 0 : i32
    %c0_i32_0 = arith.constant 0 : i32
    %c0_i32_1 = arith.constant 0 : i32
    %c0_i32_2 = arith.constant 0 : i32
    return %c0_i32, %c0_i32_0, %c0_i32_1 : i32, i32, i32
  }
  func.func @transform_4(%arg0: i32, %arg1: i32) -> (i32, i32, i32) {
    %c0_i32 = arith.constant 0 : i32
    %c0_i32_0 = arith.constant 0 : i32
    return %arg1, %arg0, %c0_i32 : i32, i32, i32
  }
  func.func @transform_5(%arg0: i32, %arg1: i32) -> (i32, i32, i32) {
    %c0_i32 = arith.constant 0 : i32
    %c0_i32_0 = arith.constant 0 : i32
    %c0_i32_1 = arith.constant 0 : i32
    return %c0_i32, %arg0, %c0_i32_0 : i32, i32, i32
  }
  func.func @transform_6(%arg0: i32, %arg1: i32) -> (i32, i32, i32) {
    %c0_i32 = arith.constant 0 : i32
    %c0_i32_0 = arith.constant 0 : i32
    %c0_i32_1 = arith.constant 0 : i32
    return %c0_i32, %arg0, %c0_i32_0 : i32, i32, i32
  }
}

</mosaic_0001>

<llo_original>
// kernel: encoder_attention_forward.1
$region0: #{encoder_attention_forward.1}
  #allocation0 [shape = 'u32[]', space=smem, size = 0x4, offset = 0x4, fixed_abs, tag = 'smem constant byte address 0x4 - core index']
  #allocation1 [shape = 'u32[72,128]{1,0:T(1,128)}', space=vmem, size = 0x9000, scoped, tag = 'internal scratch']
  #allocation2 [shape = 'f32[2,16,128]{2,1,0:T(8,128)}', space=vmem, size = 0x4000, scoped, tag = 'scratch operand']
  #allocation3 [shape = 'f32[2,16,128]{2,1,0:T(8,128)}', space=vmem, size = 0x4000, scoped, tag = 'scratch operand']
  #allocation4 [shape = 'bf16[8,16,128]{2,1,0:T(8,128)(2,1)}', space=vmem, size = 0x8000, scoped, tag = 'scratch operand']
  #allocation5 [shape = 'bf16[8,16,512]{2,1,0:T(8,128)(2,1)}', space=vmem, size = 0x20000, scoped, tag = 'scratch operand']
  %s0 = inlined_call_operand.vmem [shape: bf16[8,16,128], index: 0, kind: input, shape index: {}]
  %s1 = inlined_call_operand.vmem [shape: bf16[2,128,512], index: 1, kind: input, shape index: {}]
  %s2 = inlined_call_operand.vmem [shape: bf16[2,128,512], index: 2, kind: input, shape index: {}]
  %s3 = inlined_call_operand.vmem [shape: f32[2,1,512], index: 3, kind: input, shape index: {}]
  %s4 = inlined_call_operand.vmem [shape: f32[8,16,128], index: 4, kind: output, shape index: {0}]
  %s5 = inlined_call_operand.vmem [shape: f32[2,16,128], index: 5, kind: output, shape index: {1}]
  %s6 = inlined_call_operand.vmem [shape: f32[2,16,128], index: 6, kind: output, shape index: {2}]
  %7 = xla_tuple %s4, %s5, %s6
  %s8 = sld [smem:[#allocation0]]
  $region50: #{encoder_attention_forward.1} parent=0
    _
  %s10 = ssub.s32 1, %s8
  %s11 = scalar_select 0, %s10, %s8
  // Predicated region
  $region2: #{encoder_attention_forward.1} parent=0 // pred_check
    _
  $region3: #{encoder_attention_forward.1} parent=0 // pred_check_branch
    %13 = sbr.rel (0) target = $region5
  $region4: #{encoder_attention_forward.1} parent=0 // pred_region
    _
  $region5: #{encoder_attention_forward.1} parent=0 // pred_fallthru
    _
  // Predicated region
  $region6: #{encoder_attention_forward.1} parent=0 // pred_check
    _
  $region7: #{encoder_attention_forward.1} parent=0 // pred_check_branch
    %15 = sbr.rel (0) target = $region9
  $region8: #{encoder_attention_forward.1} parent=0 // pred_region
    _
  $region9: #{encoder_attention_forward.1} parent=0 // pred_fallthru
    _
  // Predicated region
  $region10: #{encoder_attention_forward.1} parent=0 // pred_check
    _
  $region11: #{encoder_attention_forward.1} parent=0 // pred_check_branch
    %17 = sbr.rel (0) target = $region13
  $region12: #{encoder_attention_forward.1} parent=0 // pred_region
    _
  $region13: #{encoder_attention_forward.1} parent=0 // pred_fallthru
    _
  // Predicated region
  $region14: #{encoder_attention_forward.1} parent=0 // pred_check
    _
  $region15: #{encoder_attention_forward.1} parent=0 // pred_check_branch
    %19 = sbr.rel (0) target = $region17
  $region16: #{encoder_attention_forward.1} parent=0 // pred_region
    _
  $region17: #{encoder_attention_forward.1} parent=0 // pred_fallthru
    _
  %p20 = scmp.eq.s32.totalorder 0, 0
  // Predicated region
  $region18: #{encoder_attention_forward.1} parent=0 // pred_check
    %p21 = pneg %p20
  $region19: #{encoder_attention_forward.1} parent=0 // pred_check_branch
    %23 = sbr.rel (%p21) target = $region21
  $region20: #{encoder_attention_forward.1} parent=0 // pred_region
    %24 = vst [vmem:[#allocation2] sm:$0xff] 0.0
    %25 = vst [vmem:[#allocation2 + $0x8] sm:$0xff] 0.0
    %26 = vst [vmem:[#allocation2 + $0x10] sm:$0xff] 0.0
    %27 = vst [vmem:[#allocation2 + $0x18] sm:$0xff] 0.0
    %28 = vst [vmem:[#allocation3] sm:$0xff] 0.0
    %29 = vst [vmem:[#allocation3 + $0x8] sm:$0xff] 0.0
    %30 = vst [vmem:[#allocation3 + $0x10] sm:$0xff] 0.0
    %31 = vst [vmem:[#allocation3 + $0x18] sm:$0xff] 0.0
  $region21: #{encoder_attention_forward.1} parent=0 // pred_fallthru
    _
  %v32 = vld [vmem:[%s1] sm:$0xff]
  %v33 = vld [vmem:[%s1 + $0x8] sm:$0xff]
  %v34 = vld [vmem:[%s1 + $0x10] sm:$0xff]
  %v35 = vld [vmem:[%s1 + $0x18] sm:$0xff]
  %v36 = vld [vmem:[%s1 + $0x20] sm:$0xff]
  %v37 = vld [vmem:[%s1 + $0x28] sm:$0xff]
  %v38 = vld [vmem:[%s1 + $0x30] sm:$0xff]
  %v39 = vld [vmem:[%s1 + $0x38] sm:$0xff]
  %v40 = vld [vmem:[%s1 + $0x40] sm:$0xff]
  %v41 = vld [vmem:[%s1 + $0x48] sm:$0xff]
  %v42 = vld [vmem:[%s1 + $0x50] sm:$0xff]
  %v43 = vld [vmem:[%s1 + $0x58] sm:$0xff]
  %v44 = vld [vmem:[%s1 + $0x60] sm:$0xff]
  %v45 = vld [vmem:[%s1 + $0x68] sm:$0xff]
  %v46 = vld [vmem:[%s1 + $0x70] sm:$0xff]
  %v47 = vld [vmem:[%s1 + $0x78] sm:$0xff]
  %v48 = vld [vmem:[%s1 + $0x80] sm:$0xff]
  %v49 = vld [vmem:[%s1 + $0x88] sm:$0xff]
  %v50 = vld [vmem:[%s1 + $0x90] sm:$0xff]
  %v51 = vld [vmem:[%s1 + $0x98] sm:$0xff]
  %v52 = vld [vmem:[%s1 + $0xa0] sm:$0xff]
  %v53 = vld [vmem:[%s1 + $0xa8] sm:$0xff]
  %v54 = vld [vmem:[%s1 + $0xb0] sm:$0xff]
  %v55 = vld [vmem:[%s1 + $0xb8] sm:$0xff]
  %v56 = vld [vmem:[%s1 + $0xc0] sm:$0xff]
  %v57 = vld [vmem:[%s1 + $0xc8] sm:$0xff]
  %v58 = vld [vmem:[%s1 + $0xd0] sm:$0xff]
  %v59 = vld [vmem:[%s1 + $0xd8] sm:$0xff]
  %v60 = vld [vmem:[%s1 + $0xe0] sm:$0xff]
  %v61 = vld [vmem:[%s1 + $0xe8] sm:$0xff]
  %v62 = vld [vmem:[%s1 + $0xf0] sm:$0xff]
  %v63 = vld [vmem:[%s1 + $0xf8] sm:$0xff]
  %v64 = vld [vmem:[%s2] sm:$0xff]
  %v65 = vld [vmem:[%s2 + $0x8] sm:$0xff]
  %v66 = vld [vmem:[%s2 + $0x10] sm:$0xff]
  %v67 = vld [vmem:[%s2 + $0x18] sm:$0xff]
  %v68 = vld [vmem:[%s2 + $0x20] sm:$0xff]
  %v69 = vld [vmem:[%s2 + $0x28] sm:$0xff]
  %v70 = vld [vmem:[%s2 + $0x30] sm:$0xff]
  %v71 = vld [vmem:[%s2 + $0x38] sm:$0xff]
  %v72 = vld [vmem:[%s2 + $0x40] sm:$0xff]
  %v73 = vld [vmem:[%s2 + $0x48] sm:$0xff]
  %v74 = vld [vmem:[%s2 + $0x50] sm:$0xff]
  %v75 = vld [vmem:[%s2 + $0x58] sm:$0xff]
  %v76 = vld [vmem:[%s2 + $0x60] sm:$0xff]
  %v77 = vld [vmem:[%s2 + $0x68] sm:$0xff]
  %v78 = vld [vmem:[%s2 + $0x70] sm:$0xff]
  %v79 = vld [vmem:[%s2 + $0x78] sm:$0xff]
  %v80 = vld [vmem:[%s2 + $0x80] sm:$0xff]
  %v81 = vld [vmem:[%s2 + $0x88] sm:$0xff]
  %v82 = vld [vmem:[%s2 + $0x90] sm:$0xff]
  %v83 = vld [vmem:[%s2 + $0x98] sm:$0xff]
  %v84 = vld [vmem:[%s2 + $0xa0] sm:$0xff]
  %v85 = vld [vmem:[%s2 + $0xa8] sm:$0xff]
  %v86 = vld [vmem:[%s2 + $0xb0] sm:$0xff]
  %v87 = vld [vmem:[%s2 + $0xb8] sm:$0xff]
  %v88 = vld [vmem:[%s2 + $0xc0] sm:$0xff]
  %v89 = vld [vmem:[%s2 + $0xc8] sm:$0xff]
  %v90 = vld [vmem:[%s2 + $0xd0] sm:$0xff]
  %v91 = vld [vmem:[%s2 + $0xd8] sm:$0xff]
  %v92 = vld [vmem:[%s2 + $0xe0] sm:$0xff]
  %v93 = vld [vmem:[%s2 + $0xe8] sm:$0xff]
  %v94 = vld [vmem:[%s2 + $0xf0] sm:$0xff]
  %v95 = vld [vmem:[%s2 + $0xf8] sm:$0xff]
  %v96 = vld [vmem:[%s3] sm:$0xf]
  %v97 = vld [vmem:[%s0] sm:$0xf]
  %v98 = vld [vmem:[%s0 + $0x4] sm:$0xf]
  %v99 = vld [vmem:[%s0 + $0x8] sm:$0xf]
  %v100 = vld [vmem:[%s0 + $0xc] sm:$0xf]
  %v101 = vld [vmem:[%s0 + $0x10] sm:$0xf]
  %v102 = vld [vmem:[%s0 + $0x14] sm:$0xf]
  %v103 = vld [vmem:[%s0 + $0x18] sm:$0xf]
  %v104 = vld [vmem:[%s0 + $0x1c] sm:$0xf]
  %v105 = vld [vmem:[%s0 + $0x20] sm:$0xf]
  %v106 = vld [vmem:[%s0 + $0x24] sm:$0xf]
  %v107 = vld [vmem:[%s0 + $0x28] sm:$0xf]
  %v108 = vld [vmem:[%s0 + $0x2c] sm:$0xf]
  %v109 = vld [vmem:[%s0 + $0x30] sm:$0xf]
  %v110 = vld [vmem:[%s0 + $0x34] sm:$0xf]
  %v111 = vld [vmem:[%s0 + $0x38] sm:$0xf]
  %v112 = vld [vmem:[%s0 + $0x3c] sm:$0xf]
  %v129 = vunpack.c.l.b16 %v97
  %v130 = vunpack.c.l.b16 %v98
  %v131 = vunpack.c.l.b16 %v99
  %v132 = vunpack.c.l.b16 %v100
  %v133 = vunpack.c.l.b16 %v101
  %v134 = vunpack.c.l.b16 %v102
  %v135 = vunpack.c.l.b16 %v103
  %v136 = vunpack.c.l.b16 %v104
  %v137 = vunpack.c.l.b16 %v105
  %v138 = vunpack.c.l.b16 %v106
  %v139 = vunpack.c.l.b16 %v107
  %v140 = vunpack.c.l.b16 %v108
  %v141 = vunpack.c.l.b16 %v109
  %v142 = vunpack.c.l.b16 %v110
  %v143 = vunpack.c.l.b16 %v111
  %v144 = vunpack.c.l.b16 %v112
  %v145 = vpack.c.b16 %v130, %v129
  %v146 = vpack.c.b16 %v132, %v131
  %v147 = vpack.c.b16 %v134, %v133
  %v148 = vpack.c.b16 %v136, %v135
  %v149 = vpack.c.b16 %v138, %v137
  %v150 = vpack.c.b16 %v140, %v139
  %v151 = vpack.c.b16 %v142, %v141
  %v152 = vpack.c.b16 %v144, %v143
  %v193 = vunpack.c.l.b16 %v32
  %v194 = vunpack.c.h.b16 %v32
  %v195 = vunpack.c.l.b16 %v33
  %v196 = vunpack.c.h.b16 %v33
  %v197 = vunpack.c.l.b16 %v34
  %v198 = vunpack.c.h.b16 %v34
  %v199 = vunpack.c.l.b16 %v35
  %v200 = vunpack.c.h.b16 %v35
  %v201 = vunpack.c.l.b16 %v36
  %v202 = vunpack.c.h.b16 %v36
  %v203 = vunpack.c.l.b16 %v37
  %v204 = vunpack.c.h.b16 %v37
  %v205 = vunpack.c.l.b16 %v38
  %v206 = vunpack.c.h.b16 %v38
  %v207 = vunpack.c.l.b16 %v39
  %v208 = vunpack.c.h.b16 %v39
  %v209 = vunpack.c.l.b16 %v40
  %v210 = vunpack.c.h.b16 %v40
  %v211 = vunpack.c.l.b16 %v41
  %v212 = vunpack.c.h.b16 %v41
  %v213 = vunpack.c.l.b16 %v42
  %v214 = vunpack.c.h.b16 %v42
  %v215 = vunpack.c.l.b16 %v43
  %v216 = vunpack.c.h.b16 %v43
  %v217 = vunpack.c.l.b16 %v44
  %v218 = vunpack.c.h.b16 %v44
  %v219 = vunpack.c.l.b16 %v45
  %v220 = vunpack.c.h.b16 %v45
  %v221 = vunpack.c.l.b16 %v46
  %v222 = vunpack.c.h.b16 %v46
  %v223 = vunpack.c.l.b16 %v47
  %v224 = vunpack.c.h.b16 %v47
  %v225 = vunpack.c.l.b16 %v48
  %v226 = vunpack.c.h.b16 %v48
  %v227 = vunpack.c.l.b16 %v49
  %v228 = vunpack.c.h.b16 %v49
  %v229 = vunpack.c.l.b16 %v50
  %v230 = vunpack.c.h.b16 %v50
  %v231 = vunpack.c.l.b16 %v51
  %v232 = vunpack.c.h.b16 %v51
  %v233 = vunpack.c.l.b16 %v52
  %v234 = vunpack.c.h.b16 %v52
  %v235 = vunpack.c.l.b16 %v53
  %v236 = vunpack.c.h.b16 %v53
  %v237 = vunpack.c.l.b16 %v54
  %v238 = vunpack.c.h.b16 %v54
  %v239 = vunpack.c.l.b16 %v55
  %v240 = vunpack.c.h.b16 %v55
  %v241 = vunpack.c.l.b16 %v56
  %v242 = vunpack.c.h.b16 %v56
  %v243 = vunpack.c.l.b16 %v57
  %v244 = vunpack.c.h.b16 %v57
  %v245 = vunpack.c.l.b16 %v58
  %v246 = vunpack.c.h.b16 %v58
  %v247 = vunpack.c.l.b16 %v59
  %v248 = vunpack.c.h.b16 %v59
  %v249 = vunpack.c.l.b16 %v60
  %v250 = vunpack.c.h.b16 %v60
  %v251 = vunpack.c.l.b16 %v61
  %v252 = vunpack.c.h.b16 %v61
  %v253 = vunpack.c.l.b16 %v62
  %v254 = vunpack.c.h.b16 %v62
  %v255 = vunpack.c.l.b16 %v63
  %v256 = vunpack.c.h.b16 %v63
  %v257 = vpack.c.b16 %v197, %v193
  %v258 = vpack.c.b16 %v198, %v194
  %v259 = vpack.c.b16 %v199, %v195
  %v260 = vpack.c.b16 %v200, %v196
  %v261 = vpack.c.b16 %v205, %v201
  %v262 = vpack.c.b16 %v206, %v202
  %v263 = vpack.c.b16 %v207, %v203
  %v264 = vpack.c.b16 %v208, %v204
  %v265 = vpack.c.b16 %v213, %v209
  %v266 = vpack.c.b16 %v214, %v210
  %v267 = vpack.c.b16 %v215, %v211
  %v268 = vpack.c.b16 %v216, %v212
  %v269 = vpack.c.b16 %v221, %v217
  %v270 = vpack.c.b16 %v222, %v218
  %v271 = vpack.c.b16 %v223, %v219
  %v272 = vpack.c.b16 %v224, %v220
  %v273 = vpack.c.b16 %v229, %v225
  %v274 = vpack.c.b16 %v230, %v226
  %v275 = vpack.c.b16 %v231, %v227
  %v276 = vpack.c.b16 %v232, %v228
  %v277 = vpack.c.b16 %v237, %v233
  %v278 = vpack.c.b16 %v238, %v234
  %v279 = vpack.c.b16 %v239, %v235
  %v280 = vpack.c.b16 %v240, %v236
  %v281 = vpack.c.b16 %v245, %v241
  %v282 = vpack.c.b16 %v246, %v242
  %v283 = vpack.c.b16 %v247, %v243
  %v284 = vpack.c.b16 %v248, %v244
  %v285 = vpack.c.b16 %v253, %v249
  %v286 = vpack.c.b16 %v254, %v250
  %v287 = vpack.c.b16 %v255, %v251
  %v288 = vpack.c.b16 %v256, %v252
  %321 = vmatpush.bf16.msra.mxu0 %v285
  %322 = vmatpush.bf16.msra.mxu0 %v281
  %323 = vmatpush.bf16.msra.mxu0 %v277
  %324 = vmatpush.bf16.msra.mxu0 %v273
  %325 = vmatpush.bf16.msra.mxu0 %v269
  %326 = vmatpush.bf16.msra.mxu0 %v265
  %327 = vmatpush.bf16.msra.mxu0 %v261
  %328 = vmatpush.bf16.msra.mxu0 %v257
  %329 = vmatmul.bf16.gmra.mxu0 %v145
  %v330 = vpop.f32.mrf.mxu0
  %v331 = vadd.f32 0.0, %v330
  %v332 = vpop.f32.mrf.mxu0
  %v333 = vadd.f32 0.0, %v332
  %334 = vmatmul.bf16.gmra.mxu0 %v146
  %v335 = vpop.f32.mrf.mxu0
  %v336 = vadd.f32 0.0, %v335
  %v337 = vpop.f32.mrf.mxu0
  %v338 = vadd.f32 0.0, %v337
  %339 = vmatmul.bf16.gmra.mxu0 %v147
  %v340 = vpop.f32.mrf.mxu0
  %v341 = vadd.f32 0.0, %v340
  %v342 = vpop.f32.mrf.mxu0
  %v343 = vadd.f32 0.0, %v342
  %344 = vmatmul.bf16.gmra.mxu0 %v148
  %v345 = vpop.f32.mrf.mxu0
  %v346 = vadd.f32 0.0, %v345
  %v347 = vpop.f32.mrf.mxu0
  %v348 = vadd.f32 0.0, %v347
  %349 = vmatmul.bf16.gmra.mxu0 %v149
  %v350 = vpop.f32.mrf.mxu0
  %v351 = vadd.f32 0.0, %v350
  %v352 = vpop.f32.mrf.mxu0
  %v353 = vadd.f32 0.0, %v352
  %354 = vmatmul.bf16.gmra.mxu0 %v150
  %v355 = vpop.f32.mrf.mxu0
  %v356 = vadd.f32 0.0, %v355
  %v357 = vpop.f32.mrf.mxu0
  %v358 = vadd.f32 0.0, %v357
  %359 = vmatmul.bf16.gmra.mxu0 %v151
  %v360 = vpop.f32.mrf.mxu0
  %v361 = vadd.f32 0.0, %v360
  %v362 = vpop.f32.mrf.mxu0
  %v363 = vadd.f32 0.0, %v362
  %364 = vmatmul.bf16.gmra.mxu0 %v152
  %v365 = vpop.f32.mrf.mxu0
  %v366 = vadd.f32 0.0, %v365
  %v367 = vpop.f32.mrf.mxu0
  %v368 = vadd.f32 0.0, %v367
  %369 = vdwg.mxu0
  %370 = vmatpush.bf16.msra.mxu0 %v286
  %371 = vmatpush.bf16.msra.mxu0 %v282
  %372 = vmatpush.bf16.msra.mxu0 %v278
  %373 = vmatpush.bf16.msra.mxu0 %v274
  %374 = vmatpush.bf16.msra.mxu0 %v270
  %375 = vmatpush.bf16.msra.mxu0 %v266
  %376 = vmatpush.bf16.msra.mxu0 %v262
  %377 = vmatpush.bf16.msra.mxu0 %v258
  %378 = vmatmul.bf16.gmra.mxu0 %v145
  %v379 = vpop.f32.mrf.mxu0
  %v380 = vadd.f32 0.0, %v379
  %v381 = vpop.f32.mrf.mxu0
  %v382 = vadd.f32 0.0, %v381
  %383 = vmatmul.bf16.gmra.mxu0 %v146
  %v384 = vpop.f32.mrf.mxu0
  %v385 = vadd.f32 0.0, %v384
  %v386 = vpop.f32.mrf.mxu0
  %v387 = vadd.f32 0.0, %v386
  %388 = vmatmul.bf16.gmra.mxu0 %v147
  %v389 = vpop.f32.mrf.mxu0
  %v390 = vadd.f32 0.0, %v389
  %v391 = vpop.f32.mrf.mxu0
  %v392 = vadd.f32 0.0, %v391
  %393 = vmatmul.bf16.gmra.mxu0 %v148
  %v394 = vpop.f32.mrf.mxu0
  %v395 = vadd.f32 0.0, %v394
  %v396 = vpop.f32.mrf.mxu0
  %v397 = vadd.f32 0.0, %v396
  %398 = vmatmul.bf16.gmra.mxu0 %v149
  %v399 = vpop.f32.mrf.mxu0
  %v400 = vadd.f32 0.0, %v399
  %v401 = vpop.f32.mrf.mxu0
  %v402 = vadd.f32 0.0, %v401
  %403 = vmatmul.bf16.gmra.mxu0 %v150
  %v404 = vpop.f32.mrf.mxu0
  %v405 = vadd.f32 0.0, %v404
  %v406 = vpop.f32.mrf.mxu0
  %v407 = vadd.f32 0.0, %v406
  %408 = vmatmul.bf16.gmra.mxu0 %v151
  %v409 = vpop.f32.mrf.mxu0
  %v410 = vadd.f32 0.0, %v409
  %v411 = vpop.f32.mrf.mxu0
  %v412 = vadd.f32 0.0, %v411
  %413 = vmatmul.bf16.gmra.mxu0 %v152
  %v414 = vpop.f32.mrf.mxu0
  %v415 = vadd.f32 0.0, %v414
  %v416 = vpop.f32.mrf.mxu0
  %v417 = vadd.f32 0.0, %v416
  %418 = vdwg.mxu0
  %419 = vmatpush.bf16.msra.mxu0 %v287
  %420 = vmatpush.bf16.msra.mxu0 %v283
  %421 = vmatpush.bf16.msra.mxu0 %v279
  %422 = vmatpush.bf16.msra.mxu0 %v275
  %423 = vmatpush.bf16.msra.mxu0 %v271
  %424 = vmatpush.bf16.msra.mxu0 %v267
  %425 = vmatpush.bf16.msra.mxu0 %v263
  %426 = vmatpush.bf16.msra.mxu0 %v259
  %427 = vmatmul.bf16.gmra.mxu0 %v145
  %v428 = vpop.f32.mrf.mxu0
  %v429 = vadd.f32 0.0, %v428
  %v430 = vpop.f32.mrf.mxu0
  %v431 = vadd.f32 0.0, %v430
  %432 = vmatmul.bf16.gmra.mxu0 %v146
  %v433 = vpop.f32.mrf.mxu0
  %v434 = vadd.f32 0.0, %v433
  %v435 = vpop.f32.mrf.mxu0
  %v436 = vadd.f32 0.0, %v435
  %437 = vmatmul.bf16.gmra.mxu0 %v147
  %v438 = vpop.f32.mrf.mxu0
  %v439 = vadd.f32 0.0, %v438
  %v440 = vpop.f32.mrf.mxu0
  %v441 = vadd.f32 0.0, %v440
  %442 = vmatmul.bf16.gmra.mxu0 %v148
  %v443 = vpop.f32.mrf.mxu0
  %v444 = vadd.f32 0.0, %v443
  %v445 = vpop.f32.mrf.mxu0
  %v446 = vadd.f32 0.0, %v445
  %447 = vmatmul.bf16.gmra.mxu0 %v149
  %v448 = vpop.f32.mrf.mxu0
  %v449 = vadd.f32 0.0, %v448
  %v450 = vpop.f32.mrf.mxu0
  %v451 = vadd.f32 0.0, %v450
  %452 = vmatmul.bf16.gmra.mxu0 %v150
  %v453 = vpop.f32.mrf.mxu0
  %v454 = vadd.f32 0.0, %v453
  %v455 = vpop.f32.mrf.mxu0
  %v456 = vadd.f32 0.0, %v455
  %457 = vmatmul.bf16.gmra.mxu0 %v151
  %v458 = vpop.f32.mrf.mxu0
  %v459 = vadd.f32 0.0, %v458
  %v460 = vpop.f32.mrf.mxu0
  %v461 = vadd.f32 0.0, %v460
  %462 = vmatmul.bf16.gmra.mxu0 %v152
  %v463 = vpop.f32.mrf.mxu0
  %v464 = vadd.f32 0.0, %v463
  %v465 = vpop.f32.mrf.mxu0
  %v466 = vadd.f32 0.0, %v465
  %467 = vdwg.mxu0
  %468 = vmatpush.bf16.msra.mxu0 %v288
  %469 = vmatpush.bf16.msra.mxu0 %v284
  %470 = vmatpush.bf16.msra.mxu0 %v280
  %471 = vmatpush.bf16.msra.mxu0 %v276
  %472 = vmatpush.bf16.msra.mxu0 %v272
  %473 = vmatpush.bf16.msra.mxu0 %v268
  %474 = vmatpush.bf16.msra.mxu0 %v264
  %475 = vmatpush.bf16.msra.mxu0 %v260
  %476 = vmatmul.bf16.gmra.mxu0 %v145
  %v477 = vpop.f32.mrf.mxu0
  %v478 = vadd.f32 0.0, %v477
  %v479 = vpop.f32.mrf.mxu0
  %v480 = vadd.f32 0.0, %v479
  %481 = vmatmul.bf16.gmra.mxu0 %v146
  %v482 = vpop.f32.mrf.mxu0
  %v483 = vadd.f32 0.0, %v482
  %v484 = vpop.f32.mrf.mxu0
  %v485 = vadd.f32 0.0, %v484
  %486 = vmatmul.bf16.gmra.mxu0 %v147
  %v487 = vpop.f32.mrf.mxu0
  %v488 = vadd.f32 0.0, %v487
  %v489 = vpop.f32.mrf.mxu0
  %v490 = vadd.f32 0.0, %v489
  %491 = vmatmul.bf16.gmra.mxu0 %v148
  %v492 = vpop.f32.mrf.mxu0
  %v493 = vadd.f32 0.0, %v492
  %v494 = vpop.f32.mrf.mxu0
  %v495 = vadd.f32 0.0, %v494
  %496 = vmatmul.bf16.gmra.mxu0 %v149
  %v497 = vpop.f32.mrf.mxu0
  %v498 = vadd.f32 0.0, %v497
  %v499 = vpop.f32.mrf.mxu0
  %v500 = vadd.f32 0.0, %v499
  %501 = vmatmul.bf16.gmra.mxu0 %v150
  %v502 = vpop.f32.mrf.mxu0
  %v503 = vadd.f32 0.0, %v502
  %v504 = vpop.f32.mrf.mxu0
  %v505 = vadd.f32 0.0, %v504
  %506 = vmatmul.bf16.gmra.mxu0 %v151
  %v507 = vpop.f32.mrf.mxu0
  %v508 = vadd.f32 0.0, %v507
  %v509 = vpop.f32.mrf.mxu0
  %v510 = vadd.f32 0.0, %v509
  %511 = vmatmul.bf16.gmra.mxu0 %v152
  %v512 = vpop.f32.mrf.mxu0
  %v513 = vadd.f32 0.0, %v512
  %v514 = vpop.f32.mrf.mxu0
  %v515 = vadd.f32 0.0, %v514
  %516 = vdwg.mxu0
  %v518 = vperm.slane %v96, 0
  %v519 = vperm.slane %v96, 1
  %v520 = vperm.slane %v96, 2
  %v521 = vperm.slane %v96, 3
  %v526 = vadd.f32 %v331, %v518
  %v527 = vadd.f32 %v380, %v519
  %v528 = vadd.f32 %v429, %v520
  %v529 = vadd.f32 %v478, %v521
  %v530 = vadd.f32 %v333, %v518
  %v531 = vadd.f32 %v382, %v519
  %v532 = vadd.f32 %v431, %v520
  %v533 = vadd.f32 %v480, %v521
  %v534 = vadd.f32 %v336, %v518
  %v535 = vadd.f32 %v385, %v519
  %v536 = vadd.f32 %v434, %v520
  %v537 = vadd.f32 %v483, %v521
  %v538 = vadd.f32 %v338, %v518
  %v539 = vadd.f32 %v387, %v519
  %v540 = vadd.f32 %v436, %v520
  %v541 = vadd.f32 %v485, %v521
  %v542 = vadd.f32 %v341, %v518
  %v543 = vadd.f32 %v390, %v519
  %v544 = vadd.f32 %v439, %v520
  %v545 = vadd.f32 %v488, %v521
  %v546 = vadd.f32 %v343, %v518
  %v547 = vadd.f32 %v392, %v519
  %v548 = vadd.f32 %v441, %v520
  %v549 = vadd.f32 %v490, %v521
  %v550 = vadd.f32 %v346, %v518
  %v551 = vadd.f32 %v395, %v519
  %v552 = vadd.f32 %v444, %v520
  %v553 = vadd.f32 %v493, %v521
  %v554 = vadd.f32 %v348, %v518
  %v555 = vadd.f32 %v397, %v519
  %v556 = vadd.f32 %v446, %v520
  %v557 = vadd.f32 %v495, %v521
  %v558 = vadd.f32 %v351, %v518
  %v559 = vadd.f32 %v400, %v519
  %v560 = vadd.f32 %v449, %v520
  %v561 = vadd.f32 %v498, %v521
  %v562 = vadd.f32 %v353, %v518
  %v563 = vadd.f32 %v402, %v519
  %v564 = vadd.f32 %v451, %v520
  %v565 = vadd.f32 %v500, %v521
  %v566 = vadd.f32 %v356, %v518
  %v567 = vadd.f32 %v405, %v519
  %v568 = vadd.f32 %v454, %v520
  %v569 = vadd.f32 %v503, %v521
  %v570 = vadd.f32 %v358, %v518
  %v571 = vadd.f32 %v407, %v519
  %v572 = vadd.f32 %v456, %v520
  %v573 = vadd.f32 %v505, %v521
  %v574 = vadd.f32 %v361, %v518
  %v575 = vadd.f32 %v410, %v519
  %v576 = vadd.f32 %v459, %v520
  %v577 = vadd.f32 %v508, %v521
  %v578 = vadd.f32 %v363, %v518
  %v579 = vadd.f32 %v412, %v519
  %v580 = vadd.f32 %v461, %v520
  %v581 = vadd.f32 %v510, %v521
  %v582 = vadd.f32 %v366, %v518
  %v583 = vadd.f32 %v415, %v519
  %v584 = vadd.f32 %v464, %v520
  %v585 = vadd.f32 %v513, %v521
  %v586 = vadd.f32 %v368, %v518
  %v587 = vadd.f32 %v417, %v519
  %v588 = vadd.f32 %v466, %v520
  %v589 = vadd.f32 %v515, %v521
  %v590 = vpack.c.bf16 %v527, %v526
  %v591 = vpack.c.bf16 %v529, %v528
  %v592 = vpack.c.bf16 %v531, %v530
  %v593 = vpack.c.bf16 %v533, %v532
  %v594 = vpack.c.bf16 %v535, %v534
  %v595 = vpack.c.bf16 %v537, %v536
  %v596 = vpack.c.bf16 %v539, %v538
  %v597 = vpack.c.bf16 %v541, %v540
  %v598 = vpack.c.bf16 %v543, %v542
  %v599 = vpack.c.bf16 %v545, %v544
  %v600 = vpack.c.bf16 %v547, %v546
  %v601 = vpack.c.bf16 %v549, %v548
  %v602 = vpack.c.bf16 %v551, %v550
  %v603 = vpack.c.bf16 %v553, %v552
  %v604 = vpack.c.bf16 %v555, %v554
  %v605 = vpack.c.bf16 %v557, %v556
  %v606 = vpack.c.bf16 %v559, %v558
  %v607 = vpack.c.bf16 %v561, %v560
  %v608 = vpack.c.bf16 %v563, %v562
  %v609 = vpack.c.bf16 %v565, %v564
  %v610 = vpack.c.bf16 %v567, %v566
  %v611 = vpack.c.bf16 %v569, %v568
  %v612 = vpack.c.bf16 %v571, %v570
  %v613 = vpack.c.bf16 %v573, %v572
  %v614 = vpack.c.bf16 %v575, %v574
  %v615 = vpack.c.bf16 %v577, %v576
  %v616 = vpack.c.bf16 %v579, %v578
  %v617 = vpack.c.bf16 %v581, %v580
  %v618 = vpack.c.bf16 %v583, %v582
  %v619 = vpack.c.bf16 %v585, %v584
  %v620 = vpack.c.bf16 %v587, %v586
  %v621 = vpack.c.bf16 %v589, %v588
  %622 = vst [vmem:[#allocation5] sm:$0xff] %v590
  %623 = vst [vmem:[#allocation5 + $0x8] sm:$0xff] %v591
  %624 = vst [vmem:[#allocation5 + $0x10] sm:$0xff] %v592
  %625 = vst [vmem:[#allocation5 + $0x18] sm:$0xff] %v593
  %626 = vst [vmem:[#allocation5 + $0x20] sm:$0xff] %v594
  %627 = vst [vmem:[#allocation5 + $0x28] sm:$0xff] %v595
  %628 = vst [vmem:[#allocation5 + $0x30] sm:$0xff] %v596
  %629 = vst [vmem:[#allocation5 + $0x38] sm:$0xff] %v597
  %630 = vst [vmem:[#allocation5 + $0x40] sm:$0xff] %v598
  %631 = vst [vmem:[#allocation5 + $0x48] sm:$0xff] %v599
  %632 = vst [vmem:[#allocation5 + $0x50] sm:$0xff] %v600
  %633 = vst [vmem:[#allocation5 + $0x58] sm:$0xff] %v601
  %634 = vst [vmem:[#allocation5 + $0x60] sm:$0xff] %v602
  %635 = vst [vmem:[#allocation5 + $0x68] sm:$0xff] %v603
  %636 = vst [vmem:[#allocation5 + $0x70] sm:$0xff] %v604
  %637 = vst [vmem:[#allocation5 + $0x78] sm:$0xff] %v605
  %638 = vst [vmem:[#allocation5 + $0x80] sm:$0xff] %v606
  %639 = vst [vmem:[#allocation5 + $0x88] sm:$0xff] %v607
  %640 = vst [vmem:[#allocation5 + $0x90] sm:$0xff] %v608
  %641 = vst [vmem:[#allocation5 + $0x98] sm:$0xff] %v609
  %642 = vst [vmem:[#allocation5 + $0xa0] sm:$0xff] %v610
  %643 = vst [vmem:[#allocation5 + $0xa8] sm:$0xff] %v611
  %644 = vst [vmem:[#allocation5 + $0xb0] sm:$0xff] %v612
  %645 = vst [vmem:[#allocation5 + $0xb8] sm:$0xff] %v613
  %646 = vst [vmem:[#allocation5 + $0xc0] sm:$0xff] %v614
  %647 = vst [vmem:[#allocation5 + $0xc8] sm:$0xff] %v615
  %648 = vst [vmem:[#allocation5 + $0xd0] sm:$0xff] %v616
  %649 = vst [vmem:[#allocation5 + $0xd8] sm:$0xff] %v617
  %650 = vst [vmem:[#allocation5 + $0xe0] sm:$0xff] %v618
  %651 = vst [vmem:[#allocation5 + $0xe8] sm:$0xff] %v619
  %652 = vst [vmem:[#allocation5 + $0xf0] sm:$0xff] %v620
  %653 = vst [vmem:[#allocation5 + $0xf8] sm:$0xff] %v621
  %v654 = vld [vmem:[#allocation2] sm:$0xff]
  %v655 = vld [vmem:[#allocation2 + $0x8] sm:$0xff]
  %v656 = vld [vmem:[#allocation3] sm:$0xff]
  %v657 = vld [vmem:[#allocation3 + $0x8] sm:$0xff]
  %v658 = vld [vmem:[#allocation5] sm:$0xff]
  %v659 = vld [vmem:[#allocation5 + $0x8] sm:$0xff]
  %v660 = vld [vmem:[#allocation5 + $0x10] sm:$0xff]
  %v661 = vld [vmem:[#allocation5 + $0x18] sm:$0xff]
  %v662 = vunpack.c.l.bf16 %v658
  %v663 = vunpack.c.h.bf16 %v658
  %v664 = vunpack.c.l.bf16 %v659
  %v665 = vunpack.c.h.bf16 %v659
  %v666 = vunpack.c.l.bf16 %v660
  %v667 = vunpack.c.h.bf16 %v660
  %v668 = vunpack.c.l.bf16 %v661
  %v669 = vunpack.c.h.bf16 %v661
  %v670 = vpack.c.bf16 %v655, %v654
  %v703 = vunpack.c.l.b16 %v64
  %v704 = vunpack.c.h.b16 %v64
  %v705 = vunpack.c.l.b16 %v65
  %v706 = vunpack.c.h.b16 %v65
  %v707 = vunpack.c.l.b16 %v66
  %v708 = vunpack.c.h.b16 %v66
  %v709 = vunpack.c.l.b16 %v67
  %v710 = vunpack.c.h.b16 %v67
  %v711 = vunpack.c.l.b16 %v68
  %v712 = vunpack.c.h.b16 %v68
  %v713 = vunpack.c.l.b16 %v69
  %v714 = vunpack.c.h.b16 %v69
  %v715 = vunpack.c.l.b16 %v70
  %v716 = vunpack.c.h.b16 %v70
  %v717 = vunpack.c.l.b16 %v71
  %v718 = vunpack.c.h.b16 %v71
  %v719 = vunpack.c.l.b16 %v72
  %v720 = vunpack.c.h.b16 %v72
  %v721 = vunpack.c.l.b16 %v73
  %v722 = vunpack.c.h.b16 %v73
  %v723 = vunpack.c.l.b16 %v74
  %v724 = vunpack.c.h.b16 %v74
  %v725 = vunpack.c.l.b16 %v75
  %v726 = vunpack.c.h.b16 %v75
  %v727 = vunpack.c.l.b16 %v76
  %v728 = vunpack.c.h.b16 %v76
  %v729 = vunpack.c.l.b16 %v77
  %v730 = vunpack.c.h.b16 %v77
  %v731 = vunpack.c.l.b16 %v78
  %v732 = vunpack.c.h.b16 %v78
  %v733 = vunpack.c.l.b16 %v79
  %v734 = vunpack.c.h.b16 %v79
  %v735 = vunpack.c.l.b16 %v80
  %v736 = vunpack.c.h.b16 %v80
  %v737 = vunpack.c.l.b16 %v81
  %v738 = vunpack.c.h.b16 %v81
  %v739 = vunpack.c.l.b16 %v82
  %v740 = vunpack.c.h.b16 %v82
  %v741 = vunpack.c.l.b16 %v83
  %v742 = vunpack.c.h.b16 %v83
  %v743 = vunpack.c.l.b16 %v84
  %v744 = vunpack.c.h.b16 %v84
  %v745 = vunpack.c.l.b16 %v85
  %v746 = vunpack.c.h.b16 %v85
  %v747 = vunpack.c.l.b16 %v86
  %v748 = vunpack.c.h.b16 %v86
  %v749 = vunpack.c.l.b16 %v87
  %v750 = vunpack.c.h.b16 %v87
  %v751 = vunpack.c.l.b16 %v88
  %v752 = vunpack.c.h.b16 %v88
  %v753 = vunpack.c.l.b16 %v89
  %v754 = vunpack.c.h.b16 %v89
  %v755 = vunpack.c.l.b16 %v90
  %v756 = vunpack.c.h.b16 %v90
  %v757 = vunpack.c.l.b16 %v91
  %v758 = vunpack.c.h.b16 %v91
  %v759 = vunpack.c.l.b16 %v92
  %v760 = vunpack.c.h.b16 %v92
  %v761 = vunpack.c.l.b16 %v93
  %v762 = vunpack.c.h.b16 %v93
  %v763 = vunpack.c.l.b16 %v94
  %v764 = vunpack.c.h.b16 %v94
  %v765 = vunpack.c.l.b16 %v95
  %v766 = vunpack.c.h.b16 %v95
  %v767 = vpack.c.b16 %v707, %v703
  %v768 = vpack.c.b16 %v708, %v704
  %v769 = vpack.c.b16 %v709, %v705
  %v770 = vpack.c.b16 %v710, %v706
  %v771 = vpack.c.b16 %v715, %v711
  %v772 = vpack.c.b16 %v716, %v712
  %v773 = vpack.c.b16 %v717, %v713
  %v774 = vpack.c.b16 %v718, %v714
  %v775 = vpack.c.b16 %v723, %v719
  %v776 = vpack.c.b16 %v724, %v720
  %v777 = vpack.c.b16 %v725, %v721
  %v778 = vpack.c.b16 %v726, %v722
  %v779 = vpack.c.b16 %v731, %v727
  %v780 = vpack.c.b16 %v732, %v728
  %v781 = vpack.c.b16 %v733, %v729
  %v782 = vpack.c.b16 %v734, %v730
  %v783 = vpack.c.b16 %v739, %v735
  %v784 = vpack.c.b16 %v740, %v736
  %v785 = vpack.c.b16 %v741, %v737
  %v786 = vpack.c.b16 %v742, %v738
  %v787 = vpack.c.b16 %v747, %v743
  %v788 = vpack.c.b16 %v748, %v744
  %v789 = vpack.c.b16 %v749, %v745
  %v790 = vpack.c.b16 %v750, %v746
  %v791 = vpack.c.b16 %v755, %v751
  %v792 = vpack.c.b16 %v756, %v752
  %v793 = vpack.c.b16 %v757, %v753
  %v794 = vpack.c.b16 %v758, %v754
  %v795 = vpack.c.b16 %v763, %v759
  %v796 = vpack.c.b16 %v764, %v760
  %v797 = vpack.c.b16 %v765, %v761
  %v798 = vpack.c.b16 %v766, %v762
  %831 = vmatpush.bf16.msra.mxu0 %v795
  %832 = vmatpush.bf16.msra.mxu0 %v791
  %833 = vmatpush.bf16.msra.mxu0 %v787
  %834 = vmatpush.bf16.msra.mxu0 %v783
  %835 = vmatpush.bf16.msra.mxu0 %v779
  %836 = vmatpush.bf16.msra.mxu0 %v775
  %837 = vmatpush.bf16.msra.mxu0 %v771
  %838 = vmatpush.bf16.msra.mxu0 %v767
  %839 = vmatmul.bf16.gmra.mxu0 %v670
  %v840 = vpop.f32.mrf.mxu0
  %v841 = vadd.f32 0.0, %v840
  %v842 = vpop.f32.mrf.mxu0
  %v843 = vadd.f32 0.0, %v842
  %844 = vdwg.mxu0
  %845 = vmatpush.bf16.msra.mxu0 %v796
  %846 = vmatpush.bf16.msra.mxu0 %v792
  %847 = vmatpush.bf16.msra.mxu0 %v788
  %848 = vmatpush.bf16.msra.mxu0 %v784
  %849 = vmatpush.bf16.msra.mxu0 %v780
  %850 = vmatpush.bf16.msra.mxu0 %v776
  %851 = vmatpush.bf16.msra.mxu0 %v772
  %852 = vmatpush.bf16.msra.mxu0 %v768
  %853 = vmatmul.bf16.gmra.mxu0 %v670
  %v854 = vpop.f32.mrf.mxu0
  %v855 = vadd.f32 0.0, %v854
  %v856 = vpop.f32.mrf.mxu0
  %v857 = vadd.f32 0.0, %v856
  %858 = vdwg.mxu0
  %859 = vmatpush.bf16.msra.mxu0 %v797
  %860 = vmatpush.bf16.msra.mxu0 %v793
  %861 = vmatpush.bf16.msra.mxu0 %v789
  %862 = vmatpush.bf16.msra.mxu0 %v785
  %863 = vmatpush.bf16.msra.mxu0 %v781
  %864 = vmatpush.bf16.msra.mxu0 %v777
  %865 = vmatpush.bf16.msra.mxu0 %v773
  %866 = vmatpush.bf16.msra.mxu0 %v769
  %867 = vmatmul.bf16.gmra.mxu0 %v670
  %v868 = vpop.f32.mrf.mxu0
  %v869 = vadd.f32 0.0, %v868
  %v870 = vpop.f32.mrf.mxu0
  %v871 = vadd.f32 0.0, %v870
  %872 = vdwg.mxu0
  %873 = vmatpush.bf16.msra.mxu0 %v798
  %874 = vmatpush.bf16.msra.mxu0 %v794
  %875 = vmatpush.bf16.msra.mxu0 %v790
  %876 = vmatpush.bf16.msra.mxu0 %v786
  %877 = vmatpush.bf16.msra.mxu0 %v782
  %878 = vmatpush.bf16.msra.mxu0 %v778
  %879 = vmatpush.bf16.msra.mxu0 %v774
  %880 = vmatpush.bf16.msra.mxu0 %v770
  %881 = vmatmul.bf16.gmra.mxu0 %v670
  %v882 = vpop.f32.mrf.mxu0
  %v883 = vadd.f32 0.0, %v882
  %v884 = vpop.f32.mrf.mxu0
  %v885 = vadd.f32 0.0, %v884
  %886 = vdwg.mxu0
  %v887 = vadd.f32 %v662, %v841
  %v888 = vadd.f32 %v663, %v855
  %v889 = vadd.f32 %v664, %v869
  %v890 = vadd.f32 %v665, %v883
  %v891 = vadd.f32 %v666, %v843
  %v892 = vadd.f32 %v667, %v857
  %v893 = vadd.f32 %v668, %v871
  %v894 = vadd.f32 %v669, %v885
  %v895 = vxor.u32 %v887, 2147483648
  %v896 = vxor.u32 %v891, 2147483648
  %v897 = vmul.f32 %v895, 1.442695
  %v898 = vpow.pop %v897
  %v899 = vmul.f32 %v896, 1.442695
  %v900 = vpow.pop %v899
  %v901 = vadd.f32 %v898, 1.0
  %v902 = vadd.f32 %v900, 1.0
  %v903 = vrcp.pop %v901
  %v904 = vmul.f32 %v901, %v903
  %v905 = vsub.f32 1.0, %v904
  %v906 = vmul.f32 %v903, %v905
  %v907 = vadd.f32 %v903, %v906
  %vm908 = vweird.f32 %v901
  %vm909 = vweird.f32 %v903
  %vm910 = vmor %vm908, %vm909
  %v911 = vsel %vm910, %v903, %v907
  %v912 = vand.u32 2147483647, %v901
  %vm913 = vcmp.eq.f32.partialorder %v912, 8.507059e+37
  %v914 = vand.u32 %v901, 2147483648
  %v915 = vor.u32 1.1754944e-38, %v914
  %v916 = vsel %vm913, %v915, %v911
  %v917 = vmul.f32 1.0, %v916
  %v918 = vrcp.pop %v902
  %v919 = vmul.f32 %v902, %v918
  %v920 = vsub.f32 1.0, %v919
  %v921 = vmul.f32 %v918, %v920
  %v922 = vadd.f32 %v918, %v921
  %vm923 = vweird.f32 %v902
  %vm924 = vweird.f32 %v918
  %vm925 = vmor %vm923, %vm924
  %v926 = vsel %vm925, %v918, %v922
  %v927 = vand.u32 2147483647, %v902
  %vm928 = vcmp.eq.f32.partialorder %v927, 8.507059e+37
  %v929 = vand.u32 %v902, 2147483648
  %v930 = vor.u32 1.1754944e-38, %v929
  %v931 = vsel %vm928, %v930, %v926
  %v932 = vmul.f32 1.0, %v931
  %v933 = vxor.u32 %v888, 2147483648
  %v934 = vxor.u32 %v892, 2147483648
  %v935 = vmul.f32 %v933, 1.442695
  %v936 = vpow.pop %v935
  %v937 = vmul.f32 %v934, 1.442695
  %v938 = vpow.pop %v937
  %v939 = vadd.f32 %v936, 1.0
  %v940 = vadd.f32 %v938, 1.0
  %v941 = vrcp.pop %v939
  %v942 = vmul.f32 %v939, %v941
  %v943 = vsub.f32 1.0, %v942
  %v944 = vmul.f32 %v941, %v943
  %v945 = vadd.f32 %v941, %v944
  %vm946 = vweird.f32 %v939
  %vm947 = vweird.f32 %v941
  %vm948 = vmor %vm946, %vm947
  %v949 = vsel %vm948, %v941, %v945
  %v950 = vand.u32 2147483647, %v939
  %vm951 = vcmp.eq.f32.partialorder %v950, 8.507059e+37
  %v952 = vand.u32 %v939, 2147483648
  %v953 = vor.u32 1.1754944e-38, %v952
  %v954 = vsel %vm951, %v953, %v949
  %v955 = vmul.f32 1.0, %v954
  %v956 = vrcp.pop %v940
  %v957 = vmul.f32 %v940, %v956
  %v958 = vsub.f32 1.0, %v957
  %v959 = vmul.f32 %v956, %v958
  %v960 = vadd.f32 %v956, %v959
  %vm961 = vweird.f32 %v940
  %vm962 = vweird.f32 %v956
  %vm963 = vmor %vm961, %vm962
  %v964 = vsel %vm963, %v956, %v960
  %v965 = vand.u32 2147483647, %v940
  %vm966 = vcmp.eq.f32.partialorder %v965, 8.507059e+37
  %v967 = vand.u32 %v940, 2147483648
  %v968 = vor.u32 1.1754944e-38, %v967
  %v969 = vsel %vm966, %v968, %v964
  %v970 = vmul.f32 1.0, %v969
  %v971 = vtanh.pop %v889
  %v972 = vtanh.pop %v893
  %v973 = vxor.u32 %v890, 2147483648
  %v974 = vxor.u32 %v894, 2147483648
  %v975 = vmul.f32 %v973, 1.442695
  %v976 = vpow.pop %v975
  %v977 = vmul.f32 %v974, 1.442695
  %v978 = vpow.pop %v977
  %v979 = vadd.f32 %v976, 1.0
  %v980 = vadd.f32 %v978, 1.0
  %v981 = vrcp.pop %v979
  %v982 = vmul.f32 %v979, %v981
  %v983 = vsub.f32 1.0, %v982
  %v984 = vmul.f32 %v981, %v983
  %v985 = vadd.f32 %v981, %v984
  %vm986 = vweird.f32 %v979
  %vm987 = vweird.f32 %v981
  %vm988 = vmor %vm986, %vm987
  %v989 = vsel %vm988, %v981, %v985
  %v990 = vand.u32 2147483647, %v979
  %vm991 = vcmp.eq.f32.partialorder %v990, 8.507059e+37
  %v992 = vand.u32 %v979, 2147483648
  %v993 = vor.u32 1.1754944e-38, %v992
  %v994 = vsel %vm991, %v993, %v989
  %v995 = vmul.f32 1.0, %v994
  %v996 = vrcp.pop %v980
  %v997 = vmul.f32 %v980, %v996
  %v998 = vsub.f32 1.0, %v997
  %v999 = vmul.f32 %v996, %v998
  %v1000 = vadd.f32 %v996, %v999
  %vm1001 = vweird.f32 %v980
  %vm1002 = vweird.f32 %v996
  %vm1003 = vmor %vm1001, %vm1002
  %v1004 = vsel %vm1003, %v996, %v1000
  %v1005 = vand.u32 2147483647, %v980
  %vm1006 = vcmp.eq.f32.partialorder %v1005, 8.507059e+37
  %v1007 = vand.u32 %v980, 2147483648
  %v1008 = vor.u32 1.1754944e-38, %v1007
  %v1009 = vsel %vm1006, %v1008, %v1004
  %v1010 = vmul.f32 1.0, %v1009
  %v1011 = vmul.f32 %v955, %v656
  %v1012 = vmul.f32 %v970, %v657
  %v1013 = vmul.f32 %v917, %v971
  %v1014 = vmul.f32 %v932, %v972
  %v1015 = vadd.f32 %v1011, %v1013
  %v1016 = vadd.f32 %v1012, %v1014
  %v1017 = vtanh.pop %v1015
  %v1018 = vtanh.pop %v1016
  %v1019 = vmul.f32 %v995, %v1017
  %v1020 = vmul.f32 %v1010, %v1018
  %v1021 = vpack.c.bf16 %v1019, %v1019
  %v1022 = vpack.c.bf16 %v1020, %v1020
  %1023 = vst [vmem:[#allocation4] sm:$0xf] %v1021
  %1024 = vst [vmem:[#allocation4 + $0x4] sm:$0xf] %v1022
  %s1025 = scalar_lea.vmem [#allocation5], 32
  %v1026 = vld [vmem:[%s1025] sm:$0xff]
  %v1027 = vld [vmem:[%s1025 + $0x8] sm:$0xff]
  %v1028 = vld [vmem:[%s1025 + $0x10] sm:$0xff]
  %v1029 = vld [vmem:[%s1025 + $0x18] sm:$0xff]
  %v1030 = vunpack.c.l.bf16 %v1026
  %v1031 = vunpack.c.h.bf16 %v1026
  %v1032 = vunpack.c.l.bf16 %v1027
  %v1033 = vunpack.c.h.bf16 %v1027
  %v1034 = vunpack.c.l.bf16 %v1028
  %v1035 = vunpack.c.h.bf16 %v1028
  %v1036 = vunpack.c.l.bf16 %v1029
  %v1037 = vunpack.c.h.bf16 %v1029
  %v1040 = vunpack.c.l.b16 %v1021
  %v1041 = vunpack.c.l.b16 %v1022
  %v1042 = vpack.c.b16 %v1041, %v1040
  %1044 = vmatpush.bf16.msra.mxu0 %v795
  %1045 = vmatpush.bf16.msra.mxu0 %v791
  %1046 = vmatpush.bf16.msra.mxu0 %v787
  %1047 = vmatpush.bf16.msra.mxu0 %v783
  %1048 = vmatpush.bf16.msra.mxu0 %v779
  %1049 = vmatpush.bf16.msra.mxu0 %v775
  %1050 = vmatpush.bf16.msra.mxu0 %v771
  %1051 = vmatpush.bf16.msra.mxu0 %v767
  %1052 = vmatmul.bf16.gmra.mxu0 %v1042
  %v1053 = vpop.f32.mrf.mxu0
  %v1054 = vadd.f32 0.0, %v1053
  %v1055 = vpop.f32.mrf.mxu0
  %v1056 = vadd.f32 0.0, %v1055
  %1057 = vdwg.mxu0
  %1058 = vmatpush.bf16.msra.mxu0 %v796
  %1059 = vmatpush.bf16.msra.mxu0 %v792
  %1060 = vmatpush.bf16.msra.mxu0 %v788
  %1061 = vmatpush.bf16.msra.mxu0 %v784
  %1062 = vmatpush.bf16.msra.mxu0 %v780
  %1063 = vmatpush.bf16.msra.mxu0 %v776
  %1064 = vmatpush.bf16.msra.mxu0 %v772
  %1065 = vmatpush.bf16.msra.mxu0 %v768
  %1066 = vmatmul.bf16.gmra.mxu0 %v1042
  %v1067 = vpop.f32.mrf.mxu0
  %v1068 = vadd.f32 0.0, %v1067
  %v1069 = vpop.f32.mrf.mxu0
  %v1070 = vadd.f32 0.0, %v1069
  %1071 = vdwg.mxu0
  %1072 = vmatpush.bf16.msra.mxu0 %v797
  %1073 = vmatpush.bf16.msra.mxu0 %v793
  %1074 = vmatpush.bf16.msra.mxu0 %v789
  %1075 = vmatpush.bf16.msra.mxu0 %v785
  %1076 = vmatpush.bf16.msra.mxu0 %v781
  %1077 = vmatpush.bf16.msra.mxu0 %v777
  %1078 = vmatpush.bf16.msra.mxu0 %v773
  %1079 = vmatpush.bf16.msra.mxu0 %v769
  %1080 = vmatmul.bf16.gmra.mxu0 %v1042
  %v1081 = vpop.f32.mrf.mxu0
  %v1082 = vadd.f32 0.0, %v1081
  %v1083 = vpop.f32.mrf.mxu0
  %v1084 = vadd.f32 0.0, %v1083
  %1085 = vdwg.mxu0
  %1086 = vmatpush.bf16.msra.mxu0 %v798
  %1087 = vmatpush.bf16.msra.mxu0 %v794
  %1088 = vmatpush.bf16.msra.mxu0 %v790
  %1089 = vmatpush.bf16.msra.mxu0 %v786
  %1090 = vmatpush.bf16.msra.mxu0 %v782
  %1091 = vmatpush.bf16.msra.mxu0 %v778
  %1092 = vmatpush.bf16.msra.mxu0 %v774
  %1093 = vmatpush.bf16.msra.mxu0 %v770
  %1094 = vmatmul.bf16.gmra.mxu0 %v1042
  %v1095 = vpop.f32.mrf.mxu0
  %v1096 = vadd.f32 0.0, %v1095
  %v1097 = vpop.f32.mrf.mxu0
  %v1098 = vadd.f32 0.0, %v1097
  %1099 = vdwg.mxu0
  %v1100 = vadd.f32 %v1030, %v1054
  %v1101 = vadd.f32 %v1031, %v1068
  %v1102 = vadd.f32 %v1032, %v1082
  %v1103 = vadd.f32 %v1033, %v1096
  %v1104 = vadd.f32 %v1034, %v1056
  %v1105 = vadd.f32 %v1035, %v1070
  %v1106 = vadd.f32 %v1036, %v1084
  %v1107 = vadd.f32 %v1037, %v1098
  %v1108 = vxor.u32 %v1100, 2147483648
  %v1109 = vxor.u32 %v1104, 2147483648
  %v1110 = vmul.f32 %v1108, 1.442695
  %v1111 = vpow.pop %v1110
  %v1112 = vmul.f32 %v1109, 1.442695
  %v1113 = vpow.pop %v1112
  %v1114 = vadd.f32 %v1111, 1.0
  %v1115 = vadd.f32 %v1113, 1.0
  %v1116 = vrcp.pop %v1114
  %v1117 = vmul.f32 %v1114, %v1116
  %v1118 = vsub.f32 1.0, %v1117
  %v1119 = vmul.f32 %v1116, %v1118
  %v1120 = vadd.f32 %v1116, %v1119
  %vm1121 = vweird.f32 %v1114
  %vm1122 = vweird.f32 %v1116
  %vm1123 = vmor %vm1121, %vm1122
  %v1124 = vsel %vm1123, %v1116, %v1120
  %v1125 = vand.u32 2147483647, %v1114
  %vm1126 = vcmp.eq.f32.partialorder %v1125, 8.507059e+37
  %v1127 = vand.u32 %v1114, 2147483648
  %v1128 = vor.u32 1.1754944e-38, %v1127
  %v1129 = vsel %vm1126, %v1128, %v1124
  %v1130 = vmul.f32 1.0, %v1129
  %v1131 = vrcp.pop %v1115
  %v1132 = vmul.f32 %v1115, %v1131
  %v1133 = vsub.f32 1.0, %v1132
  %v1134 = vmul.f32 %v1131, %v1133
  %v1135 = vadd.f32 %v1131, %v1134
  %vm1136 = vweird.f32 %v1115
  %vm1137 = vweird.f32 %v1131
  %vm1138 = vmor %vm1136, %vm1137
  %v1139 = vsel %vm1138, %v1131, %v1135
  %v1140 = vand.u32 2147483647, %v1115
  %vm1141 = vcmp.eq.f32.partialorder %v1140, 8.507059e+37
  %v1142 = vand.u32 %v1115, 2147483648
  %v1143 = vor.u32 1.1754944e-38, %v1142
  %v1144 = vsel %vm1141, %v1143, %v1139
  %v1145 = vmul.f32 1.0, %v1144
  %v1146 = vxor.u32 %v1101, 2147483648
  %v1147 = vxor.u32 %v1105, 2147483648
  %v1148 = vmul.f32 %v1146, 1.442695
  %v1149 = vpow.pop %v1148
  %v1150 = vmul.f32 %v1147, 1.442695
  %v1151 = vpow.pop %v1150
  %v1152 = vadd.f32 %v1149, 1.0
  %v1153 = vadd.f32 %v1151, 1.0
  %v1154 = vrcp.pop %v1152
  %v1155 = vmul.f32 %v1152, %v1154
  %v1156 = vsub.f32 1.0, %v1155
  %v1157 = vmul.f32 %v1154, %v1156
  %v1158 = vadd.f32 %v1154, %v1157
  %vm1159 = vweird.f32 %v1152
  %vm1160 = vweird.f32 %v1154
  %vm1161 = vmor %vm1159, %vm1160
  %v1162 = vsel %vm1161, %v1154, %v1158
  %v1163 = vand.u32 2147483647, %v1152
  %vm1164 = vcmp.eq.f32.partialorder %v1163, 8.507059e+37
  %v1165 = vand.u32 %v1152, 2147483648
  %v1166 = vor.u32 1.1754944e-38, %v1165
  %v1167 = vsel %vm1164, %v1166, %v1162
  %v1168 = vmul.f32 1.0, %v1167
  %v1169 = vrcp.pop %v1153
  %v1170 = vmul.f32 %v1153, %v1169
  %v1171 = vsub.f32 1.0, %v1170
  %v1172 = vmul.f32 %v1169, %v1171
  %v1173 = vadd.f32 %v1169, %v1172
  %vm1174 = vweird.f32 %v1153
  %vm1175 = vweird.f32 %v1169
  %vm1176 = vmor %vm1174, %vm1175
  %v1177 = vsel %vm1176, %v1169, %v1173
  %v1178 = vand.u32 2147483647, %v1153
  %vm1179 = vcmp.eq.f32.partialorder %v1178, 8.507059e+37
  %v1180 = vand.u32 %v1153, 2147483648
  %v1181 = vor.u32 1.1754944e-38, %v1180
  %v1182 = vsel %vm1179, %v1181, %v1177
  %v1183 = vmul.f32 1.0, %v1182
  %v1184 = vtanh.pop %v1102
  %v1185 = vtanh.pop %v1106
  %v1186 = vxor.u32 %v1103, 2147483648
  %v1187 = vxor.u32 %v1107, 2147483648
  %v1188 = vmul.f32 %v1186, 1.442695
  %v1189 = vpow.pop %v1188
  %v1190 = vmul.f32 %v1187, 1.442695
  %v1191 = vpow.pop %v1190
  %v1192 = vadd.f32 %v1189, 1.0
  %v1193 = vadd.f32 %v1191, 1.0
  %v1194 = vrcp.pop %v1192
  %v1195 = vmul.f32 %v1192, %v1194
  %v1196 = vsub.f32 1.0, %v1195
  %v1197 = vmul.f32 %v1194, %v1196
  %v1198 = vadd.f32 %v1194, %v1197
  %vm1199 = vweird.f32 %v1192
  %vm1200 = vweird.f32 %v1194
  %vm1201 = vmor %vm1199, %vm1200
  %v1202 = vsel %vm1201, %v1194, %v1198
  %v1203 = vand.u32 2147483647, %v1192
  %vm1204 = vcmp.eq.f32.partialorder %v1203, 8.507059e+37
  %v1205 = vand.u32 %v1192, 2147483648
  %v1206 = vor.u32 1.1754944e-38, %v1205
  %v1207 = vsel %vm1204, %v1206, %v1202
  %v1208 = vmul.f32 1.0, %v1207
  %v1209 = vrcp.pop %v1193
  %v1210 = vmul.f32 %v1193, %v1209
  %v1211 = vsub.f32 1.0, %v1210
  %v1212 = vmul.f32 %v1209, %v1211
  %v1213 = vadd.f32 %v1209, %v1212
  %vm1214 = vweird.f32 %v1193
  %vm1215 = vweird.f32 %v1209
  %vm1216 = vmor %vm1214, %vm1215
  %v1217 = vsel %vm1216, %v1209, %v1213
  %v1218 = vand.u32 2147483647, %v1193
  %vm1219 = vcmp.eq.f32.partialorder %v1218, 8.507059e+37
  %v1220 = vand.u32 %v1193, 2147483648
  %v1221 = vor.u32 1.1754944e-38, %v1220
  %v1222 = vsel %vm1219, %v1221, %v1217
  %v1223 = vmul.f32 1.0, %v1222
  %v1224 = vmul.f32 %v1168, %v1015
  %v1225 = vmul.f32 %v1183, %v1016
  %v1226 = vmul.f32 %v1130, %v1184
  %v1227 = vmul.f32 %v1145, %v1185
  %v1228 = vadd.f32 %v1224, %v1226
  %v1229 = vadd.f32 %v1225, %v1227
  %v1230 = vtanh.pop %v1228
  %v1231 = vtanh.pop %v1229
  %v1232 = vmul.f32 %v1208, %v1230
  %v1233 = vmul.f32 %v1223, %v1231
  %v1234 = vpack.c.bf16 %v1232, %v1232
  %v1235 = vpack.c.bf16 %v1233, %v1233
  %s1236 = scalar_lea.vmem [#allocation4], 8
  %1237 = vst [vmem:[%s1236] sm:$0xf] %v1234
  %1238 = vst [vmem:[%s1236 + $0x4] sm:$0xf] %v1235
  %s1239 = scalar_lea.vmem [#allocation5], 64
  %v1240 = vld [vmem:[%s1239] sm:$0xff]
  %v1241 = vld [vmem:[%s1239 + $0x8] sm:$0xff]
  %v1242 = vld [vmem:[%s1239 + $0x10] sm:$0xff]
  %v1243 = vld [vmem:[%s1239 + $0x18] sm:$0xff]
  %v1244 = vunpack.c.l.bf16 %v1240
  %v1245 = vunpack.c.h.bf16 %v1240
  %v1246 = vunpack.c.l.bf16 %v1241
  %v1247 = vunpack.c.h.bf16 %v1241
  %v1248 = vunpack.c.l.bf16 %v1242
  %v1249 = vunpack.c.h.bf16 %v1242
  %v1250 = vunpack.c.l.bf16 %v1243
  %v1251 = vunpack.c.h.bf16 %v1243
  %v1254 = vunpack.c.l.b16 %v1234
  %v1255 = vunpack.c.l.b16 %v1235
  %v1256 = vpack.c.b16 %v1255, %v1254
  %1258 = vmatpush.bf16.msra.mxu0 %v795
  %1259 = vmatpush.bf16.msra.mxu0 %v791
  %1260 = vmatpush.bf16.msra.mxu0 %v787
  %1261 = vmatpush.bf16.msra.mxu0 %v783
  %1262 = vmatpush.bf16.msra.mxu0 %v779
  %1263 = vmatpush.bf16.msra.mxu0 %v775
  %1264 = vmatpush.bf16.msra.mxu0 %v771
  %1265 = vmatpush.bf16.msra.mxu0 %v767
  %1266 = vmatmul.bf16.gmra.mxu0 %v1256
  %v1267 = vpop.f32.mrf.mxu0
  %v1268 = vadd.f32 0.0, %v1267
  %v1269 = vpop.f32.mrf.mxu0
  %v1270 = vadd.f32 0.0, %v1269
  %1271 = vdwg.mxu0
  %1272 = vmatpush.bf16.msra.mxu0 %v796
  %1273 = vmatpush.bf16.msra.mxu0 %v792
  %1274 = vmatpush.bf16.msra.mxu0 %v788
  %1275 = vmatpush.bf16.msra.mxu0 %v784
  %1276 = vmatpush.bf16.msra.mxu0 %v780
  %1277 = vmatpush.bf16.msra.mxu0 %v776
  %1278 = vmatpush.bf16.msra.mxu0 %v772
  %1279 = vmatpush.bf16.msra.mxu0 %v768
  %1280 = vmatmul.bf16.gmra.mxu0 %v1256
  %v1281 = vpop.f32.mrf.mxu0
  %v1282 = vadd.f32 0.0, %v1281
  %v1283 = vpop.f32.mrf.mxu0
  %v1284 = vadd.f32 0.0, %v1283
  %1285 = vdwg.mxu0
  %1286 = vmatpush.bf16.msra.mxu0 %v797
  %1287 = vmatpush.bf16.msra.mxu0 %v793
  %1288 = vmatpush.bf16.msra.mxu0 %v789
  %1289 = vmatpush.bf16.msra.mxu0 %v785
  %1290 = vmatpush.bf16.msra.mxu0 %v781
  %1291 = vmatpush.bf16.msra.mxu0 %v777
  %1292 = vmatpush.bf16.msra.mxu0 %v773
  %1293 = vmatpush.bf16.msra.mxu0 %v769
  %1294 = vmatmul.bf16.gmra.mxu0 %v1256
  %v1295 = vpop.f32.mrf.mxu0
  %v1296 = vadd.f32 0.0, %v1295
  %v1297 = vpop.f32.mrf.mxu0
  %v1298 = vadd.f32 0.0, %v1297
  %1299 = vdwg.mxu0
  %1300 = vmatpush.bf16.msra.mxu0 %v798
  %1301 = vmatpush.bf16.msra.mxu0 %v794
  %1302 = vmatpush.bf16.msra.mxu0 %v790
  %1303 = vmatpush.bf16.msra.mxu0 %v786
  %1304 = vmatpush.bf16.msra.mxu0 %v782
  %1305 = vmatpush.bf16.msra.mxu0 %v778
  %1306 = vmatpush.bf16.msra.mxu0 %v774
  %1307 = vmatpush.bf16.msra.mxu0 %v770
  %1308 = vmatmul.bf16.gmra.mxu0 %v1256
  %v1309 = vpop.f32.mrf.mxu0
  %v1310 = vadd.f32 0.0, %v1309
  %v1311 = vpop.f32.mrf.mxu0
  %v1312 = vadd.f32 0.0, %v1311
  %1313 = vdwg.mxu0
  %v1314 = vadd.f32 %v1244, %v1268
  %v1315 = vadd.f32 %v1245, %v1282
  %v1316 = vadd.f32 %v1246, %v1296
  %v1317 = vadd.f32 %v1247, %v1310
  %v1318 = vadd.f32 %v1248, %v1270
  %v1319 = vadd.f32 %v1249, %v1284
  %v1320 = vadd.f32 %v1250, %v1298
  %v1321 = vadd.f32 %v1251, %v1312
  %v1322 = vxor.u32 %v1314, 2147483648
  %v1323 = vxor.u32 %v1318, 2147483648
  %v1324 = vmul.f32 %v1322, 1.442695
  %v1325 = vpow.pop %v1324
  %v1326 = vmul.f32 %v1323, 1.442695
  %v1327 = vpow.pop %v1326
  %v1328 = vadd.f32 %v1325, 1.0
  %v1329 = vadd.f32 %v1327, 1.0
  %v1330 = vrcp.pop %v1328
  %v1331 = vmul.f32 %v1328, %v1330
  %v1332 = vsub.f32 1.0, %v1331
  %v1333 = vmul.f32 %v1330, %v1332
  %v1334 = vadd.f32 %v1330, %v1333
  %vm1335 = vweird.f32 %v1328
  %vm1336 = vweird.f32 %v1330
  %vm1337 = vmor %vm1335, %vm1336
  %v1338 = vsel %vm1337, %v1330, %v1334
  %v1339 = vand.u32 2147483647, %v1328
  %vm1340 = vcmp.eq.f32.partialorder %v1339, 8.507059e+37
  %v1341 = vand.u32 %v1328, 2147483648
  %v1342 = vor.u32 1.1754944e-38, %v1341
  %v1343 = vsel %vm1340, %v1342, %v1338
  %v1344 = vmul.f32 1.0, %v1343
  %v1345 = vrcp.pop %v1329
  %v1346 = vmul.f32 %v1329, %v1345
  %v1347 = vsub.f32 1.0, %v1346
  %v1348 = vmul.f32 %v1345, %v1347
  %v1349 = vadd.f32 %v1345, %v1348
  %vm1350 = vweird.f32 %v1329
  %vm1351 = vweird.f32 %v1345
  %vm1352 = vmor %vm1350, %vm1351
  %v1353 = vsel %vm1352, %v1345, %v1349
  %v1354 = vand.u32 2147483647, %v1329
  %vm1355 = vcmp.eq.f32.partialorder %v1354, 8.507059e+37
  %v1356 = vand.u32 %v1329, 2147483648
  %v1357 = vor.u32 1.1754944e-38, %v1356
  %v1358 = vsel %vm1355, %v1357, %v1353
  %v1359 = vmul.f32 1.0, %v1358
  %v1360 = vxor.u32 %v1315, 2147483648
  %v1361 = vxor.u32 %v1319, 2147483648
  %v1362 = vmul.f32 %v1360, 1.442695
  %v1363 = vpow.pop %v1362
  %v1364 = vmul.f32 %v1361, 1.442695
  %v1365 = vpow.pop %v1364
  %v1366 = vadd.f32 %v1363, 1.0
  %v1367 = vadd.f32 %v1365, 1.0
  %v1368 = vrcp.pop %v1366
  %v1369 = vmul.f32 %v1366, %v1368
  %v1370 = vsub.f32 1.0, %v1369
  %v1371 = vmul.f32 %v1368, %v1370
  %v1372 = vadd.f32 %v1368, %v1371
  %vm1373 = vweird.f32 %v1366
  %vm1374 = vweird.f32 %v1368
  %vm1375 = vmor %vm1373, %vm1374
  %v1376 = vsel %vm1375, %v1368, %v1372
  %v1377 = vand.u32 2147483647, %v1366
  %vm1378 = vcmp.eq.f32.partialorder %v1377, 8.507059e+37
  %v1379 = vand.u32 %v1366, 2147483648
  %v1380 = vor.u32 1.1754944e-38, %v1379
  %v1381 = vsel %vm1378, %v1380, %v1376
  %v1382 = vmul.f32 1.0, %v1381
  %v1383 = vrcp.pop %v1367
  %v1384 = vmul.f32 %v1367, %v1383
  %v1385 = vsub.f32 1.0, %v1384
  %v1386 = vmul.f32 %v1383, %v1385
  %v1387 = vadd.f32 %v1383, %v1386
  %vm1388 = vweird.f32 %v1367
  %vm1389 = vweird.f32 %v1383
  %vm1390 = vmor %vm1388, %vm1389
  %v1391 = vsel %vm1390, %v1383, %v1387
  %v1392 = vand.u32 2147483647, %v1367
  %vm1393 = vcmp.eq.f32.partialorder %v1392, 8.507059e+37
  %v1394 = vand.u32 %v1367, 2147483648
  %v1395 = vor.u32 1.1754944e-38, %v1394
  %v1396 = vsel %vm1393, %v1395, %v1391
  %v1397 = vmul.f32 1.0, %v1396
  %v1398 = vtanh.pop %v1316
  %v1399 = vtanh.pop %v1320
  %v1400 = vxor.u32 %v1317, 2147483648
  %v1401 = vxor.u32 %v1321, 2147483648
  %v1402 = vmul.f32 %v1400, 1.442695
  %v1403 = vpow.pop %v1402
  %v1404 = vmul.f32 %v1401, 1.442695
  %v1405 = vpow.pop %v1404
  %v1406 = vadd.f32 %v1403, 1.0
  %v1407 = vadd.f32 %v1405, 1.0
  %v1408 = vrcp.pop %v1406
  %v1409 = vmul.f32 %v1406, %v1408
  %v1410 = vsub.f32 1.0, %v1409
  %v1411 = vmul.f32 %v1408, %v1410
  %v1412 = vadd.f32 %v1408, %v1411
  %vm1413 = vweird.f32 %v1406
  %vm1414 = vweird.f32 %v1408
  %vm1415 = vmor %vm1413, %vm1414
  %v1416 = vsel %vm1415, %v1408, %v1412
  %v1417 = vand.u32 2147483647, %v1406
  %vm1418 = vcmp.eq.f32.partialorder %v1417, 8.507059e+37
  %v1419 = vand.u32 %v1406, 2147483648
  %v1420 = vor.u32 1.1754944e-38, %v1419
  %v1421 = vsel %vm1418, %v1420, %v1416
  %v1422 = vmul.f32 1.0, %v1421
  %v1423 = vrcp.pop %v1407
  %v1424 = vmul.f32 %v1407, %v1423
  %v1425 = vsub.f32 1.0, %v1424
  %v1426 = vmul.f32 %v1423, %v1425
  %v1427 = vadd.f32 %v1423, %v1426
  %vm1428 = vweird.f32 %v1407
  %vm1429 = vweird.f32 %v1423
  %vm1430 = vmor %vm1428, %vm1429
  %v1431 = vsel %vm1430, %v1423, %v1427
  %v1432 = vand.u32 2147483647, %v1407
  %vm1433 = vcmp.eq.f32.partialorder %v1432, 8.507059e+37
  %v1434 = vand.u32 %v1407, 2147483648
  %v1435 = vor.u32 1.1754944e-38, %v1434
  %v1436 = vsel %vm1433, %v1435, %v1431
  %v1437 = vmul.f32 1.0, %v1436
  %v1438 = vmul.f32 %v1382, %v1228
  %v1439 = vmul.f32 %v1397, %v1229
  %v1440 = vmul.f32 %v1344, %v1398
  %v1441 = vmul.f32 %v1359, %v1399
  %v1442 = vadd.f32 %v1438, %v1440
  %v1443 = vadd.f32 %v1439, %v1441
  %v1444 = vtanh.pop %v1442
  %v1445 = vtanh.pop %v1443
  %v1446 = vmul.f32 %v1422, %v1444
  %v1447 = vmul.f32 %v1437, %v1445
  %v1448 = vpack.c.bf16 %v1446, %v1446
  %v1449 = vpack.c.bf16 %v1447, %v1447
  %s1450 = scalar_lea.vmem [#allocation4], 16
  %1451 = vst [vmem:[%s1450] sm:$0xf] %v1448
  %1452 = vst [vmem:[%s1450 + $0x4] sm:$0xf] %v1449
  %s1453 = scalar_lea.vmem [#allocation5], 96
  %v1454 = vld [vmem:[%s1453] sm:$0xff]
  %v1455 = vld [vmem:[%s1453 + $0x8] sm:$0xff]
  %v1456 = vld [vmem:[%s1453 + $0x10] sm:$0xff]
  %v1457 = vld [vmem:[%s1453 + $0x18] sm:$0xff]
  %v1458 = vunpack.c.l.bf16 %v1454
  %v1459 = vunpack.c.h.bf16 %v1454
  %v1460 = vunpack.c.l.bf16 %v1455
  %v1461 = vunpack.c.h.bf16 %v1455
  %v1462 = vunpack.c.l.bf16 %v1456
  %v1463 = vunpack.c.h.bf16 %v1456
  %v1464 = vunpack.c.l.bf16 %v1457
  %v1465 = vunpack.c.h.bf16 %v1457
  %v1468 = vunpack.c.l.b16 %v1448
  %v1469 = vunpack.c.l.b16 %v1449
  %v1470 = vpack.c.b16 %v1469, %v1468
  %1472 = vmatpush.bf16.msra.mxu0 %v795
  %1473 = vmatpush.bf16.msra.mxu0 %v791
  %1474 = vmatpush.bf16.msra.mxu0 %v787
  %1475 = vmatpush.bf16.msra.mxu0 %v783
  %1476 = vmatpush.bf16.msra.mxu0 %v779
  %1477 = vmatpush.bf16.msra.mxu0 %v775
  %1478 = vmatpush.bf16.msra.mxu0 %v771
  %1479 = vmatpush.bf16.msra.mxu0 %v767
  %1480 = vmatmul.bf16.gmra.mxu0 %v1470
  %v1481 = vpop.f32.mrf.mxu0
  %v1482 = vadd.f32 0.0, %v1481
  %v1483 = vpop.f32.mrf.mxu0
  %v1484 = vadd.f32 0.0, %v1483
  %1485 = vdwg.mxu0
  %1486 = vmatpush.bf16.msra.mxu0 %v796
  %1487 = vmatpush.bf16.msra.mxu0 %v792
  %1488 = vmatpush.bf16.msra.mxu0 %v788
  %1489 = vmatpush.bf16.msra.mxu0 %v784
  %1490 = vmatpush.bf16.msra.mxu0 %v780
  %1491 = vmatpush.bf16.msra.mxu0 %v776
  %1492 = vmatpush.bf16.msra.mxu0 %v772
  %1493 = vmatpush.bf16.msra.mxu0 %v768
  %1494 = vmatmul.bf16.gmra.mxu0 %v1470
  %v1495 = vpop.f32.mrf.mxu0
  %v1496 = vadd.f32 0.0, %v1495
  %v1497 = vpop.f32.mrf.mxu0
  %v1498 = vadd.f32 0.0, %v1497
  %1499 = vdwg.mxu0
  %1500 = vmatpush.bf16.msra.mxu0 %v797
  %1501 = vmatpush.bf16.msra.mxu0 %v793
  %1502 = vmatpush.bf16.msra.mxu0 %v789
  %1503 = vmatpush.bf16.msra.mxu0 %v785
  %1504 = vmatpush.bf16.msra.mxu0 %v781
  %1505 = vmatpush.bf16.msra.mxu0 %v777
  %1506 = vmatpush.bf16.msra.mxu0 %v773
  %1507 = vmatpush.bf16.msra.mxu0 %v769
  %1508 = vmatmul.bf16.gmra.mxu0 %v1470
  %v1509 = vpop.f32.mrf.mxu0
  %v1510 = vadd.f32 0.0, %v1509
  %v1511 = vpop.f32.mrf.mxu0
  %v1512 = vadd.f32 0.0, %v1511
  %1513 = vdwg.mxu0
  %1514 = vmatpush.bf16.msra.mxu0 %v798
  %1515 = vmatpush.bf16.msra.mxu0 %v794
  %1516 = vmatpush.bf16.msra.mxu0 %v790
  %1517 = vmatpush.bf16.msra.mxu0 %v786
  %1518 = vmatpush.bf16.msra.mxu0 %v782
  %1519 = vmatpush.bf16.msra.mxu0 %v778
  %1520 = vmatpush.bf16.msra.mxu0 %v774
  %1521 = vmatpush.bf16.msra.mxu0 %v770
  %1522 = vmatmul.bf16.gmra.mxu0 %v1470
  %v1523 = vpop.f32.mrf.mxu0
  %v1524 = vadd.f32 0.0, %v1523
  %v1525 = vpop.f32.mrf.mxu0
  %v1526 = vadd.f32 0.0, %v1525
  %1527 = vdwg.mxu0
  %v1528 = vadd.f32 %v1458, %v1482
  %v1529 = vadd.f32 %v1459, %v1496
  %v1530 = vadd.f32 %v1460, %v1510
  %v1531 = vadd.f32 %v1461, %v1524
  %v1532 = vadd.f32 %v1462, %v1484
  %v1533 = vadd.f32 %v1463, %v1498
  %v1534 = vadd.f32 %v1464, %v1512
  %v1535 = vadd.f32 %v1465, %v1526
  %v1536 = vxor.u32 %v1528, 2147483648
  %v1537 = vxor.u32 %v1532, 2147483648
  %v1538 = vmul.f32 %v1536, 1.442695
  %v1539 = vpow.pop %v1538
  %v1540 = vmul.f32 %v1537, 1.442695
  %v1541 = vpow.pop %v1540
  %v1542 = vadd.f32 %v1539, 1.0
  %v1543 = vadd.f32 %v1541, 1.0
  %v1544 = vrcp.pop %v1542
  %v1545 = vmul.f32 %v1542, %v1544
  %v1546 = vsub.f32 1.0, %v1545
  %v1547 = vmul.f32 %v1544, %v1546
  %v1548 = vadd.f32 %v1544, %v1547
  %vm1549 = vweird.f32 %v1542
  %vm1550 = vweird.f32 %v1544
  %vm1551 = vmor %vm1549, %vm1550
  %v1552 = vsel %vm1551, %v1544, %v1548
  %v1553 = vand.u32 2147483647, %v1542
  %vm1554 = vcmp.eq.f32.partialorder %v1553, 8.507059e+37
  %v1555 = vand.u32 %v1542, 2147483648
  %v1556 = vor.u32 1.1754944e-38, %v1555
  %v1557 = vsel %vm1554, %v1556, %v1552
  %v1558 = vmul.f32 1.0, %v1557
  %v1559 = vrcp.pop %v1543
  %v1560 = vmul.f32 %v1543, %v1559
  %v1561 = vsub.f32 1.0, %v1560
  %v1562 = vmul.f32 %v1559, %v1561
  %v1563 = vadd.f32 %v1559, %v1562
  %vm1564 = vweird.f32 %v1543
  %vm1565 = vweird.f32 %v1559
  %vm1566 = vmor %vm1564, %vm1565
  %v1567 = vsel %vm1566, %v1559, %v1563
  %v1568 = vand.u32 2147483647, %v1543
  %vm1569 = vcmp.eq.f32.partialorder %v1568, 8.507059e+37
  %v1570 = vand.u32 %v1543, 2147483648
  %v1571 = vor.u32 1.1754944e-38, %v1570
  %v1572 = vsel %vm1569, %v1571, %v1567
  %v1573 = vmul.f32 1.0, %v1572
  %v1574 = vxor.u32 %v1529, 2147483648
  %v1575 = vxor.u32 %v1533, 2147483648
  %v1576 = vmul.f32 %v1574, 1.442695
  %v1577 = vpow.pop %v1576
  %v1578 = vmul.f32 %v1575, 1.442695
  %v1579 = vpow.pop %v1578
  %v1580 = vadd.f32 %v1577, 1.0
  %v1581 = vadd.f32 %v1579, 1.0
  %v1582 = vrcp.pop %v1580
  %v1583 = vmul.f32 %v1580, %v1582
  %v1584 = vsub.f32 1.0, %v1583
  %v1585 = vmul.f32 %v1582, %v1584
  %v1586 = vadd.f32 %v1582, %v1585
  %vm1587 = vweird.f32 %v1580
  %vm1588 = vweird.f32 %v1582
  %vm1589 = vmor %vm1587, %vm1588
  %v1590 = vsel %vm1589, %v1582, %v1586
  %v1591 = vand.u32 2147483647, %v1580
  %vm1592 = vcmp.eq.f32.partialorder %v1591, 8.507059e+37
  %v1593 = vand.u32 %v1580, 2147483648
  %v1594 = vor.u32 1.1754944e-38, %v1593
  %v1595 = vsel %vm1592, %v1594, %v1590
  %v1596 = vmul.f32 1.0, %v1595
  %v1597 = vrcp.pop %v1581
  %v1598 = vmul.f32 %v1581, %v1597
  %v1599 = vsub.f32 1.0, %v1598
  %v1600 = vmul.f32 %v1597, %v1599
  %v1601 = vadd.f32 %v1597, %v1600
  %vm1602 = vweird.f32 %v1581
  %vm1603 = vweird.f32 %v1597
  %vm1604 = vmor %vm1602, %vm1603
  %v1605 = vsel %vm1604, %v1597, %v1601
  %v1606 = vand.u32 2147483647, %v1581
  %vm1607 = vcmp.eq.f32.partialorder %v1606, 8.507059e+37
  %v1608 = vand.u32 %v1581, 2147483648
  %v1609 = vor.u32 1.1754944e-38, %v1608
  %v1610 = vsel %vm1607, %v1609, %v1605
  %v1611 = vmul.f32 1.0, %v1610
  %v1612 = vtanh.pop %v1530
  %v1613 = vtanh.pop %v1534
  %v1614 = vxor.u32 %v1531, 2147483648
  %v1615 = vxor.u32 %v1535, 2147483648
  %v1616 = vmul.f32 %v1614, 1.442695
  %v1617 = vpow.pop %v1616
  %v1618 = vmul.f32 %v1615, 1.442695
  %v1619 = vpow.pop %v1618
  %v1620 = vadd.f32 %v1617, 1.0
  %v1621 = vadd.f32 %v1619, 1.0
  %v1622 = vrcp.pop %v1620
  %v1623 = vmul.f32 %v1620, %v1622
  %v1624 = vsub.f32 1.0, %v1623
  %v1625 = vmul.f32 %v1622, %v1624
  %v1626 = vadd.f32 %v1622, %v1625
  %vm1627 = vweird.f32 %v1620
  %vm1628 = vweird.f32 %v1622
  %vm1629 = vmor %vm1627, %vm1628
  %v1630 = vsel %vm1629, %v1622, %v1626
  %v1631 = vand.u32 2147483647, %v1620
  %vm1632 = vcmp.eq.f32.partialorder %v1631, 8.507059e+37
  %v1633 = vand.u32 %v1620, 2147483648
  %v1634 = vor.u32 1.1754944e-38, %v1633
  %v1635 = vsel %vm1632, %v1634, %v1630
  %v1636 = vmul.f32 1.0, %v1635
  %v1637 = vrcp.pop %v1621
  %v1638 = vmul.f32 %v1621, %v1637
  %v1639 = vsub.f32 1.0, %v1638
  %v1640 = vmul.f32 %v1637, %v1639
  %v1641 = vadd.f32 %v1637, %v1640
  %vm1642 = vweird.f32 %v1621
  %vm1643 = vweird.f32 %v1637
  %vm1644 = vmor %vm1642, %vm1643
  %v1645 = vsel %vm1644, %v1637, %v1641
  %v1646 = vand.u32 2147483647, %v1621
  %vm1647 = vcmp.eq.f32.partialorder %v1646, 8.507059e+37
  %v1648 = vand.u32 %v1621, 2147483648
  %v1649 = vor.u32 1.1754944e-38, %v1648
  %v1650 = vsel %vm1647, %v1649, %v1645
  %v1651 = vmul.f32 1.0, %v1650
  %v1652 = vmul.f32 %v1596, %v1442
  %v1653 = vmul.f32 %v1611, %v1443
  %v1654 = vmul.f32 %v1558, %v1612
  %v1655 = vmul.f32 %v1573, %v1613
  %v1656 = vadd.f32 %v1652, %v1654
  %v1657 = vadd.f32 %v1653, %v1655
  %v1658 = vtanh.pop %v1656
  %v1659 = vtanh.pop %v1657
  %v1660 = vmul.f32 %v1636, %v1658
  %v1661 = vmul.f32 %v1651, %v1659
  %v1662 = vpack.c.bf16 %v1660, %v1660
  %v1663 = vpack.c.bf16 %v1661, %v1661
  %s1664 = scalar_lea.vmem [#allocation4], 24
  %1665 = vst [vmem:[%s1664] sm:$0xf] %v1662
  %1666 = vst [vmem:[%s1664 + $0x4] sm:$0xf] %v1663
  %s1667 = scalar_lea.vmem [#allocation5], 128
  %v1668 = vld [vmem:[%s1667] sm:$0xff]
  %v1669 = vld [vmem:[%s1667 + $0x8] sm:$0xff]
  %v1670 = vld [vmem:[%s1667 + $0x10] sm:$0xff]
  %v1671 = vld [vmem:[%s1667 + $0x18] sm:$0xff]
  %v1672 = vunpack.c.l.bf16 %v1668
  %v1673 = vunpack.c.h.bf16 %v1668
  %v1674 = vunpack.c.l.bf16 %v1669
  %v1675 = vunpack.c.h.bf16 %v1669
  %v1676 = vunpack.c.l.bf16 %v1670
  %v1677 = vunpack.c.h.bf16 %v1670
  %v1678 = vunpack.c.l.bf16 %v1671
  %v1679 = vunpack.c.h.bf16 %v1671
  %v1682 = vunpack.c.l.b16 %v1662
  %v1683 = vunpack.c.l.b16 %v1663
  %v1684 = vpack.c.b16 %v1683, %v1682
  %1686 = vmatpush.bf16.msra.mxu0 %v795
  %1687 = vmatpush.bf16.msra.mxu0 %v791
  %1688 = vmatpush.bf16.msra.mxu0 %v787
  %1689 = vmatpush.bf16.msra.mxu0 %v783
  %1690 = vmatpush.bf16.msra.mxu0 %v779
  %1691 = vmatpush.bf16.msra.mxu0 %v775
  %1692 = vmatpush.bf16.msra.mxu0 %v771
  %1693 = vmatpush.bf16.msra.mxu0 %v767
  %1694 = vmatmul.bf16.gmra.mxu0 %v1684
  %v1695 = vpop.f32.mrf.mxu0
  %v1696 = vadd.f32 0.0, %v1695
  %v1697 = vpop.f32.mrf.mxu0
  %v1698 = vadd.f32 0.0, %v1697
  %1699 = vdwg.mxu0
  %1700 = vmatpush.bf16.msra.mxu0 %v796
  %1701 = vmatpush.bf16.msra.mxu0 %v792
  %1702 = vmatpush.bf16.msra.mxu0 %v788
  %1703 = vmatpush.bf16.msra.mxu0 %v784
  %1704 = vmatpush.bf16.msra.mxu0 %v780
  %1705 = vmatpush.bf16.msra.mxu0 %v776
  %1706 = vmatpush.bf16.msra.mxu0 %v772
  %1707 = vmatpush.bf16.msra.mxu0 %v768
  %1708 = vmatmul.bf16.gmra.mxu0 %v1684
  %v1709 = vpop.f32.mrf.mxu0
  %v1710 = vadd.f32 0.0, %v1709
  %v1711 = vpop.f32.mrf.mxu0
  %v1712 = vadd.f32 0.0, %v1711
  %1713 = vdwg.mxu0
  %1714 = vmatpush.bf16.msra.mxu0 %v797
  %1715 = vmatpush.bf16.msra.mxu0 %v793
  %1716 = vmatpush.bf16.msra.mxu0 %v789
  %1717 = vmatpush.bf16.msra.mxu0 %v785
  %1718 = vmatpush.bf16.msra.mxu0 %v781
  %1719 = vmatpush.bf16.msra.mxu0 %v777
  %1720 = vmatpush.bf16.msra.mxu0 %v773
  %1721 = vmatpush.bf16.msra.mxu0 %v769
  %1722 = vmatmul.bf16.gmra.mxu0 %v1684
  %v1723 = vpop.f32.mrf.mxu0
  %v1724 = vadd.f32 0.0, %v1723
  %v1725 = vpop.f32.mrf.mxu0
  %v1726 = vadd.f32 0.0, %v1725
  %1727 = vdwg.mxu0
  %1728 = vmatpush.bf16.msra.mxu0 %v798
  %1729 = vmatpush.bf16.msra.mxu0 %v794
  %1730 = vmatpush.bf16.msra.mxu0 %v790
  %1731 = vmatpush.bf16.msra.mxu0 %v786
  %1732 = vmatpush.bf16.msra.mxu0 %v782
  %1733 = vmatpush.bf16.msra.mxu0 %v778
  %1734 = vmatpush.bf16.msra.mxu0 %v774
  %1735 = vmatpush.bf16.msra.mxu0 %v770
  %1736 = vmatmul.bf16.gmra.mxu0 %v1684
  %v1737 = vpop.f32.mrf.mxu0
  %v1738 = vadd.f32 0.0, %v1737
  %v1739 = vpop.f32.mrf.mxu0
  %v1740 = vadd.f32 0.0, %v1739
  %1741 = vdwg.mxu0
  %v1742 = vadd.f32 %v1672, %v1696
  %v1743 = vadd.f32 %v1673, %v1710
  %v1744 = vadd.f32 %v1674, %v1724
  %v1745 = vadd.f32 %v1675, %v1738
  %v1746 = vadd.f32 %v1676, %v1698
  %v1747 = vadd.f32 %v1677, %v1712
  %v1748 = vadd.f32 %v1678, %v1726
  %v1749 = vadd.f32 %v1679, %v1740
  %v1750 = vxor.u32 %v1742, 2147483648
  %v1751 = vxor.u32 %v1746, 2147483648
  %v1752 = vmul.f32 %v1750, 1.442695
  %v1753 = vpow.pop %v1752
  %v1754 = vmul.f32 %v1751, 1.442695
  %v1755 = vpow.pop %v1754
  %v1756 = vadd.f32 %v1753, 1.0
  %v1757 = vadd.f32 %v1755, 1.0
  %v1758 = vrcp.pop %v1756
  %v1759 = vmul.f32 %v1756, %v1758
  %v1760 = vsub.f32 1.0, %v1759
  %v1761 = vmul.f32 %v1758, %v1760
  %v1762 = vadd.f32 %v1758, %v1761
  %vm1763 = vweird.f32 %v1756
  %vm1764 = vweird.f32 %v1758
  %vm1765 = vmor %vm1763, %vm1764
  %v1766 = vsel %vm1765, %v1758, %v1762
  %v1767 = vand.u32 2147483647, %v1756
  %vm1768 = vcmp.eq.f32.partialorder %v1767, 8.507059e+37
  %v1769 = vand.u32 %v1756, 2147483648
  %v1770 = vor.u32 1.1754944e-38, %v1769
  %v1771 = vsel %vm1768, %v1770, %v1766
  %v1772 = vmul.f32 1.0, %v1771
  %v1773 = vrcp.pop %v1757
  %v1774 = vmul.f32 %v1757, %v1773
  %v1775 = vsub.f32 1.0, %v1774
  %v1776 = vmul.f32 %v1773, %v1775
  %v1777 = vadd.f32 %v1773, %v1776
  %vm1778 = vweird.f32 %v1757
  %vm1779 = vweird.f32 %v1773
  %vm1780 = vmor %vm1778, %vm1779
  %v1781 = vsel %vm1780, %v1773, %v1777
  %v1782 = vand.u32 2147483647, %v1757
  %vm1783 = vcmp.eq.f32.partialorder %v1782, 8.507059e+37
  %v1784 = vand.u32 %v1757, 2147483648
  %v1785 = vor.u32 1.1754944e-38, %v1784
  %v1786 = vsel %vm1783, %v1785, %v1781
  %v1787 = vmul.f32 1.0, %v1786
  %v1788 = vxor.u32 %v1743, 2147483648
  %v1789 = vxor.u32 %v1747, 2147483648
  %v1790 = vmul.f32 %v1788, 1.442695
  %v1791 = vpow.pop %v1790
  %v1792 = vmul.f32 %v1789, 1.442695
  %v1793 = vpow.pop %v1792
  %v1794 = vadd.f32 %v1791, 1.0
  %v1795 = vadd.f32 %v1793, 1.0
  %v1796 = vrcp.pop %v1794
  %v1797 = vmul.f32 %v1794, %v1796
  %v1798 = vsub.f32 1.0, %v1797
  %v1799 = vmul.f32 %v1796, %v1798
  %v1800 = vadd.f32 %v1796, %v1799
  %vm1801 = vweird.f32 %v1794
  %vm1802 = vweird.f32 %v1796
  %vm1803 = vmor %vm1801, %vm1802
  %v1804 = vsel %vm1803, %v1796, %v1800
  %v1805 = vand.u32 2147483647, %v1794
  %vm1806 = vcmp.eq.f32.partialorder %v1805, 8.507059e+37
  %v1807 = vand.u32 %v1794, 2147483648
  %v1808 = vor.u32 1.1754944e-38, %v1807
  %v1809 = vsel %vm1806, %v1808, %v1804
  %v1810 = vmul.f32 1.0, %v1809
  %v1811 = vrcp.pop %v1795
  %v1812 = vmul.f32 %v1795, %v1811
  %v1813 = vsub.f32 1.0, %v1812
  %v1814 = vmul.f32 %v1811, %v1813
  %v1815 = vadd.f32 %v1811, %v1814
  %vm1816 = vweird.f32 %v1795
  %vm1817 = vweird.f32 %v1811
  %vm1818 = vmor %vm1816, %vm1817
  %v1819 = vsel %vm1818, %v1811, %v1815
  %v1820 = vand.u32 2147483647, %v1795
  %vm1821 = vcmp.eq.f32.partialorder %v1820, 8.507059e+37
  %v1822 = vand.u32 %v1795, 2147483648
  %v1823 = vor.u32 1.1754944e-38, %v1822
  %v1824 = vsel %vm1821, %v1823, %v1819
  %v1825 = vmul.f32 1.0, %v1824
  %v1826 = vtanh.pop %v1744
  %v1827 = vtanh.pop %v1748
  %v1828 = vxor.u32 %v1745, 2147483648
  %v1829 = vxor.u32 %v1749, 2147483648
  %v1830 = vmul.f32 %v1828, 1.442695
  %v1831 = vpow.pop %v1830
  %v1832 = vmul.f32 %v1829, 1.442695
  %v1833 = vpow.pop %v1832
  %v1834 = vadd.f32 %v1831, 1.0
  %v1835 = vadd.f32 %v1833, 1.0
  %v1836 = vrcp.pop %v1834
  %v1837 = vmul.f32 %v1834, %v1836
  %v1838 = vsub.f32 1.0, %v1837
  %v1839 = vmul.f32 %v1836, %v1838
  %v1840 = vadd.f32 %v1836, %v1839
  %vm1841 = vweird.f32 %v1834
  %vm1842 = vweird.f32 %v1836
  %vm1843 = vmor %vm1841, %vm1842
  %v1844 = vsel %vm1843, %v1836, %v1840
  %v1845 = vand.u32 2147483647, %v1834
  %vm1846 = vcmp.eq.f32.partialorder %v1845, 8.507059e+37
  %v1847 = vand.u32 %v1834, 2147483648
  %v1848 = vor.u32 1.1754944e-38, %v1847
  %v1849 = vsel %vm1846, %v1848, %v1844
  %v1850 = vmul.f32 1.0, %v1849
  %v1851 = vrcp.pop %v1835
  %v1852 = vmul.f32 %v1835, %v1851
  %v1853 = vsub.f32 1.0, %v1852
  %v1854 = vmul.f32 %v1851, %v1853
  %v1855 = vadd.f32 %v1851, %v1854
  %vm1856 = vweird.f32 %v1835
  %vm1857 = vweird.f32 %v1851
  %vm1858 = vmor %vm1856, %vm1857
  %v1859 = vsel %vm1858, %v1851, %v1855
  %v1860 = vand.u32 2147483647, %v1835
  %vm1861 = vcmp.eq.f32.partialorder %v1860, 8.507059e+37
  %v1862 = vand.u32 %v1835, 2147483648
  %v1863 = vor.u32 1.1754944e-38, %v1862
  %v1864 = vsel %vm1861, %v1863, %v1859
  %v1865 = vmul.f32 1.0, %v1864
  %v1866 = vmul.f32 %v1810, %v1656
  %v1867 = vmul.f32 %v1825, %v1657
  %v1868 = vmul.f32 %v1772, %v1826
  %v1869 = vmul.f32 %v1787, %v1827
  %v1870 = vadd.f32 %v1866, %v1868
  %v1871 = vadd.f32 %v1867, %v1869
  %v1872 = vtanh.pop %v1870
  %v1873 = vtanh.pop %v1871
  %v1874 = vmul.f32 %v1850, %v1872
  %v1875 = vmul.f32 %v1865, %v1873
  %v1876 = vpack.c.bf16 %v1874, %v1874
  %v1877 = vpack.c.bf16 %v1875, %v1875
  %s1878 = scalar_lea.vmem [#allocation4], 32
  %1879 = vst [vmem:[%s1878] sm:$0xf] %v1876
  %1880 = vst [vmem:[%s1878 + $0x4] sm:$0xf] %v1877
  %s1881 = scalar_lea.vmem [#allocation5], 160
  %v1882 = vld [vmem:[%s1881] sm:$0xff]
  %v1883 = vld [vmem:[%s1881 + $0x8] sm:$0xff]
  %v1884 = vld [vmem:[%s1881 + $0x10] sm:$0xff]
  %v1885 = vld [vmem:[%s1881 + $0x18] sm:$0xff]
  %v1886 = vunpack.c.l.bf16 %v1882
  %v1887 = vunpack.c.h.bf16 %v1882
  %v1888 = vunpack.c.l.bf16 %v1883
  %v1889 = vunpack.c.h.bf16 %v1883
  %v1890 = vunpack.c.l.bf16 %v1884
  %v1891 = vunpack.c.h.bf16 %v1884
  %v1892 = vunpack.c.l.bf16 %v1885
  %v1893 = vunpack.c.h.bf16 %v1885
  %v1896 = vunpack.c.l.b16 %v1876
  %v1897 = vunpack.c.l.b16 %v1877
  %v1898 = vpack.c.b16 %v1897, %v1896
  %1900 = vmatpush.bf16.msra.mxu0 %v795
  %1901 = vmatpush.bf16.msra.mxu0 %v791
  %1902 = vmatpush.bf16.msra.mxu0 %v787
  %1903 = vmatpush.bf16.msra.mxu0 %v783
  %1904 = vmatpush.bf16.msra.mxu0 %v779
  %1905 = vmatpush.bf16.msra.mxu0 %v775
  %1906 = vmatpush.bf16.msra.mxu0 %v771
  %1907 = vmatpush.bf16.msra.mxu0 %v767
  %1908 = vmatmul.bf16.gmra.mxu0 %v1898
  %v1909 = vpop.f32.mrf.mxu0
  %v1910 = vadd.f32 0.0, %v1909
  %v1911 = vpop.f32.mrf.mxu0
  %v1912 = vadd.f32 0.0, %v1911
  %1913 = vdwg.mxu0
  %1914 = vmatpush.bf16.msra.mxu0 %v796
  %1915 = vmatpush.bf16.msra.mxu0 %v792
  %1916 = vmatpush.bf16.msra.mxu0 %v788
  %1917 = vmatpush.bf16.msra.mxu0 %v784
  %1918 = vmatpush.bf16.msra.mxu0 %v780
  %1919 = vmatpush.bf16.msra.mxu0 %v776
  %1920 = vmatpush.bf16.msra.mxu0 %v772
  %1921 = vmatpush.bf16.msra.mxu0 %v768
  %1922 = vmatmul.bf16.gmra.mxu0 %v1898
  %v1923 = vpop.f32.mrf.mxu0
  %v1924 = vadd.f32 0.0, %v1923
  %v1925 = vpop.f32.mrf.mxu0
  %v1926 = vadd.f32 0.0, %v1925
  %1927 = vdwg.mxu0
  %1928 = vmatpush.bf16.msra.mxu0 %v797
  %1929 = vmatpush.bf16.msra.mxu0 %v793
  %1930 = vmatpush.bf16.msra.mxu0 %v789
  %1931 = vmatpush.bf16.msra.mxu0 %v785
  %1932 = vmatpush.bf16.msra.mxu0 %v781
  %1933 = vmatpush.bf16.msra.mxu0 %v777
  %1934 = vmatpush.bf16.msra.mxu0 %v773
  %1935 = vmatpush.bf16.msra.mxu0 %v769
  %1936 = vmatmul.bf16.gmra.mxu0 %v1898
  %v1937 = vpop.f32.mrf.mxu0
  %v1938 = vadd.f32 0.0, %v1937
  %v1939 = vpop.f32.mrf.mxu0
  %v1940 = vadd.f32 0.0, %v1939
  %1941 = vdwg.mxu0
  %1942 = vmatpush.bf16.msra.mxu0 %v798
  %1943 = vmatpush.bf16.msra.mxu0 %v794
  %1944 = vmatpush.bf16.msra.mxu0 %v790
  %1945 = vmatpush.bf16.msra.mxu0 %v786
  %1946 = vmatpush.bf16.msra.mxu0 %v782
  %1947 = vmatpush.bf16.msra.mxu0 %v778
  %1948 = vmatpush.bf16.msra.mxu0 %v774
  %1949 = vmatpush.bf16.msra.mxu0 %v770
  %1950 = vmatmul.bf16.gmra.mxu0 %v1898
  %v1951 = vpop.f32.mrf.mxu0
  %v1952 = vadd.f32 0.0, %v1951
  %v1953 = vpop.f32.mrf.mxu0
  %v1954 = vadd.f32 0.0, %v1953
  %1955 = vdwg.mxu0
  %v1956 = vadd.f32 %v1886, %v1910
  %v1957 = vadd.f32 %v1887, %v1924
  %v1958 = vadd.f32 %v1888, %v1938
  %v1959 = vadd.f32 %v1889, %v1952
  %v1960 = vadd.f32 %v1890, %v1912
  %v1961 = vadd.f32 %v1891, %v1926
  %v1962 = vadd.f32 %v1892, %v1940
  %v1963 = vadd.f32 %v1893, %v1954
  %v1964 = vxor.u32 %v1956, 2147483648
  %v1965 = vxor.u32 %v1960, 2147483648
  %v1966 = vmul.f32 %v1964, 1.442695
  %v1967 = vpow.pop %v1966
  %v1968 = vmul.f32 %v1965, 1.442695
  %v1969 = vpow.pop %v1968
  %v1970 = vadd.f32 %v1967, 1.0
  %v1971 = vadd.f32 %v1969, 1.0
  %v1972 = vrcp.pop %v1970
  %v1973 = vmul.f32 %v1970, %v1972
  %v1974 = vsub.f32 1.0, %v1973
  %v1975 = vmul.f32 %v1972, %v1974
  %v1976 = vadd.f32 %v1972, %v1975
  %vm1977 = vweird.f32 %v1970
  %vm1978 = vweird.f32 %v1972
  %vm1979 = vmor %vm1977, %vm1978
  %v1980 = vsel %vm1979, %v1972, %v1976
  %v1981 = vand.u32 2147483647, %v1970
  %vm1982 = vcmp.eq.f32.partialorder %v1981, 8.507059e+37
  %v1983 = vand.u32 %v1970, 2147483648
  %v1984 = vor.u32 1.1754944e-38, %v1983
  %v1985 = vsel %vm1982, %v1984, %v1980
  %v1986 = vmul.f32 1.0, %v1985
  %v1987 = vrcp.pop %v1971
  %v1988 = vmul.f32 %v1971, %v1987
  %v1989 = vsub.f32 1.0, %v1988
  %v1990 = vmul.f32 %v1987, %v1989
  %v1991 = vadd.f32 %v1987, %v1990
  %vm1992 = vweird.f32 %v1971
  %vm1993 = vweird.f32 %v1987
  %vm1994 = vmor %vm1992, %vm1993
  %v1995 = vsel %vm1994, %v1987, %v1991
  %v1996 = vand.u32 2147483647, %v1971
  %vm1997 = vcmp.eq.f32.partialorder %v1996, 8.507059e+37
  %v1998 = vand.u32 %v1971, 2147483648
  %v1999 = vor.u32 1.1754944e-38, %v1998
  %v2000 = vsel %vm1997, %v1999, %v1995
  %v2001 = vmul.f32 1.0, %v2000
  %v2002 = vxor.u32 %v1957, 2147483648
  %v2003 = vxor.u32 %v1961, 2147483648
  %v2004 = vmul.f32 %v2002, 1.442695
  %v2005 = vpow.pop %v2004
  %v2006 = vmul.f32 %v2003, 1.442695
  %v2007 = vpow.pop %v2006
  %v2008 = vadd.f32 %v2005, 1.0
  %v2009 = vadd.f32 %v2007, 1.0
  %v2010 = vrcp.pop %v2008
  %v2011 = vmul.f32 %v2008, %v2010
  %v2012 = vsub.f32 1.0, %v2011
  %v2013 = vmul.f32 %v2010, %v2012
  %v2014 = vadd.f32 %v2010, %v2013
  %vm2015 = vweird.f32 %v2008
  %vm2016 = vweird.f32 %v2010
  %vm2017 = vmor %vm2015, %vm2016
  %v2018 = vsel %vm2017, %v2010, %v2014
  %v2019 = vand.u32 2147483647, %v2008
  %vm2020 = vcmp.eq.f32.partialorder %v2019, 8.507059e+37
  %v2021 = vand.u32 %v2008, 2147483648
  %v2022 = vor.u32 1.1754944e-38, %v2021
  %v2023 = vsel %vm2020, %v2022, %v2018
  %v2024 = vmul.f32 1.0, %v2023
  %v2025 = vrcp.pop %v2009
  %v2026 = vmul.f32 %v2009, %v2025
  %v2027 = vsub.f32 1.0, %v2026
  %v2028 = vmul.f32 %v2025, %v2027
  %v2029 = vadd.f32 %v2025, %v2028
  %vm2030 = vweird.f32 %v2009
  %vm2031 = vweird.f32 %v2025
  %vm2032 = vmor %vm2030, %vm2031
  %v2033 = vsel %vm2032, %v2025, %v2029
  %v2034 = vand.u32 2147483647, %v2009
  %vm2035 = vcmp.eq.f32.partialorder %v2034, 8.507059e+37
  %v2036 = vand.u32 %v2009, 2147483648
  %v2037 = vor.u32 1.1754944e-38, %v2036
  %v2038 = vsel %vm2035, %v2037, %v2033
  %v2039 = vmul.f32 1.0, %v2038
  %v2040 = vtanh.pop %v1958
  %v2041 = vtanh.pop %v1962
  %v2042 = vxor.u32 %v1959, 2147483648
  %v2043 = vxor.u32 %v1963, 2147483648
  %v2044 = vmul.f32 %v2042, 1.442695
  %v2045 = vpow.pop %v2044
  %v2046 = vmul.f32 %v2043, 1.442695
  %v2047 = vpow.pop %v2046
  %v2048 = vadd.f32 %v2045, 1.0
  %v2049 = vadd.f32 %v2047, 1.0
  %v2050 = vrcp.pop %v2048
  %v2051 = vmul.f32 %v2048, %v2050
  %v2052 = vsub.f32 1.0, %v2051
  %v2053 = vmul.f32 %v2050, %v2052
  %v2054 = vadd.f32 %v2050, %v2053
  %vm2055 = vweird.f32 %v2048
  %vm2056 = vweird.f32 %v2050
  %vm2057 = vmor %vm2055, %vm2056
  %v2058 = vsel %vm2057, %v2050, %v2054
  %v2059 = vand.u32 2147483647, %v2048
  %vm2060 = vcmp.eq.f32.partialorder %v2059, 8.507059e+37
  %v2061 = vand.u32 %v2048, 2147483648
  %v2062 = vor.u32 1.1754944e-38, %v2061
  %v2063 = vsel %vm2060, %v2062, %v2058
  %v2064 = vmul.f32 1.0, %v2063
  %v2065 = vrcp.pop %v2049
  %v2066 = vmul.f32 %v2049, %v2065
  %v2067 = vsub.f32 1.0, %v2066
  %v2068 = vmul.f32 %v2065, %v2067
  %v2069 = vadd.f32 %v2065, %v2068
  %vm2070 = vweird.f32 %v2049
  %vm2071 = vweird.f32 %v2065
  %vm2072 = vmor %vm2070, %vm2071
  %v2073 = vsel %vm2072, %v2065, %v2069
  %v2074 = vand.u32 2147483647, %v2049
  %vm2075 = vcmp.eq.f32.partialorder %v2074, 8.507059e+37
  %v2076 = vand.u32 %v2049, 2147483648
  %v2077 = vor.u32 1.1754944e-38, %v2076
  %v2078 = vsel %vm2075, %v2077, %v2073
  %v2079 = vmul.f32 1.0, %v2078
  %v2080 = vmul.f32 %v2024, %v1870
  %v2081 = vmul.f32 %v2039, %v1871
  %v2082 = vmul.f32 %v1986, %v2040
  %v2083 = vmul.f32 %v2001, %v2041
  %v2084 = vadd.f32 %v2080, %v2082
  %v2085 = vadd.f32 %v2081, %v2083
  %v2086 = vtanh.pop %v2084
  %v2087 = vtanh.pop %v2085
  %v2088 = vmul.f32 %v2064, %v2086
  %v2089 = vmul.f32 %v2079, %v2087
  %v2090 = vpack.c.bf16 %v2088, %v2088
  %v2091 = vpack.c.bf16 %v2089, %v2089
  %s2092 = scalar_lea.vmem [#allocation4], 40
  %2093 = vst [vmem:[%s2092] sm:$0xf] %v2090
  %2094 = vst [vmem:[%s2092 + $0x4] sm:$0xf] %v2091
  %s2095 = scalar_lea.vmem [#allocation5], 192
  %v2096 = vld [vmem:[%s2095] sm:$0xff]
  %v2097 = vld [vmem:[%s2095 + $0x8] sm:$0xff]
  %v2098 = vld [vmem:[%s2095 + $0x10] sm:$0xff]
  %v2099 = vld [vmem:[%s2095 + $0x18] sm:$0xff]
  %v2100 = vunpack.c.l.bf16 %v2096
  %v2101 = vunpack.c.h.bf16 %v2096
  %v2102 = vunpack.c.l.bf16 %v2097
  %v2103 = vunpack.c.h.bf16 %v2097
  %v2104 = vunpack.c.l.bf16 %v2098
  %v2105 = vunpack.c.h.bf16 %v2098
  %v2106 = vunpack.c.l.bf16 %v2099
  %v2107 = vunpack.c.h.bf16 %v2099
  %v2110 = vunpack.c.l.b16 %v2090
  %v2111 = vunpack.c.l.b16 %v2091
  %v2112 = vpack.c.b16 %v2111, %v2110
  %2114 = vmatpush.bf16.msra.mxu0 %v795
  %2115 = vmatpush.bf16.msra.mxu0 %v791
  %2116 = vmatpush.bf16.msra.mxu0 %v787
  %2117 = vmatpush.bf16.msra.mxu0 %v783
  %2118 = vmatpush.bf16.msra.mxu0 %v779
  %2119 = vmatpush.bf16.msra.mxu0 %v775
  %2120 = vmatpush.bf16.msra.mxu0 %v771
  %2121 = vmatpush.bf16.msra.mxu0 %v767
  %2122 = vmatmul.bf16.gmra.mxu0 %v2112
  %v2123 = vpop.f32.mrf.mxu0
  %v2124 = vadd.f32 0.0, %v2123
  %v2125 = vpop.f32.mrf.mxu0
  %v2126 = vadd.f32 0.0, %v2125
  %2127 = vdwg.mxu0
  %2128 = vmatpush.bf16.msra.mxu0 %v796
  %2129 = vmatpush.bf16.msra.mxu0 %v792
  %2130 = vmatpush.bf16.msra.mxu0 %v788
  %2131 = vmatpush.bf16.msra.mxu0 %v784
  %2132 = vmatpush.bf16.msra.mxu0 %v780
  %2133 = vmatpush.bf16.msra.mxu0 %v776
  %2134 = vmatpush.bf16.msra.mxu0 %v772
  %2135 = vmatpush.bf16.msra.mxu0 %v768
  %2136 = vmatmul.bf16.gmra.mxu0 %v2112
  %v2137 = vpop.f32.mrf.mxu0
  %v2138 = vadd.f32 0.0, %v2137
  %v2139 = vpop.f32.mrf.mxu0
  %v2140 = vadd.f32 0.0, %v2139
  %2141 = vdwg.mxu0
  %2142 = vmatpush.bf16.msra.mxu0 %v797
  %2143 = vmatpush.bf16.msra.mxu0 %v793
  %2144 = vmatpush.bf16.msra.mxu0 %v789
  %2145 = vmatpush.bf16.msra.mxu0 %v785
  %2146 = vmatpush.bf16.msra.mxu0 %v781
  %2147 = vmatpush.bf16.msra.mxu0 %v777
  %2148 = vmatpush.bf16.msra.mxu0 %v773
  %2149 = vmatpush.bf16.msra.mxu0 %v769
  %2150 = vmatmul.bf16.gmra.mxu0 %v2112
  %v2151 = vpop.f32.mrf.mxu0
  %v2152 = vadd.f32 0.0, %v2151
  %v2153 = vpop.f32.mrf.mxu0
  %v2154 = vadd.f32 0.0, %v2153
  %2155 = vdwg.mxu0
  %2156 = vmatpush.bf16.msra.mxu0 %v798
  %2157 = vmatpush.bf16.msra.mxu0 %v794
  %2158 = vmatpush.bf16.msra.mxu0 %v790
  %2159 = vmatpush.bf16.msra.mxu0 %v786
  %2160 = vmatpush.bf16.msra.mxu0 %v782
  %2161 = vmatpush.bf16.msra.mxu0 %v778
  %2162 = vmatpush.bf16.msra.mxu0 %v774
  %2163 = vmatpush.bf16.msra.mxu0 %v770
  %2164 = vmatmul.bf16.gmra.mxu0 %v2112
  %v2165 = vpop.f32.mrf.mxu0
  %v2166 = vadd.f32 0.0, %v2165
  %v2167 = vpop.f32.mrf.mxu0
  %v2168 = vadd.f32 0.0, %v2167
  %2169 = vdwg.mxu0
  %v2170 = vadd.f32 %v2100, %v2124
  %v2171 = vadd.f32 %v2101, %v2138
  %v2172 = vadd.f32 %v2102, %v2152
  %v2173 = vadd.f32 %v2103, %v2166
  %v2174 = vadd.f32 %v2104, %v2126
  %v2175 = vadd.f32 %v2105, %v2140
  %v2176 = vadd.f32 %v2106, %v2154
  %v2177 = vadd.f32 %v2107, %v2168
  %v2178 = vxor.u32 %v2170, 2147483648
  %v2179 = vxor.u32 %v2174, 2147483648
  %v2180 = vmul.f32 %v2178, 1.442695
  %v2181 = vpow.pop %v2180
  %v2182 = vmul.f32 %v2179, 1.442695
  %v2183 = vpow.pop %v2182
  %v2184 = vadd.f32 %v2181, 1.0
  %v2185 = vadd.f32 %v2183, 1.0
  %v2186 = vrcp.pop %v2184
  %v2187 = vmul.f32 %v2184, %v2186
  %v2188 = vsub.f32 1.0, %v2187
  %v2189 = vmul.f32 %v2186, %v2188
  %v2190 = vadd.f32 %v2186, %v2189
  %vm2191 = vweird.f32 %v2184
  %vm2192 = vweird.f32 %v2186
  %vm2193 = vmor %vm2191, %vm2192
  %v2194 = vsel %vm2193, %v2186, %v2190
  %v2195 = vand.u32 2147483647, %v2184
  %vm2196 = vcmp.eq.f32.partialorder %v2195, 8.507059e+37
  %v2197 = vand.u32 %v2184, 2147483648
  %v2198 = vor.u32 1.1754944e-38, %v2197
  %v2199 = vsel %vm2196, %v2198, %v2194
  %v2200 = vmul.f32 1.0, %v2199
  %v2201 = vrcp.pop %v2185
  %v2202 = vmul.f32 %v2185, %v2201
  %v2203 = vsub.f32 1.0, %v2202
  %v2204 = vmul.f32 %v2201, %v2203
  %v2205 = vadd.f32 %v2201, %v2204
  %vm2206 = vweird.f32 %v2185
  %vm2207 = vweird.f32 %v2201
  %vm2208 = vmor %vm2206, %vm2207
  %v2209 = vsel %vm2208, %v2201, %v2205
  %v2210 = vand.u32 2147483647, %v2185
  %vm2211 = vcmp.eq.f32.partialorder %v2210, 8.507059e+37
  %v2212 = vand.u32 %v2185, 2147483648
  %v2213 = vor.u32 1.1754944e-38, %v2212
  %v2214 = vsel %vm2211, %v2213, %v2209
  %v2215 = vmul.f32 1.0, %v2214
  %v2216 = vxor.u32 %v2171, 2147483648
  %v2217 = vxor.u32 %v2175, 2147483648
  %v2218 = vmul.f32 %v2216, 1.442695
  %v2219 = vpow.pop %v2218
  %v2220 = vmul.f32 %v2217, 1.442695
  %v2221 = vpow.pop %v2220
  %v2222 = vadd.f32 %v2219, 1.0
  %v2223 = vadd.f32 %v2221, 1.0
  %v2224 = vrcp.pop %v2222
  %v2225 = vmul.f32 %v2222, %v2224
  %v2226 = vsub.f32 1.0, %v2225
  %v2227 = vmul.f32 %v2224, %v2226
  %v2228 = vadd.f32 %v2224, %v2227
  %vm2229 = vweird.f32 %v2222
  %vm2230 = vweird.f32 %v2224
  %vm2231 = vmor %vm2229, %vm2230
  %v2232 = vsel %vm2231, %v2224, %v2228
  %v2233 = vand.u32 2147483647, %v2222
  %vm2234 = vcmp.eq.f32.partialorder %v2233, 8.507059e+37
  %v2235 = vand.u32 %v2222, 2147483648
  %v2236 = vor.u32 1.1754944e-38, %v2235
  %v2237 = vsel %vm2234, %v2236, %v2232
  %v2238 = vmul.f32 1.0, %v2237
  %v2239 = vrcp.pop %v2223
  %v2240 = vmul.f32 %v2223, %v2239
  %v2241 = vsub.f32 1.0, %v2240
  %v2242 = vmul.f32 %v2239, %v2241
  %v2243 = vadd.f32 %v2239, %v2242
  %vm2244 = vweird.f32 %v2223
  %vm2245 = vweird.f32 %v2239
  %vm2246 = vmor %vm2244, %vm2245
  %v2247 = vsel %vm2246, %v2239, %v2243
  %v2248 = vand.u32 2147483647, %v2223
  %vm2249 = vcmp.eq.f32.partialorder %v2248, 8.507059e+37
  %v2250 = vand.u32 %v2223, 2147483648
  %v2251 = vor.u32 1.1754944e-38, %v2250
  %v2252 = vsel %vm2249, %v2251, %v2247
  %v2253 = vmul.f32 1.0, %v2252
  %v2254 = vtanh.pop %v2172
  %v2255 = vtanh.pop %v2176
  %v2256 = vxor.u32 %v2173, 2147483648
  %v2257 = vxor.u32 %v2177, 2147483648
  %v2258 = vmul.f32 %v2256, 1.442695
  %v2259 = vpow.pop %v2258
  %v2260 = vmul.f32 %v2257, 1.442695
  %v2261 = vpow.pop %v2260
  %v2262 = vadd.f32 %v2259, 1.0
  %v2263 = vadd.f32 %v2261, 1.0
  %v2264 = vrcp.pop %v2262
  %v2265 = vmul.f32 %v2262, %v2264
  %v2266 = vsub.f32 1.0, %v2265
  %v2267 = vmul.f32 %v2264, %v2266
  %v2268 = vadd.f32 %v2264, %v2267
  %vm2269 = vweird.f32 %v2262
  %vm2270 = vweird.f32 %v2264
  %vm2271 = vmor %vm2269, %vm2270
  %v2272 = vsel %vm2271, %v2264, %v2268
  %v2273 = vand.u32 2147483647, %v2262
  %vm2274 = vcmp.eq.f32.partialorder %v2273, 8.507059e+37
  %v2275 = vand.u32 %v2262, 2147483648
  %v2276 = vor.u32 1.1754944e-38, %v2275
  %v2277 = vsel %vm2274, %v2276, %v2272
  %v2278 = vmul.f32 1.0, %v2277
  %v2279 = vrcp.pop %v2263
  %v2280 = vmul.f32 %v2263, %v2279
  %v2281 = vsub.f32 1.0, %v2280
  %v2282 = vmul.f32 %v2279, %v2281
  %v2283 = vadd.f32 %v2279, %v2282
  %vm2284 = vweird.f32 %v2263
  %vm2285 = vweird.f32 %v2279
  %vm2286 = vmor %vm2284, %vm2285
  %v2287 = vsel %vm2286, %v2279, %v2283
  %v2288 = vand.u32 2147483647, %v2263
  %vm2289 = vcmp.eq.f32.partialorder %v2288, 8.507059e+37
  %v2290 = vand.u32 %v2263, 2147483648
  %v2291 = vor.u32 1.1754944e-38, %v2290
  %v2292 = vsel %vm2289, %v2291, %v2287
  %v2293 = vmul.f32 1.0, %v2292
  %v2294 = vmul.f32 %v2238, %v2084
  %v2295 = vmul.f32 %v2253, %v2085
  %v2296 = vmul.f32 %v2200, %v2254
  %v2297 = vmul.f32 %v2215, %v2255
  %v2298 = vadd.f32 %v2294, %v2296
  %v2299 = vadd.f32 %v2295, %v2297
  %v2300 = vtanh.pop %v2298
  %v2301 = vtanh.pop %v2299
  %v2302 = vmul.f32 %v2278, %v2300
  %v2303 = vmul.f32 %v2293, %v2301
  %v2304 = vpack.c.bf16 %v2302, %v2302
  %v2305 = vpack.c.bf16 %v2303, %v2303
  %s2306 = scalar_lea.vmem [#allocation4], 48
  %2307 = vst [vmem:[%s2306] sm:$0xf] %v2304
  %2308 = vst [vmem:[%s2306 + $0x4] sm:$0xf] %v2305
  %s2309 = scalar_lea.vmem [#allocation5], 224
  %v2310 = vld [vmem:[%s2309] sm:$0xff]
  %v2311 = vld [vmem:[%s2309 + $0x8] sm:$0xff]
  %v2312 = vld [vmem:[%s2309 + $0x10] sm:$0xff]
  %v2313 = vld [vmem:[%s2309 + $0x18] sm:$0xff]
  %v2314 = vunpack.c.l.bf16 %v2310
  %v2315 = vunpack.c.h.bf16 %v2310
  %v2316 = vunpack.c.l.bf16 %v2311
  %v2317 = vunpack.c.h.bf16 %v2311
  %v2318 = vunpack.c.l.bf16 %v2312
  %v2319 = vunpack.c.h.bf16 %v2312
  %v2320 = vunpack.c.l.bf16 %v2313
  %v2321 = vunpack.c.h.bf16 %v2313
  %v2324 = vunpack.c.l.b16 %v2304
  %v2325 = vunpack.c.l.b16 %v2305
  %v2326 = vpack.c.b16 %v2325, %v2324
  %2328 = vmatpush.bf16.msra.mxu0 %v795
  %2329 = vmatpush.bf16.msra.mxu0 %v791
  %2330 = vmatpush.bf16.msra.mxu0 %v787
  %2331 = vmatpush.bf16.msra.mxu0 %v783
  %2332 = vmatpush.bf16.msra.mxu0 %v779
  %2333 = vmatpush.bf16.msra.mxu0 %v775
  %2334 = vmatpush.bf16.msra.mxu0 %v771
  %2335 = vmatpush.bf16.msra.mxu0 %v767
  %2336 = vmatmul.bf16.gmra.mxu0 %v2326
  %v2337 = vpop.f32.mrf.mxu0
  %v2338 = vadd.f32 0.0, %v2337
  %v2339 = vpop.f32.mrf.mxu0
  %v2340 = vadd.f32 0.0, %v2339
  %2341 = vdwg.mxu0
  %2342 = vmatpush.bf16.msra.mxu0 %v796
  %2343 = vmatpush.bf16.msra.mxu0 %v792
  %2344 = vmatpush.bf16.msra.mxu0 %v788
  %2345 = vmatpush.bf16.msra.mxu0 %v784
  %2346 = vmatpush.bf16.msra.mxu0 %v780
  %2347 = vmatpush.bf16.msra.mxu0 %v776
  %2348 = vmatpush.bf16.msra.mxu0 %v772
  %2349 = vmatpush.bf16.msra.mxu0 %v768
  %2350 = vmatmul.bf16.gmra.mxu0 %v2326
  %v2351 = vpop.f32.mrf.mxu0
  %v2352 = vadd.f32 0.0, %v2351
  %v2353 = vpop.f32.mrf.mxu0
  %v2354 = vadd.f32 0.0, %v2353
  %2355 = vdwg.mxu0
  %2356 = vmatpush.bf16.msra.mxu0 %v797
  %2357 = vmatpush.bf16.msra.mxu0 %v793
  %2358 = vmatpush.bf16.msra.mxu0 %v789
  %2359 = vmatpush.bf16.msra.mxu0 %v785
  %2360 = vmatpush.bf16.msra.mxu0 %v781
  %2361 = vmatpush.bf16.msra.mxu0 %v777
  %2362 = vmatpush.bf16.msra.mxu0 %v773
  %2363 = vmatpush.bf16.msra.mxu0 %v769
  %2364 = vmatmul.bf16.gmra.mxu0 %v2326
  %v2365 = vpop.f32.mrf.mxu0
  %v2366 = vadd.f32 0.0, %v2365
  %v2367 = vpop.f32.mrf.mxu0
  %v2368 = vadd.f32 0.0, %v2367
  %2369 = vdwg.mxu0
  %2370 = vmatpush.bf16.msra.mxu0 %v798
  %2371 = vmatpush.bf16.msra.mxu0 %v794
  %2372 = vmatpush.bf16.msra.mxu0 %v790
  %2373 = vmatpush.bf16.msra.mxu0 %v786
  %2374 = vmatpush.bf16.msra.mxu0 %v782
  %2375 = vmatpush.bf16.msra.mxu0 %v778
  %2376 = vmatpush.bf16.msra.mxu0 %v774
  %2377 = vmatpush.bf16.msra.mxu0 %v770
  %2378 = vmatmul.bf16.gmra.mxu0 %v2326
  %v2379 = vpop.f32.mrf.mxu0
  %v2380 = vadd.f32 0.0, %v2379
  %v2381 = vpop.f32.mrf.mxu0
  %v2382 = vadd.f32 0.0, %v2381
  %2383 = vdwg.mxu0
  %v2384 = vadd.f32 %v2314, %v2338
  %v2385 = vadd.f32 %v2315, %v2352
  %v2386 = vadd.f32 %v2316, %v2366
  %v2387 = vadd.f32 %v2317, %v2380
  %v2388 = vadd.f32 %v2318, %v2340
  %v2389 = vadd.f32 %v2319, %v2354
  %v2390 = vadd.f32 %v2320, %v2368
  %v2391 = vadd.f32 %v2321, %v2382
  %v2392 = vxor.u32 %v2384, 2147483648
  %v2393 = vxor.u32 %v2388, 2147483648
  %v2394 = vmul.f32 %v2392, 1.442695
  %v2395 = vpow.pop %v2394
  %v2396 = vmul.f32 %v2393, 1.442695
  %v2397 = vpow.pop %v2396
  %v2398 = vadd.f32 %v2395, 1.0
  %v2399 = vadd.f32 %v2397, 1.0
  %v2400 = vrcp.pop %v2398
  %v2401 = vmul.f32 %v2398, %v2400
  %v2402 = vsub.f32 1.0, %v2401
  %v2403 = vmul.f32 %v2400, %v2402
  %v2404 = vadd.f32 %v2400, %v2403
  %vm2405 = vweird.f32 %v2398
  %vm2406 = vweird.f32 %v2400
  %vm2407 = vmor %vm2405, %vm2406
  %v2408 = vsel %vm2407, %v2400, %v2404
  %v2409 = vand.u32 2147483647, %v2398
  %vm2410 = vcmp.eq.f32.partialorder %v2409, 8.507059e+37
  %v2411 = vand.u32 %v2398, 2147483648
  %v2412 = vor.u32 1.1754944e-38, %v2411
  %v2413 = vsel %vm2410, %v2412, %v2408
  %v2414 = vmul.f32 1.0, %v2413
  %v2415 = vrcp.pop %v2399
  %v2416 = vmul.f32 %v2399, %v2415
  %v2417 = vsub.f32 1.0, %v2416
  %v2418 = vmul.f32 %v2415, %v2417
  %v2419 = vadd.f32 %v2415, %v2418
  %vm2420 = vweird.f32 %v2399
  %vm2421 = vweird.f32 %v2415
  %vm2422 = vmor %vm2420, %vm2421
  %v2423 = vsel %vm2422, %v2415, %v2419
  %v2424 = vand.u32 2147483647, %v2399
  %vm2425 = vcmp.eq.f32.partialorder %v2424, 8.507059e+37
  %v2426 = vand.u32 %v2399, 2147483648
  %v2427 = vor.u32 1.1754944e-38, %v2426
  %v2428 = vsel %vm2425, %v2427, %v2423
  %v2429 = vmul.f32 1.0, %v2428
  %v2430 = vxor.u32 %v2385, 2147483648
  %v2431 = vxor.u32 %v2389, 2147483648
  %v2432 = vmul.f32 %v2430, 1.442695
  %v2433 = vpow.pop %v2432
  %v2434 = vmul.f32 %v2431, 1.442695
  %v2435 = vpow.pop %v2434
  %v2436 = vadd.f32 %v2433, 1.0
  %v2437 = vadd.f32 %v2435, 1.0
  %v2438 = vrcp.pop %v2436
  %v2439 = vmul.f32 %v2436, %v2438
  %v2440 = vsub.f32 1.0, %v2439
  %v2441 = vmul.f32 %v2438, %v2440
  %v2442 = vadd.f32 %v2438, %v2441
  %vm2443 = vweird.f32 %v2436
  %vm2444 = vweird.f32 %v2438
  %vm2445 = vmor %vm2443, %vm2444
  %v2446 = vsel %vm2445, %v2438, %v2442
  %v2447 = vand.u32 2147483647, %v2436
  %vm2448 = vcmp.eq.f32.partialorder %v2447, 8.507059e+37
  %v2449 = vand.u32 %v2436, 2147483648
  %v2450 = vor.u32 1.1754944e-38, %v2449
  %v2451 = vsel %vm2448, %v2450, %v2446
  %v2452 = vmul.f32 1.0, %v2451
  %v2453 = vrcp.pop %v2437
  %v2454 = vmul.f32 %v2437, %v2453
  %v2455 = vsub.f32 1.0, %v2454
  %v2456 = vmul.f32 %v2453, %v2455
  %v2457 = vadd.f32 %v2453, %v2456
  %vm2458 = vweird.f32 %v2437
  %vm2459 = vweird.f32 %v2453
  %vm2460 = vmor %vm2458, %vm2459
  %v2461 = vsel %vm2460, %v2453, %v2457
  %v2462 = vand.u32 2147483647, %v2437
  %vm2463 = vcmp.eq.f32.partialorder %v2462, 8.507059e+37
  %v2464 = vand.u32 %v2437, 2147483648
  %v2465 = vor.u32 1.1754944e-38, %v2464
  %v2466 = vsel %vm2463, %v2465, %v2461
  %v2467 = vmul.f32 1.0, %v2466
  %v2468 = vtanh.pop %v2386
  %v2469 = vtanh.pop %v2390
  %v2470 = vxor.u32 %v2387, 2147483648
  %v2471 = vxor.u32 %v2391, 2147483648
  %v2472 = vmul.f32 %v2470, 1.442695
  %v2473 = vpow.pop %v2472
  %v2474 = vmul.f32 %v2471, 1.442695
  %v2475 = vpow.pop %v2474
  %v2476 = vadd.f32 %v2473, 1.0
  %v2477 = vadd.f32 %v2475, 1.0
  %v2478 = vrcp.pop %v2476
  %v2479 = vmul.f32 %v2476, %v2478
  %v2480 = vsub.f32 1.0, %v2479
  %v2481 = vmul.f32 %v2478, %v2480
  %v2482 = vadd.f32 %v2478, %v2481
  %vm2483 = vweird.f32 %v2476
  %vm2484 = vweird.f32 %v2478
  %vm2485 = vmor %vm2483, %vm2484
  %v2486 = vsel %vm2485, %v2478, %v2482
  %v2487 = vand.u32 2147483647, %v2476
  %vm2488 = vcmp.eq.f32.partialorder %v2487, 8.507059e+37
  %v2489 = vand.u32 %v2476, 2147483648
  %v2490 = vor.u32 1.1754944e-38, %v2489
  %v2491 = vsel %vm2488, %v2490, %v2486
  %v2492 = vmul.f32 1.0, %v2491
  %v2493 = vrcp.pop %v2477
  %v2494 = vmul.f32 %v2477, %v2493
  %v2495 = vsub.f32 1.0, %v2494
  %v2496 = vmul.f32 %v2493, %v2495
  %v2497 = vadd.f32 %v2493, %v2496
  %vm2498 = vweird.f32 %v2477
  %vm2499 = vweird.f32 %v2493
  %vm2500 = vmor %vm2498, %vm2499
  %v2501 = vsel %vm2500, %v2493, %v2497
  %v2502 = vand.u32 2147483647, %v2477
  %vm2503 = vcmp.eq.f32.partialorder %v2502, 8.507059e+37
  %v2504 = vand.u32 %v2477, 2147483648
  %v2505 = vor.u32 1.1754944e-38, %v2504
  %v2506 = vsel %vm2503, %v2505, %v2501
  %v2507 = vmul.f32 1.0, %v2506
  %v2508 = vmul.f32 %v2452, %v2298
  %v2509 = vmul.f32 %v2467, %v2299
  %v2510 = vmul.f32 %v2414, %v2468
  %v2511 = vmul.f32 %v2429, %v2469
  %v2512 = vadd.f32 %v2508, %v2510
  %v2513 = vadd.f32 %v2509, %v2511
  %v2514 = vtanh.pop %v2512
  %v2515 = vtanh.pop %v2513
  %v2516 = vmul.f32 %v2492, %v2514
  %v2517 = vmul.f32 %v2507, %v2515
  %v2518 = vpack.c.bf16 %v2516, %v2516
  %v2519 = vpack.c.bf16 %v2517, %v2517
  %s2520 = scalar_lea.vmem [#allocation4], 56
  %2521 = vst [vmem:[%s2520] sm:$0xf] %v2518
  %2522 = vst [vmem:[%s2520 + $0x4] sm:$0xf] %v2519
  %2523 = vst [vmem:[#allocation2] sm:$0xff] %v2516
  %2524 = vst [vmem:[#allocation2 + $0x8] sm:$0xff] %v2517
  %2525 = vst [vmem:[#allocation3] sm:$0xff] %v2512
  %2526 = vst [vmem:[#allocation3 + $0x8] sm:$0xff] %v2513
  %s2527 = scalar_lea.vmem %s1, 256
  %v2528 = vld [vmem:[%s2527] sm:$0xff]
  %v2529 = vld [vmem:[%s2527 + $0x8] sm:$0xff]
  %v2530 = vld [vmem:[%s2527 + $0x10] sm:$0xff]
  %v2531 = vld [vmem:[%s2527 + $0x18] sm:$0xff]
  %v2532 = vld [vmem:[%s2527 + $0x20] sm:$0xff]
  %v2533 = vld [vmem:[%s2527 + $0x28] sm:$0xff]
  %v2534 = vld [vmem:[%s2527 + $0x30] sm:$0xff]
  %v2535 = vld [vmem:[%s2527 + $0x38] sm:$0xff]
  %v2536 = vld [vmem:[%s2527 + $0x40] sm:$0xff]
  %v2537 = vld [vmem:[%s2527 + $0x48] sm:$0xff]
  %v2538 = vld [vmem:[%s2527 + $0x50] sm:$0xff]
  %v2539 = vld [vmem:[%s2527 + $0x58] sm:$0xff]
  %v2540 = vld [vmem:[%s2527 + $0x60] sm:$0xff]
  %v2541 = vld [vmem:[%s2527 + $0x68] sm:$0xff]
  %v2542 = vld [vmem:[%s2527 + $0x70] sm:$0xff]
  %v2543 = vld [vmem:[%s2527 + $0x78] sm:$0xff]
  %v2544 = vld [vmem:[%s2527 + $0x80] sm:$0xff]
  %v2545 = vld [vmem:[%s2527 + $0x88] sm:$0xff]
  %v2546 = vld [vmem:[%s2527 + $0x90] sm:$0xff]
  %v2547 = vld [vmem:[%s2527 + $0x98] sm:$0xff]
  %v2548 = vld [vmem:[%s2527 + $0xa0] sm:$0xff]
  %v2549 = vld [vmem:[%s2527 + $0xa8] sm:$0xff]
  %v2550 = vld [vmem:[%s2527 + $0xb0] sm:$0xff]
  %v2551 = vld [vmem:[%s2527 + $0xb8] sm:$0xff]
  %v2552 = vld [vmem:[%s2527 + $0xc0] sm:$0xff]
  %v2553 = vld [vmem:[%s2527 + $0xc8] sm:$0xff]
  %v2554 = vld [vmem:[%s2527 + $0xd0] sm:$0xff]
  %v2555 = vld [vmem:[%s2527 + $0xd8] sm:$0xff]
  %v2556 = vld [vmem:[%s2527 + $0xe0] sm:$0xff]
  %v2557 = vld [vmem:[%s2527 + $0xe8] sm:$0xff]
  %v2558 = vld [vmem:[%s2527 + $0xf0] sm:$0xff]
  %v2559 = vld [vmem:[%s2527 + $0xf8] sm:$0xff]
  %s2560 = scalar_lea.vmem %s2, 256
  %v2561 = vld [vmem:[%s2560] sm:$0xff]
  %v2562 = vld [vmem:[%s2560 + $0x8] sm:$0xff]
  %v2563 = vld [vmem:[%s2560 + $0x10] sm:$0xff]
  %v2564 = vld [vmem:[%s2560 + $0x18] sm:$0xff]
  %v2565 = vld [vmem:[%s2560 + $0x20] sm:$0xff]
  %v2566 = vld [vmem:[%s2560 + $0x28] sm:$0xff]
  %v2567 = vld [vmem:[%s2560 + $0x30] sm:$0xff]
  %v2568 = vld [vmem:[%s2560 + $0x38] sm:$0xff]
  %v2569 = vld [vmem:[%s2560 + $0x40] sm:$0xff]
  %v2570 = vld [vmem:[%s2560 + $0x48] sm:$0xff]
  %v2571 = vld [vmem:[%s2560 + $0x50] sm:$0xff]
  %v2572 = vld [vmem:[%s2560 + $0x58] sm:$0xff]
  %v2573 = vld [vmem:[%s2560 + $0x60] sm:$0xff]
  %v2574 = vld [vmem:[%s2560 + $0x68] sm:$0xff]
  %v2575 = vld [vmem:[%s2560 + $0x70] sm:$0xff]
  %v2576 = vld [vmem:[%s2560 + $0x78] sm:$0xff]
  %v2577 = vld [vmem:[%s2560 + $0x80] sm:$0xff]
  %v2578 = vld [vmem:[%s2560 + $0x88] sm:$0xff]
  %v2579 = vld [vmem:[%s2560 + $0x90] sm:$0xff]
  %v2580 = vld [vmem:[%s2560 + $0x98] sm:$0xff]
  %v2581 = vld [vmem:[%s2560 + $0xa0] sm:$0xff]
  %v2582 = vld [vmem:[%s2560 + $0xa8] sm:$0xff]
  %v2583 = vld [vmem:[%s2560 + $0xb0] sm:$0xff]
  %v2584 = vld [vmem:[%s2560 + $0xb8] sm:$0xff]
  %v2585 = vld [vmem:[%s2560 + $0xc0] sm:$0xff]
  %v2586 = vld [vmem:[%s2560 + $0xc8] sm:$0xff]
  %v2587 = vld [vmem:[%s2560 + $0xd0] sm:$0xff]
  %v2588 = vld [vmem:[%s2560 + $0xd8] sm:$0xff]
  %v2589 = vld [vmem:[%s2560 + $0xe0] sm:$0xff]
  %v2590 = vld [vmem:[%s2560 + $0xe8] sm:$0xff]
  %v2591 = vld [vmem:[%s2560 + $0xf0] sm:$0xff]
  %v2592 = vld [vmem:[%s2560 + $0xf8] sm:$0xff]
  %s2593 = scalar_lea.vmem %s3, 4
  %v2594 = vld [vmem:[%s2593] sm:$0xf]
  %v2595 = vld [vmem:[#allocation4] sm:$0xf]
  %v2596 = vld [vmem:[#allocation4 + $0x4] sm:$0xf]
  %v2597 = vld [vmem:[#allocation4 + $0x8] sm:$0xf]
  %v2598 = vld [vmem:[#allocation4 + $0xc] sm:$0xf]
  %v2599 = vld [vmem:[#allocation4 + $0x10] sm:$0xf]
  %v2600 = vld [vmem:[#allocation4 + $0x14] sm:$0xf]
  %v2601 = vld [vmem:[#allocation4 + $0x18] sm:$0xf]
  %v2602 = vld [vmem:[#allocation4 + $0x1c] sm:$0xf]
  %v2603 = vld [vmem:[#allocation4 + $0x20] sm:$0xf]
  %v2604 = vld [vmem:[#allocation4 + $0x24] sm:$0xf]
  %v2605 = vld [vmem:[#allocation4 + $0x28] sm:$0xf]
  %v2606 = vld [vmem:[#allocation4 + $0x2c] sm:$0xf]
  %v2607 = vld [vmem:[#allocation4 + $0x30] sm:$0xf]
  %v2608 = vld [vmem:[#allocation4 + $0x34] sm:$0xf]
  %v2609 = vld [vmem:[#allocation4 + $0x38] sm:$0xf]
  %v2610 = vld [vmem:[#allocation4 + $0x3c] sm:$0xf]
  %v2627 = vunpack.c.l.b16 %v2595
  %v2628 = vunpack.c.l.b16 %v2596
  %v2629 = vunpack.c.l.b16 %v2597
  %v2630 = vunpack.c.l.b16 %v2598
  %v2631 = vunpack.c.l.b16 %v2599
  %v2632 = vunpack.c.l.b16 %v2600
  %v2633 = vunpack.c.l.b16 %v2601
  %v2634 = vunpack.c.l.b16 %v2602
  %v2635 = vunpack.c.l.b16 %v2603
  %v2636 = vunpack.c.l.b16 %v2604
  %v2637 = vunpack.c.l.b16 %v2605
  %v2638 = vunpack.c.l.b16 %v2606
  %v2639 = vunpack.c.l.b16 %v2607
  %v2640 = vunpack.c.l.b16 %v2608
  %v2641 = vunpack.c.l.b16 %v2609
  %v2642 = vunpack.c.l.b16 %v2610
  %v2643 = vpack.c.b16 %v2628, %v2627
  %v2644 = vpack.c.b16 %v2630, %v2629
  %v2645 = vpack.c.b16 %v2632, %v2631
  %v2646 = vpack.c.b16 %v2634, %v2633
  %v2647 = vpack.c.b16 %v2636, %v2635
  %v2648 = vpack.c.b16 %v2638, %v2637
  %v2649 = vpack.c.b16 %v2640, %v2639
  %v2650 = vpack.c.b16 %v2642, %v2641
  %v2691 = vunpack.c.l.b16 %v2528
  %v2692 = vunpack.c.h.b16 %v2528
  %v2693 = vunpack.c.l.b16 %v2529
  %v2694 = vunpack.c.h.b16 %v2529
  %v2695 = vunpack.c.l.b16 %v2530
  %v2696 = vunpack.c.h.b16 %v2530
  %v2697 = vunpack.c.l.b16 %v2531
  %v2698 = vunpack.c.h.b16 %v2531
  %v2699 = vunpack.c.l.b16 %v2532
  %v2700 = vunpack.c.h.b16 %v2532
  %v2701 = vunpack.c.l.b16 %v2533
  %v2702 = vunpack.c.h.b16 %v2533
  %v2703 = vunpack.c.l.b16 %v2534
  %v2704 = vunpack.c.h.b16 %v2534
  %v2705 = vunpack.c.l.b16 %v2535
  %v2706 = vunpack.c.h.b16 %v2535
  %v2707 = vunpack.c.l.b16 %v2536
  %v2708 = vunpack.c.h.b16 %v2536
  %v2709 = vunpack.c.l.b16 %v2537
  %v2710 = vunpack.c.h.b16 %v2537
  %v2711 = vunpack.c.l.b16 %v2538
  %v2712 = vunpack.c.h.b16 %v2538
  %v2713 = vunpack.c.l.b16 %v2539
  %v2714 = vunpack.c.h.b16 %v2539
  %v2715 = vunpack.c.l.b16 %v2540
  %v2716 = vunpack.c.h.b16 %v2540
  %v2717 = vunpack.c.l.b16 %v2541
  %v2718 = vunpack.c.h.b16 %v2541
  %v2719 = vunpack.c.l.b16 %v2542
  %v2720 = vunpack.c.h.b16 %v2542
  %v2721 = vunpack.c.l.b16 %v2543
  %v2722 = vunpack.c.h.b16 %v2543
  %v2723 = vunpack.c.l.b16 %v2544
  %v2724 = vunpack.c.h.b16 %v2544
  %v2725 = vunpack.c.l.b16 %v2545
  %v2726 = vunpack.c.h.b16 %v2545
  %v2727 = vunpack.c.l.b16 %v2546
  %v2728 = vunpack.c.h.b16 %v2546
  %v2729 = vunpack.c.l.b16 %v2547
  %v2730 = vunpack.c.h.b16 %v2547
  %v2731 = vunpack.c.l.b16 %v2548
  %v2732 = vunpack.c.h.b16 %v2548
  %v2733 = vunpack.c.l.b16 %v2549
  %v2734 = vunpack.c.h.b16 %v2549
  %v2735 = vunpack.c.l.b16 %v2550
  %v2736 = vunpack.c.h.b16 %v2550
  %v2737 = vunpack.c.l.b16 %v2551
  %v2738 = vunpack.c.h.b16 %v2551
  %v2739 = vunpack.c.l.b16 %v2552
  %v2740 = vunpack.c.h.b16 %v2552
  %v2741 = vunpack.c.l.b16 %v2553
  %v2742 = vunpack.c.h.b16 %v2553
  %v2743 = vunpack.c.l.b16 %v2554
  %v2744 = vunpack.c.h.b16 %v2554
  %v2745 = vunpack.c.l.b16 %v2555
  %v2746 = vunpack.c.h.b16 %v2555
  %v2747 = vunpack.c.l.b16 %v2556
  %v2748 = vunpack.c.h.b16 %v2556
  %v2749 = vunpack.c.l.b16 %v2557
  %v2750 = vunpack.c.h.b16 %v2557
  %v2751 = vunpack.c.l.b16 %v2558
  %v2752 = vunpack.c.h.b16 %v2558
  %v2753 = vunpack.c.l.b16 %v2559
  %v2754 = vunpack.c.h.b16 %v2559
  %v2755 = vpack.c.b16 %v2695, %v2691
  %v2756 = vpack.c.b16 %v2696, %v2692
  %v2757 = vpack.c.b16 %v2697, %v2693
  %v2758 = vpack.c.b16 %v2698, %v2694
  %v2759 = vpack.c.b16 %v2703, %v2699
  %v2760 = vpack.c.b16 %v2704, %v2700
  %v2761 = vpack.c.b16 %v2705, %v2701
  %v2762 = vpack.c.b16 %v2706, %v2702
  %v2763 = vpack.c.b16 %v2711, %v2707
  %v2764 = vpack.c.b16 %v2712, %v2708
  %v2765 = vpack.c.b16 %v2713, %v2709
  %v2766 = vpack.c.b16 %v2714, %v2710
  %v2767 = vpack.c.b16 %v2719, %v2715
  %v2768 = vpack.c.b16 %v2720, %v2716
  %v2769 = vpack.c.b16 %v2721, %v2717
  %v2770 = vpack.c.b16 %v2722, %v2718
  %v2771 = vpack.c.b16 %v2727, %v2723
  %v2772 = vpack.c.b16 %v2728, %v2724
  %v2773 = vpack.c.b16 %v2729, %v2725
  %v2774 = vpack.c.b16 %v2730, %v2726
  %v2775 = vpack.c.b16 %v2735, %v2731
  %v2776 = vpack.c.b16 %v2736, %v2732
  %v2777 = vpack.c.b16 %v2737, %v2733
  %v2778 = vpack.c.b16 %v2738, %v2734
  %v2779 = vpack.c.b16 %v2743, %v2739
  %v2780 = vpack.c.b16 %v2744, %v2740
  %v2781 = vpack.c.b16 %v2745, %v2741
  %v2782 = vpack.c.b16 %v2746, %v2742
  %v2783 = vpack.c.b16 %v2751, %v2747
  %v2784 = vpack.c.b16 %v2752, %v2748
  %v2785 = vpack.c.b16 %v2753, %v2749
  %v2786 = vpack.c.b16 %v2754, %v2750
  %2819 = vmatpush.bf16.msra.mxu0 %v2783
  %2820 = vmatpush.bf16.msra.mxu0 %v2779
  %2821 = vmatpush.bf16.msra.mxu0 %v2775
  %2822 = vmatpush.bf16.msra.mxu0 %v2771
  %2823 = vmatpush.bf16.msra.mxu0 %v2767
  %2824 = vmatpush.bf16.msra.mxu0 %v2763
  %2825 = vmatpush.bf16.msra.mxu0 %v2759
  %2826 = vmatpush.bf16.msra.mxu0 %v2755
  %2827 = vmatmul.bf16.gmra.mxu0 %v2643
  %v2828 = vpop.f32.mrf.mxu0
  %v2829 = vadd.f32 0.0, %v2828
  %v2830 = vpop.f32.mrf.mxu0
  %v2831 = vadd.f32 0.0, %v2830
  %2832 = vmatmul.bf16.gmra.mxu0 %v2644
  %v2833 = vpop.f32.mrf.mxu0
  %v2834 = vadd.f32 0.0, %v2833
  %v2835 = vpop.f32.mrf.mxu0
  %v2836 = vadd.f32 0.0, %v2835
  %2837 = vmatmul.bf16.gmra.mxu0 %v2645
  %v2838 = vpop.f32.mrf.mxu0
  %v2839 = vadd.f32 0.0, %v2838
  %v2840 = vpop.f32.mrf.mxu0
  %v2841 = vadd.f32 0.0, %v2840
  %2842 = vmatmul.bf16.gmra.mxu0 %v2646
  %v2843 = vpop.f32.mrf.mxu0
  %v2844 = vadd.f32 0.0, %v2843
  %v2845 = vpop.f32.mrf.mxu0
  %v2846 = vadd.f32 0.0, %v2845
  %2847 = vmatmul.bf16.gmra.mxu0 %v2647
  %v2848 = vpop.f32.mrf.mxu0
  %v2849 = vadd.f32 0.0, %v2848
  %v2850 = vpop.f32.mrf.mxu0
  %v2851 = vadd.f32 0.0, %v2850
  %2852 = vmatmul.bf16.gmra.mxu0 %v2648
  %v2853 = vpop.f32.mrf.mxu0
  %v2854 = vadd.f32 0.0, %v2853
  %v2855 = vpop.f32.mrf.mxu0
  %v2856 = vadd.f32 0.0, %v2855
  %2857 = vmatmul.bf16.gmra.mxu0 %v2649
  %v2858 = vpop.f32.mrf.mxu0
  %v2859 = vadd.f32 0.0, %v2858
  %v2860 = vpop.f32.mrf.mxu0
  %v2861 = vadd.f32 0.0, %v2860
  %2862 = vmatmul.bf16.gmra.mxu0 %v2650
  %v2863 = vpop.f32.mrf.mxu0
  %v2864 = vadd.f32 0.0, %v2863
  %v2865 = vpop.f32.mrf.mxu0
  %v2866 = vadd.f32 0.0, %v2865
  %2867 = vdwg.mxu0
  %2868 = vmatpush.bf16.msra.mxu0 %v2784
  %2869 = vmatpush.bf16.msra.mxu0 %v2780
  %2870 = vmatpush.bf16.msra.mxu0 %v2776
  %2871 = vmatpush.bf16.msra.mxu0 %v2772
  %2872 = vmatpush.bf16.msra.mxu0 %v2768
  %2873 = vmatpush.bf16.msra.mxu0 %v2764
  %2874 = vmatpush.bf16.msra.mxu0 %v2760
  %2875 = vmatpush.bf16.msra.mxu0 %v2756
  %2876 = vmatmul.bf16.gmra.mxu0 %v2643
  %v2877 = vpop.f32.mrf.mxu0
  %v2878 = vadd.f32 0.0, %v2877
  %v2879 = vpop.f32.mrf.mxu0
  %v2880 = vadd.f32 0.0, %v2879
  %2881 = vmatmul.bf16.gmra.mxu0 %v2644
  %v2882 = vpop.f32.mrf.mxu0
  %v2883 = vadd.f32 0.0, %v2882
  %v2884 = vpop.f32.mrf.mxu0
  %v2885 = vadd.f32 0.0, %v2884
  %2886 = vmatmul.bf16.gmra.mxu0 %v2645
  %v2887 = vpop.f32.mrf.mxu0
  %v2888 = vadd.f32 0.0, %v2887
  %v2889 = vpop.f32.mrf.mxu0
  %v2890 = vadd.f32 0.0, %v2889
  %2891 = vmatmul.bf16.gmra.mxu0 %v2646
  %v2892 = vpop.f32.mrf.mxu0
  %v2893 = vadd.f32 0.0, %v2892
  %v2894 = vpop.f32.mrf.mxu0
  %v2895 = vadd.f32 0.0, %v2894
  %2896 = vmatmul.bf16.gmra.mxu0 %v2647
  %v2897 = vpop.f32.mrf.mxu0
  %v2898 = vadd.f32 0.0, %v2897
  %v2899 = vpop.f32.mrf.mxu0
  %v2900 = vadd.f32 0.0, %v2899
  %2901 = vmatmul.bf16.gmra.mxu0 %v2648
  %v2902 = vpop.f32.mrf.mxu0
  %v2903 = vadd.f32 0.0, %v2902
  %v2904 = vpop.f32.mrf.mxu0
  %v2905 = vadd.f32 0.0, %v2904
  %2906 = vmatmul.bf16.gmra.mxu0 %v2649
  %v2907 = vpop.f32.mrf.mxu0
  %v2908 = vadd.f32 0.0, %v2907
  %v2909 = vpop.f32.mrf.mxu0
  %v2910 = vadd.f32 0.0, %v2909
  %2911 = vmatmul.bf16.gmra.mxu0 %v2650
  %v2912 = vpop.f32.mrf.mxu0
  %v2913 = vadd.f32 0.0, %v2912
  %v2914 = vpop.f32.mrf.mxu0
  %v2915 = vadd.f32 0.0, %v2914
  %2916 = vdwg.mxu0
  %2917 = vmatpush.bf16.msra.mxu0 %v2785
  %2918 = vmatpush.bf16.msra.mxu0 %v2781
  %2919 = vmatpush.bf16.msra.mxu0 %v2777
  %2920 = vmatpush.bf16.msra.mxu0 %v2773
  %2921 = vmatpush.bf16.msra.mxu0 %v2769
  %2922 = vmatpush.bf16.msra.mxu0 %v2765
  %2923 = vmatpush.bf16.msra.mxu0 %v2761
  %2924 = vmatpush.bf16.msra.mxu0 %v2757
  %2925 = vmatmul.bf16.gmra.mxu0 %v2643
  %v2926 = vpop.f32.mrf.mxu0
  %v2927 = vadd.f32 0.0, %v2926
  %v2928 = vpop.f32.mrf.mxu0
  %v2929 = vadd.f32 0.0, %v2928
  %2930 = vmatmul.bf16.gmra.mxu0 %v2644
  %v2931 = vpop.f32.mrf.mxu0
  %v2932 = vadd.f32 0.0, %v2931
  %v2933 = vpop.f32.mrf.mxu0
  %v2934 = vadd.f32 0.0, %v2933
  %2935 = vmatmul.bf16.gmra.mxu0 %v2645
  %v2936 = vpop.f32.mrf.mxu0
  %v2937 = vadd.f32 0.0, %v2936
  %v2938 = vpop.f32.mrf.mxu0
  %v2939 = vadd.f32 0.0, %v2938
  %2940 = vmatmul.bf16.gmra.mxu0 %v2646
  %v2941 = vpop.f32.mrf.mxu0
  %v2942 = vadd.f32 0.0, %v2941
  %v2943 = vpop.f32.mrf.mxu0
  %v2944 = vadd.f32 0.0, %v2943
  %2945 = vmatmul.bf16.gmra.mxu0 %v2647
  %v2946 = vpop.f32.mrf.mxu0
  %v2947 = vadd.f32 0.0, %v2946
  %v2948 = vpop.f32.mrf.mxu0
  %v2949 = vadd.f32 0.0, %v2948
  %2950 = vmatmul.bf16.gmra.mxu0 %v2648
  %v2951 = vpop.f32.mrf.mxu0
  %v2952 = vadd.f32 0.0, %v2951
  %v2953 = vpop.f32.mrf.mxu0
  %v2954 = vadd.f32 0.0, %v2953
  %2955 = vmatmul.bf16.gmra.mxu0 %v2649
  %v2956 = vpop.f32.mrf.mxu0
  %v2957 = vadd.f32 0.0, %v2956
  %v2958 = vpop.f32.mrf.mxu0
  %v2959 = vadd.f32 0.0, %v2958
  %2960 = vmatmul.bf16.gmra.mxu0 %v2650
  %v2961 = vpop.f32.mrf.mxu0
  %v2962 = vadd.f32 0.0, %v2961
  %v2963 = vpop.f32.mrf.mxu0
  %v2964 = vadd.f32 0.0, %v2963
  %2965 = vdwg.mxu0
  %2966 = vmatpush.bf16.msra.mxu0 %v2786
  %2967 = vmatpush.bf16.msra.mxu0 %v2782
  %2968 = vmatpush.bf16.msra.mxu0 %v2778
  %2969 = vmatpush.bf16.msra.mxu0 %v2774
  %2970 = vmatpush.bf16.msra.mxu0 %v2770
  %2971 = vmatpush.bf16.msra.mxu0 %v2766
  %2972 = vmatpush.bf16.msra.mxu0 %v2762
  %2973 = vmatpush.bf16.msra.mxu0 %v2758
  %2974 = vmatmul.bf16.gmra.mxu0 %v2643
  %v2975 = vpop.f32.mrf.mxu0
  %v2976 = vadd.f32 0.0, %v2975
  %v2977 = vpop.f32.mrf.mxu0
  %v2978 = vadd.f32 0.0, %v2977
  %2979 = vmatmul.bf16.gmra.mxu0 %v2644
  %v2980 = vpop.f32.mrf.mxu0
  %v2981 = vadd.f32 0.0, %v2980
  %v2982 = vpop.f32.mrf.mxu0
  %v2983 = vadd.f32 0.0, %v2982
  %2984 = vmatmul.bf16.gmra.mxu0 %v2645
  %v2985 = vpop.f32.mrf.mxu0
  %v2986 = vadd.f32 0.0, %v2985
  %v2987 = vpop.f32.mrf.mxu0
  %v2988 = vadd.f32 0.0, %v2987
  %2989 = vmatmul.bf16.gmra.mxu0 %v2646
  %v2990 = vpop.f32.mrf.mxu0
  %v2991 = vadd.f32 0.0, %v2990
  %v2992 = vpop.f32.mrf.mxu0
  %v2993 = vadd.f32 0.0, %v2992
  %2994 = vmatmul.bf16.gmra.mxu0 %v2647
  %v2995 = vpop.f32.mrf.mxu0
  %v2996 = vadd.f32 0.0, %v2995
  %v2997 = vpop.f32.mrf.mxu0
  %v2998 = vadd.f32 0.0, %v2997
  %2999 = vmatmul.bf16.gmra.mxu0 %v2648
  %v3000 = vpop.f32.mrf.mxu0
  %v3001 = vadd.f32 0.0, %v3000
  %v3002 = vpop.f32.mrf.mxu0
  %v3003 = vadd.f32 0.0, %v3002
  %3004 = vmatmul.bf16.gmra.mxu0 %v2649
  %v3005 = vpop.f32.mrf.mxu0
  %v3006 = vadd.f32 0.0, %v3005
  %v3007 = vpop.f32.mrf.mxu0
  %v3008 = vadd.f32 0.0, %v3007
  %3009 = vmatmul.bf16.gmra.mxu0 %v2650
  %v3010 = vpop.f32.mrf.mxu0
  %v3011 = vadd.f32 0.0, %v3010
  %v3012 = vpop.f32.mrf.mxu0
  %v3013 = vadd.f32 0.0, %v3012
  %3014 = vdwg.mxu0
  %v3016 = vperm.slane %v2594, 0
  %v3017 = vperm.slane %v2594, 1
  %v3018 = vperm.slane %v2594, 2
  %v3019 = vperm.slane %v2594, 3
  %v3024 = vadd.f32 %v2829, %v3016
  %v3025 = vadd.f32 %v2878, %v3017
  %v3026 = vadd.f32 %v2927, %v3018
  %v3027 = vadd.f32 %v2976, %v3019
  %v3028 = vadd.f32 %v2831, %v3016
  %v3029 = vadd.f32 %v2880, %v3017
  %v3030 = vadd.f32 %v2929, %v3018
  %v3031 = vadd.f32 %v2978, %v3019
  %v3032 = vadd.f32 %v2834, %v3016
  %v3033 = vadd.f32 %v2883, %v3017
  %v3034 = vadd.f32 %v2932, %v3018
  %v3035 = vadd.f32 %v2981, %v3019
  %v3036 = vadd.f32 %v2836, %v3016
  %v3037 = vadd.f32 %v2885, %v3017
  %v3038 = vadd.f32 %v2934, %v3018
  %v3039 = vadd.f32 %v2983, %v3019
  %v3040 = vadd.f32 %v2839, %v3016
  %v3041 = vadd.f32 %v2888, %v3017
  %v3042 = vadd.f32 %v2937, %v3018
  %v3043 = vadd.f32 %v2986, %v3019
  %v3044 = vadd.f32 %v2841, %v3016
  %v3045 = vadd.f32 %v2890, %v3017
  %v3046 = vadd.f32 %v2939, %v3018
  %v3047 = vadd.f32 %v2988, %v3019
  %v3048 = vadd.f32 %v2844, %v3016
  %v3049 = vadd.f32 %v2893, %v3017
  %v3050 = vadd.f32 %v2942, %v3018
  %v3051 = vadd.f32 %v2991, %v3019
  %v3052 = vadd.f32 %v2846, %v3016
  %v3053 = vadd.f32 %v2895, %v3017
  %v3054 = vadd.f32 %v2944, %v3018
  %v3055 = vadd.f32 %v2993, %v3019
  %v3056 = vadd.f32 %v2849, %v3016
  %v3057 = vadd.f32 %v2898, %v3017
  %v3058 = vadd.f32 %v2947, %v3018
  %v3059 = vadd.f32 %v2996, %v3019
  %v3060 = vadd.f32 %v2851, %v3016
  %v3061 = vadd.f32 %v2900, %v3017
  %v3062 = vadd.f32 %v2949, %v3018
  %v3063 = vadd.f32 %v2998, %v3019
  %v3064 = vadd.f32 %v2854, %v3016
  %v3065 = vadd.f32 %v2903, %v3017
  %v3066 = vadd.f32 %v2952, %v3018
  %v3067 = vadd.f32 %v3001, %v3019
  %v3068 = vadd.f32 %v2856, %v3016
  %v3069 = vadd.f32 %v2905, %v3017
  %v3070 = vadd.f32 %v2954, %v3018
  %v3071 = vadd.f32 %v3003, %v3019
  %v3072 = vadd.f32 %v2859, %v3016
  %v3073 = vadd.f32 %v2908, %v3017
  %v3074 = vadd.f32 %v2957, %v3018
  %v3075 = vadd.f32 %v3006, %v3019
  %v3076 = vadd.f32 %v2861, %v3016
  %v3077 = vadd.f32 %v2910, %v3017
  %v3078 = vadd.f32 %v2959, %v3018
  %v3079 = vadd.f32 %v3008, %v3019
  %v3080 = vadd.f32 %v2864, %v3016
  %v3081 = vadd.f32 %v2913, %v3017
  %v3082 = vadd.f32 %v2962, %v3018
  %v3083 = vadd.f32 %v3011, %v3019
  %v3084 = vadd.f32 %v2866, %v3016
  %v3085 = vadd.f32 %v2915, %v3017
  %v3086 = vadd.f32 %v2964, %v3018
  %v3087 = vadd.f32 %v3013, %v3019
  %v3088 = vpack.c.bf16 %v3025, %v3024
  %v3089 = vpack.c.bf16 %v3027, %v3026
  %v3090 = vpack.c.bf16 %v3029, %v3028
  %v3091 = vpack.c.bf16 %v3031, %v3030
  %v3092 = vpack.c.bf16 %v3033, %v3032
  %v3093 = vpack.c.bf16 %v3035, %v3034
  %v3094 = vpack.c.bf16 %v3037, %v3036
  %v3095 = vpack.c.bf16 %v3039, %v3038
  %v3096 = vpack.c.bf16 %v3041, %v3040
  %v3097 = vpack.c.bf16 %v3043, %v3042
  %v3098 = vpack.c.bf16 %v3045, %v3044
  %v3099 = vpack.c.bf16 %v3047, %v3046
  %v3100 = vpack.c.bf16 %v3049, %v3048
  %v3101 = vpack.c.bf16 %v3051, %v3050
  %v3102 = vpack.c.bf16 %v3053, %v3052
  %v3103 = vpack.c.bf16 %v3055, %v3054
  %v3104 = vpack.c.bf16 %v3057, %v3056
  %v3105 = vpack.c.bf16 %v3059, %v3058
  %v3106 = vpack.c.bf16 %v3061, %v3060
  %v3107 = vpack.c.bf16 %v3063, %v3062
  %v3108 = vpack.c.bf16 %v3065, %v3064
  %v3109 = vpack.c.bf16 %v3067, %v3066
  %v3110 = vpack.c.bf16 %v3069, %v3068
  %v3111 = vpack.c.bf16 %v3071, %v3070
  %v3112 = vpack.c.bf16 %v3073, %v3072
  %v3113 = vpack.c.bf16 %v3075, %v3074
  %v3114 = vpack.c.bf16 %v3077, %v3076
  %v3115 = vpack.c.bf16 %v3079, %v3078
  %v3116 = vpack.c.bf16 %v3081, %v3080
  %v3117 = vpack.c.bf16 %v3083, %v3082
  %v3118 = vpack.c.bf16 %v3085, %v3084
  %v3119 = vpack.c.bf16 %v3087, %v3086
  %3120 = vst [vmem:[#allocation5] sm:$0xff] %v3088
  %3121 = vst [vmem:[#allocation5 + $0x8] sm:$0xff] %v3089
  %3122 = vst [vmem:[#allocation5 + $0x10] sm:$0xff] %v3090
  %3123 = vst [vmem:[#allocation5 + $0x18] sm:$0xff] %v3091
  %3124 = vst [vmem:[#allocation5 + $0x20] sm:$0xff] %v3092
  %3125 = vst [vmem:[#allocation5 + $0x28] sm:$0xff] %v3093
  %3126 = vst [vmem:[#allocation5 + $0x30] sm:$0xff] %v3094
  %3127 = vst [vmem:[#allocation5 + $0x38] sm:$0xff] %v3095
  %3128 = vst [vmem:[#allocation5 + $0x40] sm:$0xff] %v3096
  %3129 = vst [vmem:[#allocation5 + $0x48] sm:$0xff] %v3097
  %3130 = vst [vmem:[#allocation5 + $0x50] sm:$0xff] %v3098
  %3131 = vst [vmem:[#allocation5 + $0x58] sm:$0xff] %v3099
  %3132 = vst [vmem:[#allocation5 + $0x60] sm:$0xff] %v3100
  %3133 = vst [vmem:[#allocation5 + $0x68] sm:$0xff] %v3101
  %3134 = vst [vmem:[#allocation5 + $0x70] sm:$0xff] %v3102
  %3135 = vst [vmem:[#allocation5 + $0x78] sm:$0xff] %v3103
  %3136 = vst [vmem:[#allocation5 + $0x80] sm:$0xff] %v3104
  %3137 = vst [vmem:[#allocation5 + $0x88] sm:$0xff] %v3105
  %3138 = vst [vmem:[#allocation5 + $0x90] sm:$0xff] %v3106
  %3139 = vst [vmem:[#allocation5 + $0x98] sm:$0xff] %v3107
  %3140 = vst [vmem:[#allocation5 + $0xa0] sm:$0xff] %v3108
  %3141 = vst [vmem:[#allocation5 + $0xa8] sm:$0xff] %v3109
  %3142 = vst [vmem:[#allocation5 + $0xb0] sm:$0xff] %v3110
  %3143 = vst [vmem:[#allocation5 + $0xb8] sm:$0xff] %v3111
  %3144 = vst [vmem:[#allocation5 + $0xc0] sm:$0xff] %v3112
  %3145 = vst [vmem:[#allocation5 + $0xc8] sm:$0xff] %v3113
  %3146 = vst [vmem:[#allocation5 + $0xd0] sm:$0xff] %v3114
  %3147 = vst [vmem:[#allocation5 + $0xd8] sm:$0xff] %v3115
  %3148 = vst [vmem:[#allocation5 + $0xe0] sm:$0xff] %v3116
  %3149 = vst [vmem:[#allocation5 + $0xe8] sm:$0xff] %v3117
  %3150 = vst [vmem:[#allocation5 + $0xf0] sm:$0xff] %v3118
  %3151 = vst [vmem:[#allocation5 + $0xf8] sm:$0xff] %v3119
  %s3152 = scalar_lea.vmem [#allocation2], 16
  %v3153 = vld [vmem:[%s3152] sm:$0xff]
  %v3154 = vld [vmem:[%s3152 + $0x8] sm:$0xff]
  %s3155 = scalar_lea.vmem [#allocation3], 16
  %v3156 = vld [vmem:[%s3155] sm:$0xff]
  %v3157 = vld [vmem:[%s3155 + $0x8] sm:$0xff]
  %v3158 = vld [vmem:[#allocation5] sm:$0xff]
  %v3159 = vld [vmem:[#allocation5 + $0x8] sm:$0xff]
  %v3160 = vld [vmem:[#allocation5 + $0x10] sm:$0xff]
  %v3161 = vld [vmem:[#allocation5 + $0x18] sm:$0xff]
  %v3162 = vunpack.c.l.bf16 %v3158
  %v3163 = vunpack.c.h.bf16 %v3158
  %v3164 = vunpack.c.l.bf16 %v3159
  %v3165 = vunpack.c.h.bf16 %v3159
  %v3166 = vunpack.c.l.bf16 %v3160
  %v3167 = vunpack.c.h.bf16 %v3160
  %v3168 = vunpack.c.l.bf16 %v3161
  %v3169 = vunpack.c.h.bf16 %v3161
  %v3170 = vpack.c.bf16 %v3154, %v3153
  %v3203 = vunpack.c.l.b16 %v2561
  %v3204 = vunpack.c.h.b16 %v2561
  %v3205 = vunpack.c.l.b16 %v2562
  %v3206 = vunpack.c.h.b16 %v2562
  %v3207 = vunpack.c.l.b16 %v2563
  %v3208 = vunpack.c.h.b16 %v2563
  %v3209 = vunpack.c.l.b16 %v2564
  %v3210 = vunpack.c.h.b16 %v2564
  %v3211 = vunpack.c.l.b16 %v2565
  %v3212 = vunpack.c.h.b16 %v2565
  %v3213 = vunpack.c.l.b16 %v2566
  %v3214 = vunpack.c.h.b16 %v2566
  %v3215 = vunpack.c.l.b16 %v2567
  %v3216 = vunpack.c.h.b16 %v2567
  %v3217 = vunpack.c.l.b16 %v2568
  %v3218 = vunpack.c.h.b16 %v2568
  %v3219 = vunpack.c.l.b16 %v2569
  %v3220 = vunpack.c.h.b16 %v2569
  %v3221 = vunpack.c.l.b16 %v2570
  %v3222 = vunpack.c.h.b16 %v2570
  %v3223 = vunpack.c.l.b16 %v2571
  %v3224 = vunpack.c.h.b16 %v2571
  %v3225 = vunpack.c.l.b16 %v2572
  %v3226 = vunpack.c.h.b16 %v2572
  %v3227 = vunpack.c.l.b16 %v2573
  %v3228 = vunpack.c.h.b16 %v2573
  %v3229 = vunpack.c.l.b16 %v2574
  %v3230 = vunpack.c.h.b16 %v2574
  %v3231 = vunpack.c.l.b16 %v2575
  %v3232 = vunpack.c.h.b16 %v2575
  %v3233 = vunpack.c.l.b16 %v2576
  %v3234 = vunpack.c.h.b16 %v2576
  %v3235 = vunpack.c.l.b16 %v2577
  %v3236 = vunpack.c.h.b16 %v2577
  %v3237 = vunpack.c.l.b16 %v2578
  %v3238 = vunpack.c.h.b16 %v2578
  %v3239 = vunpack.c.l.b16 %v2579
  %v3240 = vunpack.c.h.b16 %v2579
  %v3241 = vunpack.c.l.b16 %v2580
  %v3242 = vunpack.c.h.b16 %v2580
  %v3243 = vunpack.c.l.b16 %v2581
  %v3244 = vunpack.c.h.b16 %v2581
  %v3245 = vunpack.c.l.b16 %v2582
  %v3246 = vunpack.c.h.b16 %v2582
  %v3247 = vunpack.c.l.b16 %v2583
  %v3248 = vunpack.c.h.b16 %v2583
  %v3249 = vunpack.c.l.b16 %v2584
  %v3250 = vunpack.c.h.b16 %v2584
  %v3251 = vunpack.c.l.b16 %v2585
  %v3252 = vunpack.c.h.b16 %v2585
  %v3253 = vunpack.c.l.b16 %v2586
  %v3254 = vunpack.c.h.b16 %v2586
  %v3255 = vunpack.c.l.b16 %v2587
  %v3256 = vunpack.c.h.b16 %v2587
  %v3257 = vunpack.c.l.b16 %v2588
  %v3258 = vunpack.c.h.b16 %v2588
  %v3259 = vunpack.c.l.b16 %v2589
  %v3260 = vunpack.c.h.b16 %v2589
  %v3261 = vunpack.c.l.b16 %v2590
  %v3262 = vunpack.c.h.b16 %v2590
  %v3263 = vunpack.c.l.b16 %v2591
  %v3264 = vunpack.c.h.b16 %v2591
  %v3265 = vunpack.c.l.b16 %v2592
  %v3266 = vunpack.c.h.b16 %v2592
  %v3267 = vpack.c.b16 %v3207, %v3203
  %v3268 = vpack.c.b16 %v3208, %v3204
  %v3269 = vpack.c.b16 %v3209, %v3205
  %v3270 = vpack.c.b16 %v3210, %v3206
  %v3271 = vpack.c.b16 %v3215, %v3211
  %v3272 = vpack.c.b16 %v3216, %v3212
  %v3273 = vpack.c.b16 %v3217, %v3213
  %v3274 = vpack.c.b16 %v3218, %v3214
  %v3275 = vpack.c.b16 %v3223, %v3219
  %v3276 = vpack.c.b16 %v3224, %v3220
  %v3277 = vpack.c.b16 %v3225, %v3221
  %v3278 = vpack.c.b16 %v3226, %v3222
  %v3279 = vpack.c.b16 %v3231, %v3227
  %v3280 = vpack.c.b16 %v3232, %v3228
  %v3281 = vpack.c.b16 %v3233, %v3229
  %v3282 = vpack.c.b16 %v3234, %v3230
  %v3283 = vpack.c.b16 %v3239, %v3235
  %v3284 = vpack.c.b16 %v3240, %v3236
  %v3285 = vpack.c.b16 %v3241, %v3237
  %v3286 = vpack.c.b16 %v3242, %v3238
  %v3287 = vpack.c.b16 %v3247, %v3243
  %v3288 = vpack.c.b16 %v3248, %v3244
  %v3289 = vpack.c.b16 %v3249, %v3245
  %v3290 = vpack.c.b16 %v3250, %v3246
  %v3291 = vpack.c.b16 %v3255, %v3251
  %v3292 = vpack.c.b16 %v3256, %v3252
  %v3293 = vpack.c.b16 %v3257, %v3253
  %v3294 = vpack.c.b16 %v3258, %v3254
  %v3295 = vpack.c.b16 %v3263, %v3259
  %v3296 = vpack.c.b16 %v3264, %v3260
  %v3297 = vpack.c.b16 %v3265, %v3261
  %v3298 = vpack.c.b16 %v3266, %v3262
  %3331 = vmatpush.bf16.msra.mxu0 %v3295
  %3332 = vmatpush.bf16.msra.mxu0 %v3291
  %3333 = vmatpush.bf16.msra.mxu0 %v3287
  %3334 = vmatpush.bf16.msra.mxu0 %v3283
  %3335 = vmatpush.bf16.msra.mxu0 %v3279
  %3336 = vmatpush.bf16.msra.mxu0 %v3275
  %3337 = vmatpush.bf16.msra.mxu0 %v3271
  %3338 = vmatpush.bf16.msra.mxu0 %v3267
  %3339 = vmatmul.bf16.gmra.mxu0 %v3170
  %v3340 = vpop.f32.mrf.mxu0
  %v3341 = vadd.f32 0.0, %v3340
  %v3342 = vpop.f32.mrf.mxu0
  %v3343 = vadd.f32 0.0, %v3342
  %3344 = vdwg.mxu0
  %3345 = vmatpush.bf16.msra.mxu0 %v3296
  %3346 = vmatpush.bf16.msra.mxu0 %v3292
  %3347 = vmatpush.bf16.msra.mxu0 %v3288
  %3348 = vmatpush.bf16.msra.mxu0 %v3284
  %3349 = vmatpush.bf16.msra.mxu0 %v3280
  %3350 = vmatpush.bf16.msra.mxu0 %v3276
  %3351 = vmatpush.bf16.msra.mxu0 %v3272
  %3352 = vmatpush.bf16.msra.mxu0 %v3268
  %3353 = vmatmul.bf16.gmra.mxu0 %v3170
  %v3354 = vpop.f32.mrf.mxu0
  %v3355 = vadd.f32 0.0, %v3354
  %v3356 = vpop.f32.mrf.mxu0
  %v3357 = vadd.f32 0.0, %v3356
  %3358 = vdwg.mxu0
  %3359 = vmatpush.bf16.msra.mxu0 %v3297
  %3360 = vmatpush.bf16.msra.mxu0 %v3293
  %3361 = vmatpush.bf16.msra.mxu0 %v3289
  %3362 = vmatpush.bf16.msra.mxu0 %v3285
  %3363 = vmatpush.bf16.msra.mxu0 %v3281
  %3364 = vmatpush.bf16.msra.mxu0 %v3277
  %3365 = vmatpush.bf16.msra.mxu0 %v3273
  %3366 = vmatpush.bf16.msra.mxu0 %v3269
  %3367 = vmatmul.bf16.gmra.mxu0 %v3170
  %v3368 = vpop.f32.mrf.mxu0
  %v3369 = vadd.f32 0.0, %v3368
  %v3370 = vpop.f32.mrf.mxu0
  %v3371 = vadd.f32 0.0, %v3370
  %3372 = vdwg.mxu0
  %3373 = vmatpush.bf16.msra.mxu0 %v3298
  %3374 = vmatpush.bf16.msra.mxu0 %v3294
  %3375 = vmatpush.bf16.msra.mxu0 %v3290
  %3376 = vmatpush.bf16.msra.mxu0 %v3286
  %3377 = vmatpush.bf16.msra.mxu0 %v3282
  %3378 = vmatpush.bf16.msra.mxu0 %v3278
  %3379 = vmatpush.bf16.msra.mxu0 %v3274
  %3380 = vmatpush.bf16.msra.mxu0 %v3270
  %3381 = vmatmul.bf16.gmra.mxu0 %v3170
  %v3382 = vpop.f32.mrf.mxu0
  %v3383 = vadd.f32 0.0, %v3382
  %v3384 = vpop.f32.mrf.mxu0
  %v3385 = vadd.f32 0.0, %v3384
  %3386 = vdwg.mxu0
  %v3387 = vadd.f32 %v3162, %v3341
  %v3388 = vadd.f32 %v3163, %v3355
  %v3389 = vadd.f32 %v3164, %v3369
  %v3390 = vadd.f32 %v3165, %v3383
  %v3391 = vadd.f32 %v3166, %v3343
  %v3392 = vadd.f32 %v3167, %v3357
  %v3393 = vadd.f32 %v3168, %v3371
  %v3394 = vadd.f32 %v3169, %v3385
  %v3395 = vxor.u32 %v3387, 2147483648
  %v3396 = vxor.u32 %v3391, 2147483648
  %v3397 = vmul.f32 %v3395, 1.442695
  %v3398 = vpow.pop %v3397
  %v3399 = vmul.f32 %v3396, 1.442695
  %v3400 = vpow.pop %v3399
  %v3401 = vadd.f32 %v3398, 1.0
  %v3402 = vadd.f32 %v3400, 1.0
  %v3403 = vrcp.pop %v3401
  %v3404 = vmul.f32 %v3401, %v3403
  %v3405 = vsub.f32 1.0, %v3404
  %v3406 = vmul.f32 %v3403, %v3405
  %v3407 = vadd.f32 %v3403, %v3406
  %vm3408 = vweird.f32 %v3401
  %vm3409 = vweird.f32 %v3403
  %vm3410 = vmor %vm3408, %vm3409
  %v3411 = vsel %vm3410, %v3403, %v3407
  %v3412 = vand.u32 2147483647, %v3401
  %vm3413 = vcmp.eq.f32.partialorder %v3412, 8.507059e+37
  %v3414 = vand.u32 %v3401, 2147483648
  %v3415 = vor.u32 1.1754944e-38, %v3414
  %v3416 = vsel %vm3413, %v3415, %v3411
  %v3417 = vmul.f32 1.0, %v3416
  %v3418 = vrcp.pop %v3402
  %v3419 = vmul.f32 %v3402, %v3418
  %v3420 = vsub.f32 1.0, %v3419
  %v3421 = vmul.f32 %v3418, %v3420
  %v3422 = vadd.f32 %v3418, %v3421
  %vm3423 = vweird.f32 %v3402
  %vm3424 = vweird.f32 %v3418
  %vm3425 = vmor %vm3423, %vm3424
  %v3426 = vsel %vm3425, %v3418, %v3422
  %v3427 = vand.u32 2147483647, %v3402
  %vm3428 = vcmp.eq.f32.partialorder %v3427, 8.507059e+37
  %v3429 = vand.u32 %v3402, 2147483648
  %v3430 = vor.u32 1.1754944e-38, %v3429
  %v3431 = vsel %vm3428, %v3430, %v3426
  %v3432 = vmul.f32 1.0, %v3431
  %v3433 = vxor.u32 %v3388, 2147483648
  %v3434 = vxor.u32 %v3392, 2147483648
  %v3435 = vmul.f32 %v3433, 1.442695
  %v3436 = vpow.pop %v3435
  %v3437 = vmul.f32 %v3434, 1.442695
  %v3438 = vpow.pop %v3437
  %v3439 = vadd.f32 %v3436, 1.0
  %v3440 = vadd.f32 %v3438, 1.0
  %v3441 = vrcp.pop %v3439
  %v3442 = vmul.f32 %v3439, %v3441
  %v3443 = vsub.f32 1.0, %v3442
  %v3444 = vmul.f32 %v3441, %v3443
  %v3445 = vadd.f32 %v3441, %v3444
  %vm3446 = vweird.f32 %v3439
  %vm3447 = vweird.f32 %v3441
  %vm3448 = vmor %vm3446, %vm3447
  %v3449 = vsel %vm3448, %v3441, %v3445
  %v3450 = vand.u32 2147483647, %v3439
  %vm3451 = vcmp.eq.f32.partialorder %v3450, 8.507059e+37
  %v3452 = vand.u32 %v3439, 2147483648
  %v3453 = vor.u32 1.1754944e-38, %v3452
  %v3454 = vsel %vm3451, %v3453, %v3449
  %v3455 = vmul.f32 1.0, %v3454
  %v3456 = vrcp.pop %v3440
  %v3457 = vmul.f32 %v3440, %v3456
  %v3458 = vsub.f32 1.0, %v3457
  %v3459 = vmul.f32 %v3456, %v3458
  %v3460 = vadd.f32 %v3456, %v3459
  %vm3461 = vweird.f32 %v3440
  %vm3462 = vweird.f32 %v3456
  %vm3463 = vmor %vm3461, %vm3462
  %v3464 = vsel %vm3463, %v3456, %v3460
  %v3465 = vand.u32 2147483647, %v3440
  %vm3466 = vcmp.eq.f32.partialorder %v3465, 8.507059e+37
  %v3467 = vand.u32 %v3440, 2147483648
  %v3468 = vor.u32 1.1754944e-38, %v3467
  %v3469 = vsel %vm3466, %v3468, %v3464
  %v3470 = vmul.f32 1.0, %v3469
  %v3471 = vtanh.pop %v3389
  %v3472 = vtanh.pop %v3393
  %v3473 = vxor.u32 %v3390, 2147483648
  %v3474 = vxor.u32 %v3394, 2147483648
  %v3475 = vmul.f32 %v3473, 1.442695
  %v3476 = vpow.pop %v3475
  %v3477 = vmul.f32 %v3474, 1.442695
  %v3478 = vpow.pop %v3477
  %v3479 = vadd.f32 %v3476, 1.0
  %v3480 = vadd.f32 %v3478, 1.0
  %v3481 = vrcp.pop %v3479
  %v3482 = vmul.f32 %v3479, %v3481
  %v3483 = vsub.f32 1.0, %v3482
  %v3484 = vmul.f32 %v3481, %v3483
  %v3485 = vadd.f32 %v3481, %v3484
  %vm3486 = vweird.f32 %v3479
  %vm3487 = vweird.f32 %v3481
  %vm3488 = vmor %vm3486, %vm3487
  %v3489 = vsel %vm3488, %v3481, %v3485
  %v3490 = vand.u32 2147483647, %v3479
  %vm3491 = vcmp.eq.f32.partialorder %v3490, 8.507059e+37
  %v3492 = vand.u32 %v3479, 2147483648
  %v3493 = vor.u32 1.1754944e-38, %v3492
  %v3494 = vsel %vm3491, %v3493, %v3489
  %v3495 = vmul.f32 1.0, %v3494
  %v3496 = vrcp.pop %v3480
  %v3497 = vmul.f32 %v3480, %v3496
  %v3498 = vsub.f32 1.0, %v3497
  %v3499 = vmul.f32 %v3496, %v3498
  %v3500 = vadd.f32 %v3496, %v3499
  %vm3501 = vweird.f32 %v3480
  %vm3502 = vweird.f32 %v3496
  %vm3503 = vmor %vm3501, %vm3502
  %v3504 = vsel %vm3503, %v3496, %v3500
  %v3505 = vand.u32 2147483647, %v3480
  %vm3506 = vcmp.eq.f32.partialorder %v3505, 8.507059e+37
  %v3507 = vand.u32 %v3480, 2147483648
  %v3508 = vor.u32 1.1754944e-38, %v3507
  %v3509 = vsel %vm3506, %v3508, %v3504
  %v3510 = vmul.f32 1.0, %v3509
  %v3511 = vmul.f32 %v3455, %v3156
  %v3512 = vmul.f32 %v3470, %v3157
  %v3513 = vmul.f32 %v3417, %v3471
  %v3514 = vmul.f32 %v3432, %v3472
  %v3515 = vadd.f32 %v3511, %v3513
  %v3516 = vadd.f32 %v3512, %v3514
  %v3517 = vtanh.pop %v3515
  %v3518 = vtanh.pop %v3516
  %v3519 = vmul.f32 %v3495, %v3517
  %v3520 = vmul.f32 %v3510, %v3518
  %3521 = vst [vmem:[%s4] sm:$0xff] %v3519
  %3522 = vst [vmem:[%s4 + $0x8] sm:$0xff] %v3520
  %v3523 = vld [vmem:[%s1025] sm:$0xff]
  %v3524 = vld [vmem:[%s1025 + $0x8] sm:$0xff]
  %v3525 = vld [vmem:[%s1025 + $0x10] sm:$0xff]
  %v3526 = vld [vmem:[%s1025 + $0x18] sm:$0xff]
  %v3527 = vunpack.c.l.bf16 %v3523
  %v3528 = vunpack.c.h.bf16 %v3523
  %v3529 = vunpack.c.l.bf16 %v3524
  %v3530 = vunpack.c.h.bf16 %v3524
  %v3531 = vunpack.c.l.bf16 %v3525
  %v3532 = vunpack.c.h.bf16 %v3525
  %v3533 = vunpack.c.l.bf16 %v3526
  %v3534 = vunpack.c.h.bf16 %v3526
  %v3535 = vpack.c.bf16 %v3520, %v3519
  %3536 = vmatpush.bf16.msra.mxu0 %v3295
  %3537 = vmatpush.bf16.msra.mxu0 %v3291
  %3538 = vmatpush.bf16.msra.mxu0 %v3287
  %3539 = vmatpush.bf16.msra.mxu0 %v3283
  %3540 = vmatpush.bf16.msra.mxu0 %v3279
  %3541 = vmatpush.bf16.msra.mxu0 %v3275
  %3542 = vmatpush.bf16.msra.mxu0 %v3271
  %3543 = vmatpush.bf16.msra.mxu0 %v3267
  %3544 = vmatmul.bf16.gmra.mxu0 %v3535
  %v3545 = vpop.f32.mrf.mxu0
  %v3546 = vadd.f32 0.0, %v3545
  %v3547 = vpop.f32.mrf.mxu0
  %v3548 = vadd.f32 0.0, %v3547
  %3549 = vdwg.mxu0
  %3550 = vmatpush.bf16.msra.mxu0 %v3296
  %3551 = vmatpush.bf16.msra.mxu0 %v3292
  %3552 = vmatpush.bf16.msra.mxu0 %v3288
  %3553 = vmatpush.bf16.msra.mxu0 %v3284
  %3554 = vmatpush.bf16.msra.mxu0 %v3280
  %3555 = vmatpush.bf16.msra.mxu0 %v3276
  %3556 = vmatpush.bf16.msra.mxu0 %v3272
  %3557 = vmatpush.bf16.msra.mxu0 %v3268
  %3558 = vmatmul.bf16.gmra.mxu0 %v3535
  %v3559 = vpop.f32.mrf.mxu0
  %v3560 = vadd.f32 0.0, %v3559
  %v3561 = vpop.f32.mrf.mxu0
  %v3562 = vadd.f32 0.0, %v3561
  %3563 = vdwg.mxu0
  %3564 = vmatpush.bf16.msra.mxu0 %v3297
  %3565 = vmatpush.bf16.msra.mxu0 %v3293
  %3566 = vmatpush.bf16.msra.mxu0 %v3289
  %3567 = vmatpush.bf16.msra.mxu0 %v3285
  %3568 = vmatpush.bf16.msra.mxu0 %v3281
  %3569 = vmatpush.bf16.msra.mxu0 %v3277
  %3570 = vmatpush.bf16.msra.mxu0 %v3273
  %3571 = vmatpush.bf16.msra.mxu0 %v3269
  %3572 = vmatmul.bf16.gmra.mxu0 %v3535
  %v3573 = vpop.f32.mrf.mxu0
  %v3574 = vadd.f32 0.0, %v3573
  %v3575 = vpop.f32.mrf.mxu0
  %v3576 = vadd.f32 0.0, %v3575
  %3577 = vdwg.mxu0
  %3578 = vmatpush.bf16.msra.mxu0 %v3298
  %3579 = vmatpush.bf16.msra.mxu0 %v3294
  %3580 = vmatpush.bf16.msra.mxu0 %v3290
  %3581 = vmatpush.bf16.msra.mxu0 %v3286
  %3582 = vmatpush.bf16.msra.mxu0 %v3282
  %3583 = vmatpush.bf16.msra.mxu0 %v3278
  %3584 = vmatpush.bf16.msra.mxu0 %v3274
  %3585 = vmatpush.bf16.msra.mxu0 %v3270
  %3586 = vmatmul.bf16.gmra.mxu0 %v3535
  %v3587 = vpop.f32.mrf.mxu0
  %v3588 = vadd.f32 0.0, %v3587
  %v3589 = vpop.f32.mrf.mxu0
  %v3590 = vadd.f32 0.0, %v3589
  %3591 = vdwg.mxu0
  %v3592 = vadd.f32 %v3527, %v3546
  %v3593 = vadd.f32 %v3528, %v3560
  %v3594 = vadd.f32 %v3529, %v3574
  %v3595 = vadd.f32 %v3530, %v3588
  %v3596 = vadd.f32 %v3531, %v3548
  %v3597 = vadd.f32 %v3532, %v3562
  %v3598 = vadd.f32 %v3533, %v3576
  %v3599 = vadd.f32 %v3534, %v3590
  %v3600 = vxor.u32 %v3592, 2147483648
  %v3601 = vxor.u32 %v3596, 2147483648
  %v3602 = vmul.f32 %v3600, 1.442695
  %v3603 = vpow.pop %v3602
  %v3604 = vmul.f32 %v3601, 1.442695
  %v3605 = vpow.pop %v3604
  %v3606 = vadd.f32 %v3603, 1.0
  %v3607 = vadd.f32 %v3605, 1.0
  %v3608 = vrcp.pop %v3606
  %v3609 = vmul.f32 %v3606, %v3608
  %v3610 = vsub.f32 1.0, %v3609
  %v3611 = vmul.f32 %v3608, %v3610
  %v3612 = vadd.f32 %v3608, %v3611
  %vm3613 = vweird.f32 %v3606
  %vm3614 = vweird.f32 %v3608
  %vm3615 = vmor %vm3613, %vm3614
  %v3616 = vsel %vm3615, %v3608, %v3612
  %v3617 = vand.u32 2147483647, %v3606
  %vm3618 = vcmp.eq.f32.partialorder %v3617, 8.507059e+37
  %v3619 = vand.u32 %v3606, 2147483648
  %v3620 = vor.u32 1.1754944e-38, %v3619
  %v3621 = vsel %vm3618, %v3620, %v3616
  %v3622 = vmul.f32 1.0, %v3621
  %v3623 = vrcp.pop %v3607
  %v3624 = vmul.f32 %v3607, %v3623
  %v3625 = vsub.f32 1.0, %v3624
  %v3626 = vmul.f32 %v3623, %v3625
  %v3627 = vadd.f32 %v3623, %v3626
  %vm3628 = vweird.f32 %v3607
  %vm3629 = vweird.f32 %v3623
  %vm3630 = vmor %vm3628, %vm3629
  %v3631 = vsel %vm3630, %v3623, %v3627
  %v3632 = vand.u32 2147483647, %v3607
  %vm3633 = vcmp.eq.f32.partialorder %v3632, 8.507059e+37
  %v3634 = vand.u32 %v3607, 2147483648
  %v3635 = vor.u32 1.1754944e-38, %v3634
  %v3636 = vsel %vm3633, %v3635, %v3631
  %v3637 = vmul.f32 1.0, %v3636
  %v3638 = vxor.u32 %v3593, 2147483648
  %v3639 = vxor.u32 %v3597, 2147483648
  %v3640 = vmul.f32 %v3638, 1.442695
  %v3641 = vpow.pop %v3640
  %v3642 = vmul.f32 %v3639, 1.442695
  %v3643 = vpow.pop %v3642
  %v3644 = vadd.f32 %v3641, 1.0
  %v3645 = vadd.f32 %v3643, 1.0
  %v3646 = vrcp.pop %v3644
  %v3647 = vmul.f32 %v3644, %v3646
  %v3648 = vsub.f32 1.0, %v3647
  %v3649 = vmul.f32 %v3646, %v3648
  %v3650 = vadd.f32 %v3646, %v3649
  %vm3651 = vweird.f32 %v3644
  %vm3652 = vweird.f32 %v3646
  %vm3653 = vmor %vm3651, %vm3652
  %v3654 = vsel %vm3653, %v3646, %v3650
  %v3655 = vand.u32 2147483647, %v3644
  %vm3656 = vcmp.eq.f32.partialorder %v3655, 8.507059e+37
  %v3657 = vand.u32 %v3644, 2147483648
  %v3658 = vor.u32 1.1754944e-38, %v3657
  %v3659 = vsel %vm3656, %v3658, %v3654
  %v3660 = vmul.f32 1.0, %v3659
  %v3661 = vrcp.pop %v3645
  %v3662 = vmul.f32 %v3645, %v3661
  %v3663 = vsub.f32 1.0, %v3662
  %v3664 = vmul.f32 %v3661, %v3663
  %v3665 = vadd.f32 %v3661, %v3664
  %vm3666 = vweird.f32 %v3645
  %vm3667 = vweird.f32 %v3661
  %vm3668 = vmor %vm3666, %vm3667
  %v3669 = vsel %vm3668, %v3661, %v3665
  %v3670 = vand.u32 2147483647, %v3645
  %vm3671 = vcmp.eq.f32.partialorder %v3670, 8.507059e+37
  %v3672 = vand.u32 %v3645, 2147483648
  %v3673 = vor.u32 1.1754944e-38, %v3672
  %v3674 = vsel %vm3671, %v3673, %v3669
  %v3675 = vmul.f32 1.0, %v3674
  %v3676 = vtanh.pop %v3594
  %v3677 = vtanh.pop %v3598
  %v3678 = vxor.u32 %v3595, 2147483648
  %v3679 = vxor.u32 %v3599, 2147483648
  %v3680 = vmul.f32 %v3678, 1.442695
  %v3681 = vpow.pop %v3680
  %v3682 = vmul.f32 %v3679, 1.442695
  %v3683 = vpow.pop %v3682
  %v3684 = vadd.f32 %v3681, 1.0
  %v3685 = vadd.f32 %v3683, 1.0
  %v3686 = vrcp.pop %v3684
  %v3687 = vmul.f32 %v3684, %v3686
  %v3688 = vsub.f32 1.0, %v3687
  %v3689 = vmul.f32 %v3686, %v3688
  %v3690 = vadd.f32 %v3686, %v3689
  %vm3691 = vweird.f32 %v3684
  %vm3692 = vweird.f32 %v3686
  %vm3693 = vmor %vm3691, %vm3692
  %v3694 = vsel %vm3693, %v3686, %v3690
  %v3695 = vand.u32 2147483647, %v3684
  %vm3696 = vcmp.eq.f32.partialorder %v3695, 8.507059e+37
  %v3697 = vand.u32 %v3684, 2147483648
  %v3698 = vor.u32 1.1754944e-38, %v3697
  %v3699 = vsel %vm3696, %v3698, %v3694
  %v3700 = vmul.f32 1.0, %v3699
  %v3701 = vrcp.pop %v3685
  %v3702 = vmul.f32 %v3685, %v3701
  %v3703 = vsub.f32 1.0, %v3702
  %v3704 = vmul.f32 %v3701, %v3703
  %v3705 = vadd.f32 %v3701, %v3704
  %vm3706 = vweird.f32 %v3685
  %vm3707 = vweird.f32 %v3701
  %vm3708 = vmor %vm3706, %vm3707
  %v3709 = vsel %vm3708, %v3701, %v3705
  %v3710 = vand.u32 2147483647, %v3685
  %vm3711 = vcmp.eq.f32.partialorder %v3710, 8.507059e+37
  %v3712 = vand.u32 %v3685, 2147483648
  %v3713 = vor.u32 1.1754944e-38, %v3712
  %v3714 = vsel %vm3711, %v3713, %v3709
  %v3715 = vmul.f32 1.0, %v3714
  %v3716 = vmul.f32 %v3660, %v3515
  %v3717 = vmul.f32 %v3675, %v3516
  %v3718 = vmul.f32 %v3622, %v3676
  %v3719 = vmul.f32 %v3637, %v3677
  %v3720 = vadd.f32 %v3716, %v3718
  %v3721 = vadd.f32 %v3717, %v3719
  %v3722 = vtanh.pop %v3720
  %v3723 = vtanh.pop %v3721
  %v3724 = vmul.f32 %v3700, %v3722
  %v3725 = vmul.f32 %v3715, %v3723
  %s3726 = scalar_lea.vmem %s4, 16
  %3727 = vst [vmem:[%s3726] sm:$0xff] %v3724
  %3728 = vst [vmem:[%s3726 + $0x8] sm:$0xff] %v3725
  %v3729 = vld [vmem:[%s1239] sm:$0xff]
  %v3730 = vld [vmem:[%s1239 + $0x8] sm:$0xff]
  %v3731 = vld [vmem:[%s1239 + $0x10] sm:$0xff]
  %v3732 = vld [vmem:[%s1239 + $0x18] sm:$0xff]
  %v3733 = vunpack.c.l.bf16 %v3729
  %v3734 = vunpack.c.h.bf16 %v3729
  %v3735 = vunpack.c.l.bf16 %v3730
  %v3736 = vunpack.c.h.bf16 %v3730
  %v3737 = vunpack.c.l.bf16 %v3731
  %v3738 = vunpack.c.h.bf16 %v3731
  %v3739 = vunpack.c.l.bf16 %v3732
  %v3740 = vunpack.c.h.bf16 %v3732
  %v3741 = vpack.c.bf16 %v3725, %v3724
  %3742 = vmatpush.bf16.msra.mxu0 %v3295
  %3743 = vmatpush.bf16.msra.mxu0 %v3291
  %3744 = vmatpush.bf16.msra.mxu0 %v3287
  %3745 = vmatpush.bf16.msra.mxu0 %v3283
  %3746 = vmatpush.bf16.msra.mxu0 %v3279
  %3747 = vmatpush.bf16.msra.mxu0 %v3275
  %3748 = vmatpush.bf16.msra.mxu0 %v3271
  %3749 = vmatpush.bf16.msra.mxu0 %v3267
  %3750 = vmatmul.bf16.gmra.mxu0 %v3741
  %v3751 = vpop.f32.mrf.mxu0
  %v3752 = vadd.f32 0.0, %v3751
  %v3753 = vpop.f32.mrf.mxu0
  %v3754 = vadd.f32 0.0, %v3753
  %3755 = vdwg.mxu0
  %3756 = vmatpush.bf16.msra.mxu0 %v3296
  %3757 = vmatpush.bf16.msra.mxu0 %v3292
  %3758 = vmatpush.bf16.msra.mxu0 %v3288
  %3759 = vmatpush.bf16.msra.mxu0 %v3284
  %3760 = vmatpush.bf16.msra.mxu0 %v3280
  %3761 = vmatpush.bf16.msra.mxu0 %v3276
  %3762 = vmatpush.bf16.msra.mxu0 %v3272
  %3763 = vmatpush.bf16.msra.mxu0 %v3268
  %3764 = vmatmul.bf16.gmra.mxu0 %v3741
  %v3765 = vpop.f32.mrf.mxu0
  %v3766 = vadd.f32 0.0, %v3765
  %v3767 = vpop.f32.mrf.mxu0
  %v3768 = vadd.f32 0.0, %v3767
  %3769 = vdwg.mxu0
  %3770 = vmatpush.bf16.msra.mxu0 %v3297
  %3771 = vmatpush.bf16.msra.mxu0 %v3293
  %3772 = vmatpush.bf16.msra.mxu0 %v3289
  %3773 = vmatpush.bf16.msra.mxu0 %v3285
  %3774 = vmatpush.bf16.msra.mxu0 %v3281
  %3775 = vmatpush.bf16.msra.mxu0 %v3277
  %3776 = vmatpush.bf16.msra.mxu0 %v3273
  %3777 = vmatpush.bf16.msra.mxu0 %v3269
  %3778 = vmatmul.bf16.gmra.mxu0 %v3741
  %v3779 = vpop.f32.mrf.mxu0
  %v3780 = vadd.f32 0.0, %v3779
  %v3781 = vpop.f32.mrf.mxu0
  %v3782 = vadd.f32 0.0, %v3781
  %3783 = vdwg.mxu0
  %3784 = vmatpush.bf16.msra.mxu0 %v3298
  %3785 = vmatpush.bf16.msra.mxu0 %v3294
  %3786 = vmatpush.bf16.msra.mxu0 %v3290
  %3787 = vmatpush.bf16.msra.mxu0 %v3286
  %3788 = vmatpush.bf16.msra.mxu0 %v3282
  %3789 = vmatpush.bf16.msra.mxu0 %v3278
  %3790 = vmatpush.bf16.msra.mxu0 %v3274
  %3791 = vmatpush.bf16.msra.mxu0 %v3270
  %3792 = vmatmul.bf16.gmra.mxu0 %v3741
  %v3793 = vpop.f32.mrf.mxu0
  %v3794 = vadd.f32 0.0, %v3793
  %v3795 = vpop.f32.mrf.mxu0
  %v3796 = vadd.f32 0.0, %v3795
  %3797 = vdwg.mxu0
  %v3798 = vadd.f32 %v3733, %v3752
  %v3799 = vadd.f32 %v3734, %v3766
  %v3800 = vadd.f32 %v3735, %v3780
  %v3801 = vadd.f32 %v3736, %v3794
  %v3802 = vadd.f32 %v3737, %v3754
  %v3803 = vadd.f32 %v3738, %v3768
  %v3804 = vadd.f32 %v3739, %v3782
  %v3805 = vadd.f32 %v3740, %v3796
  %v3806 = vxor.u32 %v3798, 2147483648
  %v3807 = vxor.u32 %v3802, 2147483648
  %v3808 = vmul.f32 %v3806, 1.442695
  %v3809 = vpow.pop %v3808
  %v3810 = vmul.f32 %v3807, 1.442695
  %v3811 = vpow.pop %v3810
  %v3812 = vadd.f32 %v3809, 1.0
  %v3813 = vadd.f32 %v3811, 1.0
  %v3814 = vrcp.pop %v3812
  %v3815 = vmul.f32 %v3812, %v3814
  %v3816 = vsub.f32 1.0, %v3815
  %v3817 = vmul.f32 %v3814, %v3816
  %v3818 = vadd.f32 %v3814, %v3817
  %vm3819 = vweird.f32 %v3812
  %vm3820 = vweird.f32 %v3814
  %vm3821 = vmor %vm3819, %vm3820
  %v3822 = vsel %vm3821, %v3814, %v3818
  %v3823 = vand.u32 2147483647, %v3812
  %vm3824 = vcmp.eq.f32.partialorder %v3823, 8.507059e+37
  %v3825 = vand.u32 %v3812, 2147483648
  %v3826 = vor.u32 1.1754944e-38, %v3825
  %v3827 = vsel %vm3824, %v3826, %v3822
  %v3828 = vmul.f32 1.0, %v3827
  %v3829 = vrcp.pop %v3813
  %v3830 = vmul.f32 %v3813, %v3829
  %v3831 = vsub.f32 1.0, %v3830
  %v3832 = vmul.f32 %v3829, %v3831
  %v3833 = vadd.f32 %v3829, %v3832
  %vm3834 = vweird.f32 %v3813
  %vm3835 = vweird.f32 %v3829
  %vm3836 = vmor %vm3834, %vm3835
  %v3837 = vsel %vm3836, %v3829, %v3833
  %v3838 = vand.u32 2147483647, %v3813
  %vm3839 = vcmp.eq.f32.partialorder %v3838, 8.507059e+37
  %v3840 = vand.u32 %v3813, 2147483648
  %v3841 = vor.u32 1.1754944e-38, %v3840
  %v3842 = vsel %vm3839, %v3841, %v3837
  %v3843 = vmul.f32 1.0, %v3842
  %v3844 = vxor.u32 %v3799, 2147483648
  %v3845 = vxor.u32 %v3803, 2147483648
  %v3846 = vmul.f32 %v3844, 1.442695
  %v3847 = vpow.pop %v3846
  %v3848 = vmul.f32 %v3845, 1.442695
  %v3849 = vpow.pop %v3848
  %v3850 = vadd.f32 %v3847, 1.0
  %v3851 = vadd.f32 %v3849, 1.0
  %v3852 = vrcp.pop %v3850
  %v3853 = vmul.f32 %v3850, %v3852
  %v3854 = vsub.f32 1.0, %v3853
  %v3855 = vmul.f32 %v3852, %v3854
  %v3856 = vadd.f32 %v3852, %v3855
  %vm3857 = vweird.f32 %v3850
  %vm3858 = vweird.f32 %v3852
  %vm3859 = vmor %vm3857, %vm3858
  %v3860 = vsel %vm3859, %v3852, %v3856
  %v3861 = vand.u32 2147483647, %v3850
  %vm3862 = vcmp.eq.f32.partialorder %v3861, 8.507059e+37
  %v3863 = vand.u32 %v3850, 2147483648
  %v3864 = vor.u32 1.1754944e-38, %v3863
  %v3865 = vsel %vm3862, %v3864, %v3860
  %v3866 = vmul.f32 1.0, %v3865
  %v3867 = vrcp.pop %v3851
  %v3868 = vmul.f32 %v3851, %v3867
  %v3869 = vsub.f32 1.0, %v3868
  %v3870 = vmul.f32 %v3867, %v3869
  %v3871 = vadd.f32 %v3867, %v3870
  %vm3872 = vweird.f32 %v3851
  %vm3873 = vweird.f32 %v3867
  %vm3874 = vmor %vm3872, %vm3873
  %v3875 = vsel %vm3874, %v3867, %v3871
  %v3876 = vand.u32 2147483647, %v3851
  %vm3877 = vcmp.eq.f32.partialorder %v3876, 8.507059e+37
  %v3878 = vand.u32 %v3851, 2147483648
  %v3879 = vor.u32 1.1754944e-38, %v3878
  %v3880 = vsel %vm3877, %v3879, %v3875
  %v3881 = vmul.f32 1.0, %v3880
  %v3882 = vtanh.pop %v3800
  %v3883 = vtanh.pop %v3804
  %v3884 = vxor.u32 %v3801, 2147483648
  %v3885 = vxor.u32 %v3805, 2147483648
  %v3886 = vmul.f32 %v3884, 1.442695
  %v3887 = vpow.pop %v3886
  %v3888 = vmul.f32 %v3885, 1.442695
  %v3889 = vpow.pop %v3888
  %v3890 = vadd.f32 %v3887, 1.0
  %v3891 = vadd.f32 %v3889, 1.0
  %v3892 = vrcp.pop %v3890
  %v3893 = vmul.f32 %v3890, %v3892
  %v3894 = vsub.f32 1.0, %v3893
  %v3895 = vmul.f32 %v3892, %v3894
  %v3896 = vadd.f32 %v3892, %v3895
  %vm3897 = vweird.f32 %v3890
  %vm3898 = vweird.f32 %v3892
  %vm3899 = vmor %vm3897, %vm3898
  %v3900 = vsel %vm3899, %v3892, %v3896
  %v3901 = vand.u32 2147483647, %v3890
  %vm3902 = vcmp.eq.f32.partialorder %v3901, 8.507059e+37
  %v3903 = vand.u32 %v3890, 2147483648
  %v3904 = vor.u32 1.1754944e-38, %v3903
  %v3905 = vsel %vm3902, %v3904, %v3900
  %v3906 = vmul.f32 1.0, %v3905
  %v3907 = vrcp.pop %v3891
  %v3908 = vmul.f32 %v3891, %v3907
  %v3909 = vsub.f32 1.0, %v3908
  %v3910 = vmul.f32 %v3907, %v3909
  %v3911 = vadd.f32 %v3907, %v3910
  %vm3912 = vweird.f32 %v3891
  %vm3913 = vweird.f32 %v3907
  %vm3914 = vmor %vm3912, %vm3913
  %v3915 = vsel %vm3914, %v3907, %v3911
  %v3916 = vand.u32 2147483647, %v3891
  %vm3917 = vcmp.eq.f32.partialorder %v3916, 8.507059e+37
  %v3918 = vand.u32 %v3891, 2147483648
  %v3919 = vor.u32 1.1754944e-38, %v3918
  %v3920 = vsel %vm3917, %v3919, %v3915
  %v3921 = vmul.f32 1.0, %v3920
  %v3922 = vmul.f32 %v3866, %v3720
  %v3923 = vmul.f32 %v3881, %v3721
  %v3924 = vmul.f32 %v3828, %v3882
  %v3925 = vmul.f32 %v3843, %v3883
  %v3926 = vadd.f32 %v3922, %v3924
  %v3927 = vadd.f32 %v3923, %v3925
  %v3928 = vtanh.pop %v3926
  %v3929 = vtanh.pop %v3927
  %v3930 = vmul.f32 %v3906, %v3928
  %v3931 = vmul.f32 %v3921, %v3929
  %s3932 = scalar_lea.vmem %s4, 32
  %3933 = vst [vmem:[%s3932] sm:$0xff] %v3930
  %3934 = vst [vmem:[%s3932 + $0x8] sm:$0xff] %v3931
  %v3935 = vld [vmem:[%s1453] sm:$0xff]
  %v3936 = vld [vmem:[%s1453 + $0x8] sm:$0xff]
  %v3937 = vld [vmem:[%s1453 + $0x10] sm:$0xff]
  %v3938 = vld [vmem:[%s1453 + $0x18] sm:$0xff]
  %v3939 = vunpack.c.l.bf16 %v3935
  %v3940 = vunpack.c.h.bf16 %v3935
  %v3941 = vunpack.c.l.bf16 %v3936
  %v3942 = vunpack.c.h.bf16 %v3936
  %v3943 = vunpack.c.l.bf16 %v3937
  %v3944 = vunpack.c.h.bf16 %v3937
  %v3945 = vunpack.c.l.bf16 %v3938
  %v3946 = vunpack.c.h.bf16 %v3938
  %v3947 = vpack.c.bf16 %v3931, %v3930
  %3948 = vmatpush.bf16.msra.mxu0 %v3295
  %3949 = vmatpush.bf16.msra.mxu0 %v3291
  %3950 = vmatpush.bf16.msra.mxu0 %v3287
  %3951 = vmatpush.bf16.msra.mxu0 %v3283
  %3952 = vmatpush.bf16.msra.mxu0 %v3279
  %3953 = vmatpush.bf16.msra.mxu0 %v3275
  %3954 = vmatpush.bf16.msra.mxu0 %v3271
  %3955 = vmatpush.bf16.msra.mxu0 %v3267
  %3956 = vmatmul.bf16.gmra.mxu0 %v3947
  %v3957 = vpop.f32.mrf.mxu0
  %v3958 = vadd.f32 0.0, %v3957
  %v3959 = vpop.f32.mrf.mxu0
  %v3960 = vadd.f32 0.0, %v3959
  %3961 = vdwg.mxu0
  %3962 = vmatpush.bf16.msra.mxu0 %v3296
  %3963 = vmatpush.bf16.msra.mxu0 %v3292
  %3964 = vmatpush.bf16.msra.mxu0 %v3288
  %3965 = vmatpush.bf16.msra.mxu0 %v3284
  %3966 = vmatpush.bf16.msra.mxu0 %v3280
  %3967 = vmatpush.bf16.msra.mxu0 %v3276
  %3968 = vmatpush.bf16.msra.mxu0 %v3272
  %3969 = vmatpush.bf16.msra.mxu0 %v3268
  %3970 = vmatmul.bf16.gmra.mxu0 %v3947
  %v3971 = vpop.f32.mrf.mxu0
  %v3972 = vadd.f32 0.0, %v3971
  %v3973 = vpop.f32.mrf.mxu0
  %v3974 = vadd.f32 0.0, %v3973
  %3975 = vdwg.mxu0
  %3976 = vmatpush.bf16.msra.mxu0 %v3297
  %3977 = vmatpush.bf16.msra.mxu0 %v3293
  %3978 = vmatpush.bf16.msra.mxu0 %v3289
  %3979 = vmatpush.bf16.msra.mxu0 %v3285
  %3980 = vmatpush.bf16.msra.mxu0 %v3281
  %3981 = vmatpush.bf16.msra.mxu0 %v3277
  %3982 = vmatpush.bf16.msra.mxu0 %v3273
  %3983 = vmatpush.bf16.msra.mxu0 %v3269
  %3984 = vmatmul.bf16.gmra.mxu0 %v3947
  %v3985 = vpop.f32.mrf.mxu0
  %v3986 = vadd.f32 0.0, %v3985
  %v3987 = vpop.f32.mrf.mxu0
  %v3988 = vadd.f32 0.0, %v3987
  %3989 = vdwg.mxu0
  %3990 = vmatpush.bf16.msra.mxu0 %v3298
  %3991 = vmatpush.bf16.msra.mxu0 %v3294
  %3992 = vmatpush.bf16.msra.mxu0 %v3290
  %3993 = vmatpush.bf16.msra.mxu0 %v3286
  %3994 = vmatpush.bf16.msra.mxu0 %v3282
  %3995 = vmatpush.bf16.msra.mxu0 %v3278
  %3996 = vmatpush.bf16.msra.mxu0 %v3274
  %3997 = vmatpush.bf16.msra.mxu0 %v3270
  %3998 = vmatmul.bf16.gmra.mxu0 %v3947
  %v3999 = vpop.f32.mrf.mxu0
  %v4000 = vadd.f32 0.0, %v3999
  %v4001 = vpop.f32.mrf.mxu0
  %v4002 = vadd.f32 0.0, %v4001
  %4003 = vdwg.mxu0
  %v4004 = vadd.f32 %v3939, %v3958
  %v4005 = vadd.f32 %v3940, %v3972
  %v4006 = vadd.f32 %v3941, %v3986
  %v4007 = vadd.f32 %v3942, %v4000
  %v4008 = vadd.f32 %v3943, %v3960
  %v4009 = vadd.f32 %v3944, %v3974
  %v4010 = vadd.f32 %v3945, %v3988
  %v4011 = vadd.f32 %v3946, %v4002
  %v4012 = vxor.u32 %v4004, 2147483648
  %v4013 = vxor.u32 %v4008, 2147483648
  %v4014 = vmul.f32 %v4012, 1.442695
  %v4015 = vpow.pop %v4014
  %v4016 = vmul.f32 %v4013, 1.442695
  %v4017 = vpow.pop %v4016
  %v4018 = vadd.f32 %v4015, 1.0
  %v4019 = vadd.f32 %v4017, 1.0
  %v4020 = vrcp.pop %v4018
  %v4021 = vmul.f32 %v4018, %v4020
  %v4022 = vsub.f32 1.0, %v4021
  %v4023 = vmul.f32 %v4020, %v4022
  %v4024 = vadd.f32 %v4020, %v4023
  %vm4025 = vweird.f32 %v4018
  %vm4026 = vweird.f32 %v4020
  %vm4027 = vmor %vm4025, %vm4026
  %v4028 = vsel %vm4027, %v4020, %v4024
  %v4029 = vand.u32 2147483647, %v4018
  %vm4030 = vcmp.eq.f32.partialorder %v4029, 8.507059e+37
  %v4031 = vand.u32 %v4018, 2147483648
  %v4032 = vor.u32 1.1754944e-38, %v4031
  %v4033 = vsel %vm4030, %v4032, %v4028
  %v4034 = vmul.f32 1.0, %v4033
  %v4035 = vrcp.pop %v4019
  %v4036 = vmul.f32 %v4019, %v4035
  %v4037 = vsub.f32 1.0, %v4036
  %v4038 = vmul.f32 %v4035, %v4037
  %v4039 = vadd.f32 %v4035, %v4038
  %vm4040 = vweird.f32 %v4019
  %vm4041 = vweird.f32 %v4035
  %vm4042 = vmor %vm4040, %vm4041
  %v4043 = vsel %vm4042, %v4035, %v4039
  %v4044 = vand.u32 2147483647, %v4019
  %vm4045 = vcmp.eq.f32.partialorder %v4044, 8.507059e+37
  %v4046 = vand.u32 %v4019, 2147483648
  %v4047 = vor.u32 1.1754944e-38, %v4046
  %v4048 = vsel %vm4045, %v4047, %v4043
  %v4049 = vmul.f32 1.0, %v4048
  %v4050 = vxor.u32 %v4005, 2147483648
  %v4051 = vxor.u32 %v4009, 2147483648
  %v4052 = vmul.f32 %v4050, 1.442695
  %v4053 = vpow.pop %v4052
  %v4054 = vmul.f32 %v4051, 1.442695
  %v4055 = vpow.pop %v4054
  %v4056 = vadd.f32 %v4053, 1.0
  %v4057 = vadd.f32 %v4055, 1.0
  %v4058 = vrcp.pop %v4056
  %v4059 = vmul.f32 %v4056, %v4058
  %v4060 = vsub.f32 1.0, %v4059
  %v4061 = vmul.f32 %v4058, %v4060
  %v4062 = vadd.f32 %v4058, %v4061
  %vm4063 = vweird.f32 %v4056
  %vm4064 = vweird.f32 %v4058
  %vm4065 = vmor %vm4063, %vm4064
  %v4066 = vsel %vm4065, %v4058, %v4062
  %v4067 = vand.u32 2147483647, %v4056
  %vm4068 = vcmp.eq.f32.partialorder %v4067, 8.507059e+37
  %v4069 = vand.u32 %v4056, 2147483648
  %v4070 = vor.u32 1.1754944e-38, %v4069
  %v4071 = vsel %vm4068, %v4070, %v4066
  %v4072 = vmul.f32 1.0, %v4071
  %v4073 = vrcp.pop %v4057
  %v4074 = vmul.f32 %v4057, %v4073
  %v4075 = vsub.f32 1.0, %v4074
  %v4076 = vmul.f32 %v4073, %v4075
  %v4077 = vadd.f32 %v4073, %v4076
  %vm4078 = vweird.f32 %v4057
  %vm4079 = vweird.f32 %v4073
  %vm4080 = vmor %vm4078, %vm4079
  %v4081 = vsel %vm4080, %v4073, %v4077
  %v4082 = vand.u32 2147483647, %v4057
  %vm4083 = vcmp.eq.f32.partialorder %v4082, 8.507059e+37
  %v4084 = vand.u32 %v4057, 2147483648
  %v4085 = vor.u32 1.1754944e-38, %v4084
  %v4086 = vsel %vm4083, %v4085, %v4081
  %v4087 = vmul.f32 1.0, %v4086
  %v4088 = vtanh.pop %v4006
  %v4089 = vtanh.pop %v4010
  %v4090 = vxor.u32 %v4007, 2147483648
  %v4091 = vxor.u32 %v4011, 2147483648
  %v4092 = vmul.f32 %v4090, 1.442695
  %v4093 = vpow.pop %v4092
  %v4094 = vmul.f32 %v4091, 1.442695
  %v4095 = vpow.pop %v4094
  %v4096 = vadd.f32 %v4093, 1.0
  %v4097 = vadd.f32 %v4095, 1.0
  %v4098 = vrcp.pop %v4096
  %v4099 = vmul.f32 %v4096, %v4098
  %v4100 = vsub.f32 1.0, %v4099
  %v4101 = vmul.f32 %v4098, %v4100
  %v4102 = vadd.f32 %v4098, %v4101
  %vm4103 = vweird.f32 %v4096
  %vm4104 = vweird.f32 %v4098
  %vm4105 = vmor %vm4103, %vm4104
  %v4106 = vsel %vm4105, %v4098, %v4102
  %v4107 = vand.u32 2147483647, %v4096
  %vm4108 = vcmp.eq.f32.partialorder %v4107, 8.507059e+37
  %v4109 = vand.u32 %v4096, 2147483648
  %v4110 = vor.u32 1.1754944e-38, %v4109
  %v4111 = vsel %vm4108, %v4110, %v4106
  %v4112 = vmul.f32 1.0, %v4111
  %v4113 = vrcp.pop %v4097
  %v4114 = vmul.f32 %v4097, %v4113
  %v4115 = vsub.f32 1.0, %v4114
  %v4116 = vmul.f32 %v4113, %v4115
  %v4117 = vadd.f32 %v4113, %v4116
  %vm4118 = vweird.f32 %v4097
  %vm4119 = vweird.f32 %v4113
  %vm4120 = vmor %vm4118, %vm4119
  %v4121 = vsel %vm4120, %v4113, %v4117
  %v4122 = vand.u32 2147483647, %v4097
  %vm4123 = vcmp.eq.f32.partialorder %v4122, 8.507059e+37
  %v4124 = vand.u32 %v4097, 2147483648
  %v4125 = vor.u32 1.1754944e-38, %v4124
  %v4126 = vsel %vm4123, %v4125, %v4121
  %v4127 = vmul.f32 1.0, %v4126
  %v4128 = vmul.f32 %v4072, %v3926
  %v4129 = vmul.f32 %v4087, %v3927
  %v4130 = vmul.f32 %v4034, %v4088
  %v4131 = vmul.f32 %v4049, %v4089
  %v4132 = vadd.f32 %v4128, %v4130
  %v4133 = vadd.f32 %v4129, %v4131
  %v4134 = vtanh.pop %v4132
  %v4135 = vtanh.pop %v4133
  %v4136 = vmul.f32 %v4112, %v4134
  %v4137 = vmul.f32 %v4127, %v4135
  %s4138 = scalar_lea.vmem %s4, 48
  %4139 = vst [vmem:[%s4138] sm:$0xff] %v4136
  %4140 = vst [vmem:[%s4138 + $0x8] sm:$0xff] %v4137
  %v4141 = vld [vmem:[%s1667] sm:$0xff]
  %v4142 = vld [vmem:[%s1667 + $0x8] sm:$0xff]
  %v4143 = vld [vmem:[%s1667 + $0x10] sm:$0xff]
  %v4144 = vld [vmem:[%s1667 + $0x18] sm:$0xff]
  %v4145 = vunpack.c.l.bf16 %v4141
  %v4146 = vunpack.c.h.bf16 %v4141
  %v4147 = vunpack.c.l.bf16 %v4142
  %v4148 = vunpack.c.h.bf16 %v4142
  %v4149 = vunpack.c.l.bf16 %v4143
  %v4150 = vunpack.c.h.bf16 %v4143
  %v4151 = vunpack.c.l.bf16 %v4144
  %v4152 = vunpack.c.h.bf16 %v4144
  %v4153 = vpack.c.bf16 %v4137, %v4136
  %4154 = vmatpush.bf16.msra.mxu0 %v3295
  %4155 = vmatpush.bf16.msra.mxu0 %v3291
  %4156 = vmatpush.bf16.msra.mxu0 %v3287
  %4157 = vmatpush.bf16.msra.mxu0 %v3283
  %4158 = vmatpush.bf16.msra.mxu0 %v3279
  %4159 = vmatpush.bf16.msra.mxu0 %v3275
  %4160 = vmatpush.bf16.msra.mxu0 %v3271
  %4161 = vmatpush.bf16.msra.mxu0 %v3267
  %4162 = vmatmul.bf16.gmra.mxu0 %v4153
  %v4163 = vpop.f32.mrf.mxu0
  %v4164 = vadd.f32 0.0, %v4163
  %v4165 = vpop.f32.mrf.mxu0
  %v4166 = vadd.f32 0.0, %v4165
  %4167 = vdwg.mxu0
  %4168 = vmatpush.bf16.msra.mxu0 %v3296
  %4169 = vmatpush.bf16.msra.mxu0 %v3292
  %4170 = vmatpush.bf16.msra.mxu0 %v3288
  %4171 = vmatpush.bf16.msra.mxu0 %v3284
  %4172 = vmatpush.bf16.msra.mxu0 %v3280
  %4173 = vmatpush.bf16.msra.mxu0 %v3276
  %4174 = vmatpush.bf16.msra.mxu0 %v3272
  %4175 = vmatpush.bf16.msra.mxu0 %v3268
  %4176 = vmatmul.bf16.gmra.mxu0 %v4153
  %v4177 = vpop.f32.mrf.mxu0
  %v4178 = vadd.f32 0.0, %v4177
  %v4179 = vpop.f32.mrf.mxu0
  %v4180 = vadd.f32 0.0, %v4179
  %4181 = vdwg.mxu0
  %4182 = vmatpush.bf16.msra.mxu0 %v3297
  %4183 = vmatpush.bf16.msra.mxu0 %v3293
  %4184 = vmatpush.bf16.msra.mxu0 %v3289
  %4185 = vmatpush.bf16.msra.mxu0 %v3285
  %4186 = vmatpush.bf16.msra.mxu0 %v3281
  %4187 = vmatpush.bf16.msra.mxu0 %v3277
  %4188 = vmatpush.bf16.msra.mxu0 %v3273
  %4189 = vmatpush.bf16.msra.mxu0 %v3269
  %4190 = vmatmul.bf16.gmra.mxu0 %v4153
  %v4191 = vpop.f32.mrf.mxu0
  %v4192 = vadd.f32 0.0, %v4191
  %v4193 = vpop.f32.mrf.mxu0
  %v4194 = vadd.f32 0.0, %v4193
  %4195 = vdwg.mxu0
  %4196 = vmatpush.bf16.msra.mxu0 %v3298
  %4197 = vmatpush.bf16.msra.mxu0 %v3294
  %4198 = vmatpush.bf16.msra.mxu0 %v3290
  %4199 = vmatpush.bf16.msra.mxu0 %v3286
  %4200 = vmatpush.bf16.msra.mxu0 %v3282
  %4201 = vmatpush.bf16.msra.mxu0 %v3278
  %4202 = vmatpush.bf16.msra.mxu0 %v3274
  %4203 = vmatpush.bf16.msra.mxu0 %v3270
  %4204 = vmatmul.bf16.gmra.mxu0 %v4153
  %v4205 = vpop.f32.mrf.mxu0
  %v4206 = vadd.f32 0.0, %v4205
  %v4207 = vpop.f32.mrf.mxu0
  %v4208 = vadd.f32 0.0, %v4207
  %4209 = vdwg.mxu0
  %v4210 = vadd.f32 %v4145, %v4164
  %v4211 = vadd.f32 %v4146, %v4178
  %v4212 = vadd.f32 %v4147, %v4192
  %v4213 = vadd.f32 %v4148, %v4206
  %v4214 = vadd.f32 %v4149, %v4166
  %v4215 = vadd.f32 %v4150, %v4180
  %v4216 = vadd.f32 %v4151, %v4194
  %v4217 = vadd.f32 %v4152, %v4208
  %v4218 = vxor.u32 %v4210, 2147483648
  %v4219 = vxor.u32 %v4214, 2147483648
  %v4220 = vmul.f32 %v4218, 1.442695
  %v4221 = vpow.pop %v4220
  %v4222 = vmul.f32 %v4219, 1.442695
  %v4223 = vpow.pop %v4222
  %v4224 = vadd.f32 %v4221, 1.0
  %v4225 = vadd.f32 %v4223, 1.0
  %v4226 = vrcp.pop %v4224
  %v4227 = vmul.f32 %v4224, %v4226
  %v4228 = vsub.f32 1.0, %v4227
  %v4229 = vmul.f32 %v4226, %v4228
  %v4230 = vadd.f32 %v4226, %v4229
  %vm4231 = vweird.f32 %v4224
  %vm4232 = vweird.f32 %v4226
  %vm4233 = vmor %vm4231, %vm4232
  %v4234 = vsel %vm4233, %v4226, %v4230
  %v4235 = vand.u32 2147483647, %v4224
  %vm4236 = vcmp.eq.f32.partialorder %v4235, 8.507059e+37
  %v4237 = vand.u32 %v4224, 2147483648
  %v4238 = vor.u32 1.1754944e-38, %v4237
  %v4239 = vsel %vm4236, %v4238, %v4234
  %v4240 = vmul.f32 1.0, %v4239
  %v4241 = vrcp.pop %v4225
  %v4242 = vmul.f32 %v4225, %v4241
  %v4243 = vsub.f32 1.0, %v4242
  %v4244 = vmul.f32 %v4241, %v4243
  %v4245 = vadd.f32 %v4241, %v4244
  %vm4246 = vweird.f32 %v4225
  %vm4247 = vweird.f32 %v4241
  %vm4248 = vmor %vm4246, %vm4247
  %v4249 = vsel %vm4248, %v4241, %v4245
  %v4250 = vand.u32 2147483647, %v4225
  %vm4251 = vcmp.eq.f32.partialorder %v4250, 8.507059e+37
  %v4252 = vand.u32 %v4225, 2147483648
  %v4253 = vor.u32 1.1754944e-38, %v4252
  %v4254 = vsel %vm4251, %v4253, %v4249
  %v4255 = vmul.f32 1.0, %v4254
  %v4256 = vxor.u32 %v4211, 2147483648
  %v4257 = vxor.u32 %v4215, 2147483648
  %v4258 = vmul.f32 %v4256, 1.442695
  %v4259 = vpow.pop %v4258
  %v4260 = vmul.f32 %v4257, 1.442695
  %v4261 = vpow.pop %v4260
  %v4262 = vadd.f32 %v4259, 1.0
  %v4263 = vadd.f32 %v4261, 1.0
  %v4264 = vrcp.pop %v4262
  %v4265 = vmul.f32 %v4262, %v4264
  %v4266 = vsub.f32 1.0, %v4265
  %v4267 = vmul.f32 %v4264, %v4266
  %v4268 = vadd.f32 %v4264, %v4267
  %vm4269 = vweird.f32 %v4262
  %vm4270 = vweird.f32 %v4264
  %vm4271 = vmor %vm4269, %vm4270
  %v4272 = vsel %vm4271, %v4264, %v4268
  %v4273 = vand.u32 2147483647, %v4262
  %vm4274 = vcmp.eq.f32.partialorder %v4273, 8.507059e+37
  %v4275 = vand.u32 %v4262, 2147483648
  %v4276 = vor.u32 1.1754944e-38, %v4275
  %v4277 = vsel %vm4274, %v4276, %v4272
  %v4278 = vmul.f32 1.0, %v4277
  %v4279 = vrcp.pop %v4263
  %v4280 = vmul.f32 %v4263, %v4279
  %v4281 = vsub.f32 1.0, %v4280
  %v4282 = vmul.f32 %v4279, %v4281
  %v4283 = vadd.f32 %v4279, %v4282
  %vm4284 = vweird.f32 %v4263
  %vm4285 = vweird.f32 %v4279
  %vm4286 = vmor %vm4284, %vm4285
  %v4287 = vsel %vm4286, %v4279, %v4283
  %v4288 = vand.u32 2147483647, %v4263
  %vm4289 = vcmp.eq.f32.partialorder %v4288, 8.507059e+37
  %v4290 = vand.u32 %v4263, 2147483648
  %v4291 = vor.u32 1.1754944e-38, %v4290
  %v4292 = vsel %vm4289, %v4291, %v4287
  %v4293 = vmul.f32 1.0, %v4292
  %v4294 = vtanh.pop %v4212
  %v4295 = vtanh.pop %v4216
  %v4296 = vxor.u32 %v4213, 2147483648
  %v4297 = vxor.u32 %v4217, 2147483648
  %v4298 = vmul.f32 %v4296, 1.442695
  %v4299 = vpow.pop %v4298
  %v4300 = vmul.f32 %v4297, 1.442695
  %v4301 = vpow.pop %v4300
  %v4302 = vadd.f32 %v4299, 1.0
  %v4303 = vadd.f32 %v4301, 1.0
  %v4304 = vrcp.pop %v4302
  %v4305 = vmul.f32 %v4302, %v4304
  %v4306 = vsub.f32 1.0, %v4305
  %v4307 = vmul.f32 %v4304, %v4306
  %v4308 = vadd.f32 %v4304, %v4307
  %vm4309 = vweird.f32 %v4302
  %vm4310 = vweird.f32 %v4304
  %vm4311 = vmor %vm4309, %vm4310
  %v4312 = vsel %vm4311, %v4304, %v4308
  %v4313 = vand.u32 2147483647, %v4302
  %vm4314 = vcmp.eq.f32.partialorder %v4313, 8.507059e+37
  %v4315 = vand.u32 %v4302, 2147483648
  %v4316 = vor.u32 1.1754944e-38, %v4315
  %v4317 = vsel %vm4314, %v4316, %v4312
  %v4318 = vmul.f32 1.0, %v4317
  %v4319 = vrcp.pop %v4303
  %v4320 = vmul.f32 %v4303, %v4319
  %v4321 = vsub.f32 1.0, %v4320
  %v4322 = vmul.f32 %v4319, %v4321
  %v4323 = vadd.f32 %v4319, %v4322
  %vm4324 = vweird.f32 %v4303
  %vm4325 = vweird.f32 %v4319
  %vm4326 = vmor %vm4324, %vm4325
  %v4327 = vsel %vm4326, %v4319, %v4323
  %v4328 = vand.u32 2147483647, %v4303
  %vm4329 = vcmp.eq.f32.partialorder %v4328, 8.507059e+37
  %v4330 = vand.u32 %v4303, 2147483648
  %v4331 = vor.u32 1.1754944e-38, %v4330
  %v4332 = vsel %vm4329, %v4331, %v4327
  %v4333 = vmul.f32 1.0, %v4332
  %v4334 = vmul.f32 %v4278, %v4132
  %v4335 = vmul.f32 %v4293, %v4133
  %v4336 = vmul.f32 %v4240, %v4294
  %v4337 = vmul.f32 %v4255, %v4295
  %v4338 = vadd.f32 %v4334, %v4336
  %v4339 = vadd.f32 %v4335, %v4337
  %v4340 = vtanh.pop %v4338
  %v4341 = vtanh.pop %v4339
  %v4342 = vmul.f32 %v4318, %v4340
  %v4343 = vmul.f32 %v4333, %v4341
  %s4344 = scalar_lea.vmem %s4, 64
  %4345 = vst [vmem:[%s4344] sm:$0xff] %v4342
  %4346 = vst [vmem:[%s4344 + $0x8] sm:$0xff] %v4343
  %v4347 = vld [vmem:[%s1881] sm:$0xff]
  %v4348 = vld [vmem:[%s1881 + $0x8] sm:$0xff]
  %v4349 = vld [vmem:[%s1881 + $0x10] sm:$0xff]
  %v4350 = vld [vmem:[%s1881 + $0x18] sm:$0xff]
  %v4351 = vunpack.c.l.bf16 %v4347
  %v4352 = vunpack.c.h.bf16 %v4347
  %v4353 = vunpack.c.l.bf16 %v4348
  %v4354 = vunpack.c.h.bf16 %v4348
  %v4355 = vunpack.c.l.bf16 %v4349
  %v4356 = vunpack.c.h.bf16 %v4349
  %v4357 = vunpack.c.l.bf16 %v4350
  %v4358 = vunpack.c.h.bf16 %v4350
  %v4359 = vpack.c.bf16 %v4343, %v4342
  %4360 = vmatpush.bf16.msra.mxu0 %v3295
  %4361 = vmatpush.bf16.msra.mxu0 %v3291
  %4362 = vmatpush.bf16.msra.mxu0 %v3287
  %4363 = vmatpush.bf16.msra.mxu0 %v3283
  %4364 = vmatpush.bf16.msra.mxu0 %v3279
  %4365 = vmatpush.bf16.msra.mxu0 %v3275
  %4366 = vmatpush.bf16.msra.mxu0 %v3271
  %4367 = vmatpush.bf16.msra.mxu0 %v3267
  %4368 = vmatmul.bf16.gmra.mxu0 %v4359
  %v4369 = vpop.f32.mrf.mxu0
  %v4370 = vadd.f32 0.0, %v4369
  %v4371 = vpop.f32.mrf.mxu0
  %v4372 = vadd.f32 0.0, %v4371
  %4373 = vdwg.mxu0
  %4374 = vmatpush.bf16.msra.mxu0 %v3296
  %4375 = vmatpush.bf16.msra.mxu0 %v3292
  %4376 = vmatpush.bf16.msra.mxu0 %v3288
  %4377 = vmatpush.bf16.msra.mxu0 %v3284
  %4378 = vmatpush.bf16.msra.mxu0 %v3280
  %4379 = vmatpush.bf16.msra.mxu0 %v3276
  %4380 = vmatpush.bf16.msra.mxu0 %v3272
  %4381 = vmatpush.bf16.msra.mxu0 %v3268
  %4382 = vmatmul.bf16.gmra.mxu0 %v4359
  %v4383 = vpop.f32.mrf.mxu0
  %v4384 = vadd.f32 0.0, %v4383
  %v4385 = vpop.f32.mrf.mxu0
  %v4386 = vadd.f32 0.0, %v4385
  %4387 = vdwg.mxu0
  %4388 = vmatpush.bf16.msra.mxu0 %v3297
  %4389 = vmatpush.bf16.msra.mxu0 %v3293
  %4390 = vmatpush.bf16.msra.mxu0 %v3289
  %4391 = vmatpush.bf16.msra.mxu0 %v3285
  %4392 = vmatpush.bf16.msra.mxu0 %v3281
  %4393 = vmatpush.bf16.msra.mxu0 %v3277
  %4394 = vmatpush.bf16.msra.mxu0 %v3273
  %4395 = vmatpush.bf16.msra.mxu0 %v3269
  %4396 = vmatmul.bf16.gmra.mxu0 %v4359
  %v4397 = vpop.f32.mrf.mxu0
  %v4398 = vadd.f32 0.0, %v4397
  %v4399 = vpop.f32.mrf.mxu0
  %v4400 = vadd.f32 0.0, %v4399
  %4401 = vdwg.mxu0
  %4402 = vmatpush.bf16.msra.mxu0 %v3298
  %4403 = vmatpush.bf16.msra.mxu0 %v3294
  %4404 = vmatpush.bf16.msra.mxu0 %v3290
  %4405 = vmatpush.bf16.msra.mxu0 %v3286
  %4406 = vmatpush.bf16.msra.mxu0 %v3282
  %4407 = vmatpush.bf16.msra.mxu0 %v3278
  %4408 = vmatpush.bf16.msra.mxu0 %v3274
  %4409 = vmatpush.bf16.msra.mxu0 %v3270
  %4410 = vmatmul.bf16.gmra.mxu0 %v4359
  %v4411 = vpop.f32.mrf.mxu0
  %v4412 = vadd.f32 0.0, %v4411
  %v4413 = vpop.f32.mrf.mxu0
  %v4414 = vadd.f32 0.0, %v4413
  %4415 = vdwg.mxu0
  %v4416 = vadd.f32 %v4351, %v4370
  %v4417 = vadd.f32 %v4352, %v4384
  %v4418 = vadd.f32 %v4353, %v4398
  %v4419 = vadd.f32 %v4354, %v4412
  %v4420 = vadd.f32 %v4355, %v4372
  %v4421 = vadd.f32 %v4356, %v4386
  %v4422 = vadd.f32 %v4357, %v4400
  %v4423 = vadd.f32 %v4358, %v4414
  %v4424 = vxor.u32 %v4416, 2147483648
  %v4425 = vxor.u32 %v4420, 2147483648
  %v4426 = vmul.f32 %v4424, 1.442695
  %v4427 = vpow.pop %v4426
  %v4428 = vmul.f32 %v4425, 1.442695
  %v4429 = vpow.pop %v4428
  %v4430 = vadd.f32 %v4427, 1.0
  %v4431 = vadd.f32 %v4429, 1.0
  %v4432 = vrcp.pop %v4430
  %v4433 = vmul.f32 %v4430, %v4432
  %v4434 = vsub.f32 1.0, %v4433
  %v4435 = vmul.f32 %v4432, %v4434
  %v4436 = vadd.f32 %v4432, %v4435
  %vm4437 = vweird.f32 %v4430
  %vm4438 = vweird.f32 %v4432
  %vm4439 = vmor %vm4437, %vm4438
  %v4440 = vsel %vm4439, %v4432, %v4436
  %v4441 = vand.u32 2147483647, %v4430
  %vm4442 = vcmp.eq.f32.partialorder %v4441, 8.507059e+37
  %v4443 = vand.u32 %v4430, 2147483648
  %v4444 = vor.u32 1.1754944e-38, %v4443
  %v4445 = vsel %vm4442, %v4444, %v4440
  %v4446 = vmul.f32 1.0, %v4445
  %v4447 = vrcp.pop %v4431
  %v4448 = vmul.f32 %v4431, %v4447
  %v4449 = vsub.f32 1.0, %v4448
  %v4450 = vmul.f32 %v4447, %v4449
  %v4451 = vadd.f32 %v4447, %v4450
  %vm4452 = vweird.f32 %v4431
  %vm4453 = vweird.f32 %v4447
  %vm4454 = vmor %vm4452, %vm4453
  %v4455 = vsel %vm4454, %v4447, %v4451
  %v4456 = vand.u32 2147483647, %v4431
  %vm4457 = vcmp.eq.f32.partialorder %v4456, 8.507059e+37
  %v4458 = vand.u32 %v4431, 2147483648
  %v4459 = vor.u32 1.1754944e-38, %v4458
  %v4460 = vsel %vm4457, %v4459, %v4455
  %v4461 = vmul.f32 1.0, %v4460
  %v4462 = vxor.u32 %v4417, 2147483648
  %v4463 = vxor.u32 %v4421, 2147483648
  %v4464 = vmul.f32 %v4462, 1.442695
  %v4465 = vpow.pop %v4464
  %v4466 = vmul.f32 %v4463, 1.442695
  %v4467 = vpow.pop %v4466
  %v4468 = vadd.f32 %v4465, 1.0
  %v4469 = vadd.f32 %v4467, 1.0
  %v4470 = vrcp.pop %v4468
  %v4471 = vmul.f32 %v4468, %v4470
  %v4472 = vsub.f32 1.0, %v4471
  %v4473 = vmul.f32 %v4470, %v4472
  %v4474 = vadd.f32 %v4470, %v4473
  %vm4475 = vweird.f32 %v4468
  %vm4476 = vweird.f32 %v4470
  %vm4477 = vmor %vm4475, %vm4476
  %v4478 = vsel %vm4477, %v4470, %v4474
  %v4479 = vand.u32 2147483647, %v4468
  %vm4480 = vcmp.eq.f32.partialorder %v4479, 8.507059e+37
  %v4481 = vand.u32 %v4468, 2147483648
  %v4482 = vor.u32 1.1754944e-38, %v4481
  %v4483 = vsel %vm4480, %v4482, %v4478
  %v4484 = vmul.f32 1.0, %v4483
  %v4485 = vrcp.pop %v4469
  %v4486 = vmul.f32 %v4469, %v4485
  %v4487 = vsub.f32 1.0, %v4486
  %v4488 = vmul.f32 %v4485, %v4487
  %v4489 = vadd.f32 %v4485, %v4488
  %vm4490 = vweird.f32 %v4469
  %vm4491 = vweird.f32 %v4485
  %vm4492 = vmor %vm4490, %vm4491
  %v4493 = vsel %vm4492, %v4485, %v4489
  %v4494 = vand.u32 2147483647, %v4469
  %vm4495 = vcmp.eq.f32.partialorder %v4494, 8.507059e+37
  %v4496 = vand.u32 %v4469, 2147483648
  %v4497 = vor.u32 1.1754944e-38, %v4496
  %v4498 = vsel %vm4495, %v4497, %v4493
  %v4499 = vmul.f32 1.0, %v4498
  %v4500 = vtanh.pop %v4418
  %v4501 = vtanh.pop %v4422
  %v4502 = vxor.u32 %v4419, 2147483648
  %v4503 = vxor.u32 %v4423, 2147483648
  %v4504 = vmul.f32 %v4502, 1.442695
  %v4505 = vpow.pop %v4504
  %v4506 = vmul.f32 %v4503, 1.442695
  %v4507 = vpow.pop %v4506
  %v4508 = vadd.f32 %v4505, 1.0
  %v4509 = vadd.f32 %v4507, 1.0
  %v4510 = vrcp.pop %v4508
  %v4511 = vmul.f32 %v4508, %v4510
  %v4512 = vsub.f32 1.0, %v4511
  %v4513 = vmul.f32 %v4510, %v4512
  %v4514 = vadd.f32 %v4510, %v4513
  %vm4515 = vweird.f32 %v4508
  %vm4516 = vweird.f32 %v4510
  %vm4517 = vmor %vm4515, %vm4516
  %v4518 = vsel %vm4517, %v4510, %v4514
  %v4519 = vand.u32 2147483647, %v4508
  %vm4520 = vcmp.eq.f32.partialorder %v4519, 8.507059e+37
  %v4521 = vand.u32 %v4508, 2147483648
  %v4522 = vor.u32 1.1754944e-38, %v4521
  %v4523 = vsel %vm4520, %v4522, %v4518
  %v4524 = vmul.f32 1.0, %v4523
  %v4525 = vrcp.pop %v4509
  %v4526 = vmul.f32 %v4509, %v4525
  %v4527 = vsub.f32 1.0, %v4526
  %v4528 = vmul.f32 %v4525, %v4527
  %v4529 = vadd.f32 %v4525, %v4528
  %vm4530 = vweird.f32 %v4509
  %vm4531 = vweird.f32 %v4525
  %vm4532 = vmor %vm4530, %vm4531
  %v4533 = vsel %vm4532, %v4525, %v4529
  %v4534 = vand.u32 2147483647, %v4509
  %vm4535 = vcmp.eq.f32.partialorder %v4534, 8.507059e+37
  %v4536 = vand.u32 %v4509, 2147483648
  %v4537 = vor.u32 1.1754944e-38, %v4536
  %v4538 = vsel %vm4535, %v4537, %v4533
  %v4539 = vmul.f32 1.0, %v4538
  %v4540 = vmul.f32 %v4484, %v4338
  %v4541 = vmul.f32 %v4499, %v4339
  %v4542 = vmul.f32 %v4446, %v4500
  %v4543 = vmul.f32 %v4461, %v4501
  %v4544 = vadd.f32 %v4540, %v4542
  %v4545 = vadd.f32 %v4541, %v4543
  %v4546 = vtanh.pop %v4544
  %v4547 = vtanh.pop %v4545
  %v4548 = vmul.f32 %v4524, %v4546
  %v4549 = vmul.f32 %v4539, %v4547
  %s4550 = scalar_lea.vmem %s4, 80
  %4551 = vst [vmem:[%s4550] sm:$0xff] %v4548
  %4552 = vst [vmem:[%s4550 + $0x8] sm:$0xff] %v4549
  %v4553 = vld [vmem:[%s2095] sm:$0xff]
  %v4554 = vld [vmem:[%s2095 + $0x8] sm:$0xff]
  %v4555 = vld [vmem:[%s2095 + $0x10] sm:$0xff]
  %v4556 = vld [vmem:[%s2095 + $0x18] sm:$0xff]
  %v4557 = vunpack.c.l.bf16 %v4553
  %v4558 = vunpack.c.h.bf16 %v4553
  %v4559 = vunpack.c.l.bf16 %v4554
  %v4560 = vunpack.c.h.bf16 %v4554
  %v4561 = vunpack.c.l.bf16 %v4555
  %v4562 = vunpack.c.h.bf16 %v4555
  %v4563 = vunpack.c.l.bf16 %v4556
  %v4564 = vunpack.c.h.bf16 %v4556
  %v4565 = vpack.c.bf16 %v4549, %v4548
  %4566 = vmatpush.bf16.msra.mxu0 %v3295
  %4567 = vmatpush.bf16.msra.mxu0 %v3291
  %4568 = vmatpush.bf16.msra.mxu0 %v3287
  %4569 = vmatpush.bf16.msra.mxu0 %v3283
  %4570 = vmatpush.bf16.msra.mxu0 %v3279
  %4571 = vmatpush.bf16.msra.mxu0 %v3275
  %4572 = vmatpush.bf16.msra.mxu0 %v3271
  %4573 = vmatpush.bf16.msra.mxu0 %v3267
  %4574 = vmatmul.bf16.gmra.mxu0 %v4565
  %v4575 = vpop.f32.mrf.mxu0
  %v4576 = vadd.f32 0.0, %v4575
  %v4577 = vpop.f32.mrf.mxu0
  %v4578 = vadd.f32 0.0, %v4577
  %4579 = vdwg.mxu0
  %4580 = vmatpush.bf16.msra.mxu0 %v3296
  %4581 = vmatpush.bf16.msra.mxu0 %v3292
  %4582 = vmatpush.bf16.msra.mxu0 %v3288
  %4583 = vmatpush.bf16.msra.mxu0 %v3284
  %4584 = vmatpush.bf16.msra.mxu0 %v3280
  %4585 = vmatpush.bf16.msra.mxu0 %v3276
  %4586 = vmatpush.bf16.msra.mxu0 %v3272
  %4587 = vmatpush.bf16.msra.mxu0 %v3268
  %4588 = vmatmul.bf16.gmra.mxu0 %v4565
  %v4589 = vpop.f32.mrf.mxu0
  %v4590 = vadd.f32 0.0, %v4589
  %v4591 = vpop.f32.mrf.mxu0
  %v4592 = vadd.f32 0.0, %v4591
  %4593 = vdwg.mxu0
  %4594 = vmatpush.bf16.msra.mxu0 %v3297
  %4595 = vmatpush.bf16.msra.mxu0 %v3293
  %4596 = vmatpush.bf16.msra.mxu0 %v3289
  %4597 = vmatpush.bf16.msra.mxu0 %v3285
  %4598 = vmatpush.bf16.msra.mxu0 %v3281
  %4599 = vmatpush.bf16.msra.mxu0 %v3277
  %4600 = vmatpush.bf16.msra.mxu0 %v3273
  %4601 = vmatpush.bf16.msra.mxu0 %v3269
  %4602 = vmatmul.bf16.gmra.mxu0 %v4565
  %v4603 = vpop.f32.mrf.mxu0
  %v4604 = vadd.f32 0.0, %v4603
  %v4605 = vpop.f32.mrf.mxu0
  %v4606 = vadd.f32 0.0, %v4605
  %4607 = vdwg.mxu0
  %4608 = vmatpush.bf16.msra.mxu0 %v3298
  %4609 = vmatpush.bf16.msra.mxu0 %v3294
  %4610 = vmatpush.bf16.msra.mxu0 %v3290
  %4611 = vmatpush.bf16.msra.mxu0 %v3286
  %4612 = vmatpush.bf16.msra.mxu0 %v3282
  %4613 = vmatpush.bf16.msra.mxu0 %v3278
  %4614 = vmatpush.bf16.msra.mxu0 %v3274
  %4615 = vmatpush.bf16.msra.mxu0 %v3270
  %4616 = vmatmul.bf16.gmra.mxu0 %v4565
  %v4617 = vpop.f32.mrf.mxu0
  %v4618 = vadd.f32 0.0, %v4617
  %v4619 = vpop.f32.mrf.mxu0
  %v4620 = vadd.f32 0.0, %v4619
  %4621 = vdwg.mxu0
  %v4622 = vadd.f32 %v4557, %v4576
  %v4623 = vadd.f32 %v4558, %v4590
  %v4624 = vadd.f32 %v4559, %v4604
  %v4625 = vadd.f32 %v4560, %v4618
  %v4626 = vadd.f32 %v4561, %v4578
  %v4627 = vadd.f32 %v4562, %v4592
  %v4628 = vadd.f32 %v4563, %v4606
  %v4629 = vadd.f32 %v4564, %v4620
  %v4630 = vxor.u32 %v4622, 2147483648
  %v4631 = vxor.u32 %v4626, 2147483648
  %v4632 = vmul.f32 %v4630, 1.442695
  %v4633 = vpow.pop %v4632
  %v4634 = vmul.f32 %v4631, 1.442695
  %v4635 = vpow.pop %v4634
  %v4636 = vadd.f32 %v4633, 1.0
  %v4637 = vadd.f32 %v4635, 1.0
  %v4638 = vrcp.pop %v4636
  %v4639 = vmul.f32 %v4636, %v4638
  %v4640 = vsub.f32 1.0, %v4639
  %v4641 = vmul.f32 %v4638, %v4640
  %v4642 = vadd.f32 %v4638, %v4641
  %vm4643 = vweird.f32 %v4636
  %vm4644 = vweird.f32 %v4638
  %vm4645 = vmor %vm4643, %vm4644
  %v4646 = vsel %vm4645, %v4638, %v4642
  %v4647 = vand.u32 2147483647, %v4636
  %vm4648 = vcmp.eq.f32.partialorder %v4647, 8.507059e+37
  %v4649 = vand.u32 %v4636, 2147483648
  %v4650 = vor.u32 1.1754944e-38, %v4649
  %v4651 = vsel %vm4648, %v4650, %v4646
  %v4652 = vmul.f32 1.0, %v4651
  %v4653 = vrcp.pop %v4637
  %v4654 = vmul.f32 %v4637, %v4653
  %v4655 = vsub.f32 1.0, %v4654
  %v4656 = vmul.f32 %v4653, %v4655
  %v4657 = vadd.f32 %v4653, %v4656
  %vm4658 = vweird.f32 %v4637
  %vm4659 = vweird.f32 %v4653
  %vm4660 = vmor %vm4658, %vm4659
  %v4661 = vsel %vm4660, %v4653, %v4657
  %v4662 = vand.u32 2147483647, %v4637
  %vm4663 = vcmp.eq.f32.partialorder %v4662, 8.507059e+37
  %v4664 = vand.u32 %v4637, 2147483648
  %v4665 = vor.u32 1.1754944e-38, %v4664
  %v4666 = vsel %vm4663, %v4665, %v4661
  %v4667 = vmul.f32 1.0, %v4666
  %v4668 = vxor.u32 %v4623, 2147483648
  %v4669 = vxor.u32 %v4627, 2147483648
  %v4670 = vmul.f32 %v4668, 1.442695
  %v4671 = vpow.pop %v4670
  %v4672 = vmul.f32 %v4669, 1.442695
  %v4673 = vpow.pop %v4672
  %v4674 = vadd.f32 %v4671, 1.0
  %v4675 = vadd.f32 %v4673, 1.0
  %v4676 = vrcp.pop %v4674
  %v4677 = vmul.f32 %v4674, %v4676
  %v4678 = vsub.f32 1.0, %v4677
  %v4679 = vmul.f32 %v4676, %v4678
  %v4680 = vadd.f32 %v4676, %v4679
  %vm4681 = vweird.f32 %v4674
  %vm4682 = vweird.f32 %v4676
  %vm4683 = vmor %vm4681, %vm4682
  %v4684 = vsel %vm4683, %v4676, %v4680
  %v4685 = vand.u32 2147483647, %v4674
  %vm4686 = vcmp.eq.f32.partialorder %v4685, 8.507059e+37
  %v4687 = vand.u32 %v4674, 2147483648
  %v4688 = vor.u32 1.1754944e-38, %v4687
  %v4689 = vsel %vm4686, %v4688, %v4684
  %v4690 = vmul.f32 1.0, %v4689
  %v4691 = vrcp.pop %v4675
  %v4692 = vmul.f32 %v4675, %v4691
  %v4693 = vsub.f32 1.0, %v4692
  %v4694 = vmul.f32 %v4691, %v4693
  %v4695 = vadd.f32 %v4691, %v4694
  %vm4696 = vweird.f32 %v4675
  %vm4697 = vweird.f32 %v4691
  %vm4698 = vmor %vm4696, %vm4697
  %v4699 = vsel %vm4698, %v4691, %v4695
  %v4700 = vand.u32 2147483647, %v4675
  %vm4701 = vcmp.eq.f32.partialorder %v4700, 8.507059e+37
  %v4702 = vand.u32 %v4675, 2147483648
  %v4703 = vor.u32 1.1754944e-38, %v4702
  %v4704 = vsel %vm4701, %v4703, %v4699
  %v4705 = vmul.f32 1.0, %v4704
  %v4706 = vtanh.pop %v4624
  %v4707 = vtanh.pop %v4628
  %v4708 = vxor.u32 %v4625, 2147483648
  %v4709 = vxor.u32 %v4629, 2147483648
  %v4710 = vmul.f32 %v4708, 1.442695
  %v4711 = vpow.pop %v4710
  %v4712 = vmul.f32 %v4709, 1.442695
  %v4713 = vpow.pop %v4712
  %v4714 = vadd.f32 %v4711, 1.0
  %v4715 = vadd.f32 %v4713, 1.0
  %v4716 = vrcp.pop %v4714
  %v4717 = vmul.f32 %v4714, %v4716
  %v4718 = vsub.f32 1.0, %v4717
  %v4719 = vmul.f32 %v4716, %v4718
  %v4720 = vadd.f32 %v4716, %v4719
  %vm4721 = vweird.f32 %v4714
  %vm4722 = vweird.f32 %v4716
  %vm4723 = vmor %vm4721, %vm4722
  %v4724 = vsel %vm4723, %v4716, %v4720
  %v4725 = vand.u32 2147483647, %v4714
  %vm4726 = vcmp.eq.f32.partialorder %v4725, 8.507059e+37
  %v4727 = vand.u32 %v4714, 2147483648
  %v4728 = vor.u32 1.1754944e-38, %v4727
  %v4729 = vsel %vm4726, %v4728, %v4724
  %v4730 = vmul.f32 1.0, %v4729
  %v4731 = vrcp.pop %v4715
  %v4732 = vmul.f32 %v4715, %v4731
  %v4733 = vsub.f32 1.0, %v4732
  %v4734 = vmul.f32 %v4731, %v4733
  %v4735 = vadd.f32 %v4731, %v4734
  %vm4736 = vweird.f32 %v4715
  %vm4737 = vweird.f32 %v4731
  %vm4738 = vmor %vm4736, %vm4737
  %v4739 = vsel %vm4738, %v4731, %v4735
  %v4740 = vand.u32 2147483647, %v4715
  %vm4741 = vcmp.eq.f32.partialorder %v4740, 8.507059e+37
  %v4742 = vand.u32 %v4715, 2147483648
  %v4743 = vor.u32 1.1754944e-38, %v4742
  %v4744 = vsel %vm4741, %v4743, %v4739
  %v4745 = vmul.f32 1.0, %v4744
  %v4746 = vmul.f32 %v4690, %v4544
  %v4747 = vmul.f32 %v4705, %v4545
  %v4748 = vmul.f32 %v4652, %v4706
  %v4749 = vmul.f32 %v4667, %v4707
  %v4750 = vadd.f32 %v4746, %v4748
  %v4751 = vadd.f32 %v4747, %v4749
  %v4752 = vtanh.pop %v4750
  %v4753 = vtanh.pop %v4751
  %v4754 = vmul.f32 %v4730, %v4752
  %v4755 = vmul.f32 %v4745, %v4753
  %s4756 = scalar_lea.vmem %s4, 96
  %4757 = vst [vmem:[%s4756] sm:$0xff] %v4754
  %4758 = vst [vmem:[%s4756 + $0x8] sm:$0xff] %v4755
  %v4759 = vld [vmem:[%s2309] sm:$0xff]
  %v4760 = vld [vmem:[%s2309 + $0x8] sm:$0xff]
  %v4761 = vld [vmem:[%s2309 + $0x10] sm:$0xff]
  %v4762 = vld [vmem:[%s2309 + $0x18] sm:$0xff]
  %v4763 = vunpack.c.l.bf16 %v4759
  %v4764 = vunpack.c.h.bf16 %v4759
  %v4765 = vunpack.c.l.bf16 %v4760
  %v4766 = vunpack.c.h.bf16 %v4760
  %v4767 = vunpack.c.l.bf16 %v4761
  %v4768 = vunpack.c.h.bf16 %v4761
  %v4769 = vunpack.c.l.bf16 %v4762
  %v4770 = vunpack.c.h.bf16 %v4762
  %v4771 = vpack.c.bf16 %v4755, %v4754
  %4772 = vmatpush.bf16.msra.mxu0 %v3295
  %4773 = vmatpush.bf16.msra.mxu0 %v3291
  %4774 = vmatpush.bf16.msra.mxu0 %v3287
  %4775 = vmatpush.bf16.msra.mxu0 %v3283
  %4776 = vmatpush.bf16.msra.mxu0 %v3279
  %4777 = vmatpush.bf16.msra.mxu0 %v3275
  %4778 = vmatpush.bf16.msra.mxu0 %v3271
  %4779 = vmatpush.bf16.msra.mxu0 %v3267
  %4780 = vmatmul.bf16.gmra.mxu0 %v4771
  %v4781 = vpop.f32.mrf.mxu0
  %v4782 = vadd.f32 0.0, %v4781
  %v4783 = vpop.f32.mrf.mxu0
  %v4784 = vadd.f32 0.0, %v4783
  %4785 = vdwg.mxu0
  %4786 = vmatpush.bf16.msra.mxu0 %v3296
  %4787 = vmatpush.bf16.msra.mxu0 %v3292
  %4788 = vmatpush.bf16.msra.mxu0 %v3288
  %4789 = vmatpush.bf16.msra.mxu0 %v3284
  %4790 = vmatpush.bf16.msra.mxu0 %v3280
  %4791 = vmatpush.bf16.msra.mxu0 %v3276
  %4792 = vmatpush.bf16.msra.mxu0 %v3272
  %4793 = vmatpush.bf16.msra.mxu0 %v3268
  %4794 = vmatmul.bf16.gmra.mxu0 %v4771
  %v4795 = vpop.f32.mrf.mxu0
  %v4796 = vadd.f32 0.0, %v4795
  %v4797 = vpop.f32.mrf.mxu0
  %v4798 = vadd.f32 0.0, %v4797
  %4799 = vdwg.mxu0
  %4800 = vmatpush.bf16.msra.mxu0 %v3297
  %4801 = vmatpush.bf16.msra.mxu0 %v3293
  %4802 = vmatpush.bf16.msra.mxu0 %v3289
  %4803 = vmatpush.bf16.msra.mxu0 %v3285
  %4804 = vmatpush.bf16.msra.mxu0 %v3281
  %4805 = vmatpush.bf16.msra.mxu0 %v3277
  %4806 = vmatpush.bf16.msra.mxu0 %v3273
  %4807 = vmatpush.bf16.msra.mxu0 %v3269
  %4808 = vmatmul.bf16.gmra.mxu0 %v4771
  %v4809 = vpop.f32.mrf.mxu0
  %v4810 = vadd.f32 0.0, %v4809
  %v4811 = vpop.f32.mrf.mxu0
  %v4812 = vadd.f32 0.0, %v4811
  %4813 = vdwg.mxu0
  %4814 = vmatpush.bf16.msra.mxu0 %v3298
  %4815 = vmatpush.bf16.msra.mxu0 %v3294
  %4816 = vmatpush.bf16.msra.mxu0 %v3290
  %4817 = vmatpush.bf16.msra.mxu0 %v3286
  %4818 = vmatpush.bf16.msra.mxu0 %v3282
  %4819 = vmatpush.bf16.msra.mxu0 %v3278
  %4820 = vmatpush.bf16.msra.mxu0 %v3274
  %4821 = vmatpush.bf16.msra.mxu0 %v3270
  %4822 = vmatmul.bf16.gmra.mxu0 %v4771
  %v4823 = vpop.f32.mrf.mxu0
  %v4824 = vadd.f32 0.0, %v4823
  %v4825 = vpop.f32.mrf.mxu0
  %v4826 = vadd.f32 0.0, %v4825
  %4827 = vdwg.mxu0
  %v4828 = vadd.f32 %v4763, %v4782
  %v4829 = vadd.f32 %v4764, %v4796
  %v4830 = vadd.f32 %v4765, %v4810
  %v4831 = vadd.f32 %v4766, %v4824
  %v4832 = vadd.f32 %v4767, %v4784
  %v4833 = vadd.f32 %v4768, %v4798
  %v4834 = vadd.f32 %v4769, %v4812
  %v4835 = vadd.f32 %v4770, %v4826
  %v4836 = vxor.u32 %v4828, 2147483648
  %v4837 = vxor.u32 %v4832, 2147483648
  %v4838 = vmul.f32 %v4836, 1.442695
  %v4839 = vpow.pop %v4838
  %v4840 = vmul.f32 %v4837, 1.442695
  %v4841 = vpow.pop %v4840
  %v4842 = vadd.f32 %v4839, 1.0
  %v4843 = vadd.f32 %v4841, 1.0
  %v4844 = vrcp.pop %v4842
  %v4845 = vmul.f32 %v4842, %v4844
  %v4846 = vsub.f32 1.0, %v4845
  %v4847 = vmul.f32 %v4844, %v4846
  %v4848 = vadd.f32 %v4844, %v4847
  %vm4849 = vweird.f32 %v4842
  %vm4850 = vweird.f32 %v4844
  %vm4851 = vmor %vm4849, %vm4850
  %v4852 = vsel %vm4851, %v4844, %v4848
  %v4853 = vand.u32 2147483647, %v4842
  %vm4854 = vcmp.eq.f32.partialorder %v4853, 8.507059e+37
  %v4855 = vand.u32 %v4842, 2147483648
  %v4856 = vor.u32 1.1754944e-38, %v4855
  %v4857 = vsel %vm4854, %v4856, %v4852
  %v4858 = vmul.f32 1.0, %v4857
  %v4859 = vrcp.pop %v4843
  %v4860 = vmul.f32 %v4843, %v4859
  %v4861 = vsub.f32 1.0, %v4860
  %v4862 = vmul.f32 %v4859, %v4861
  %v4863 = vadd.f32 %v4859, %v4862
  %vm4864 = vweird.f32 %v4843
  %vm4865 = vweird.f32 %v4859
  %vm4866 = vmor %vm4864, %vm4865
  %v4867 = vsel %vm4866, %v4859, %v4863
  %v4868 = vand.u32 2147483647, %v4843
  %vm4869 = vcmp.eq.f32.partialorder %v4868, 8.507059e+37
  %v4870 = vand.u32 %v4843, 2147483648
  %v4871 = vor.u32 1.1754944e-38, %v4870
  %v4872 = vsel %vm4869, %v4871, %v4867
  %v4873 = vmul.f32 1.0, %v4872
  %v4874 = vxor.u32 %v4829, 2147483648
  %v4875 = vxor.u32 %v4833, 2147483648
  %v4876 = vmul.f32 %v4874, 1.442695
  %v4877 = vpow.pop %v4876
  %v4878 = vmul.f32 %v4875, 1.442695
  %v4879 = vpow.pop %v4878
  %v4880 = vadd.f32 %v4877, 1.0
  %v4881 = vadd.f32 %v4879, 1.0
  %v4882 = vrcp.pop %v4880
  %v4883 = vmul.f32 %v4880, %v4882
  %v4884 = vsub.f32 1.0, %v4883
  %v4885 = vmul.f32 %v4882, %v4884
  %v4886 = vadd.f32 %v4882, %v4885
  %vm4887 = vweird.f32 %v4880
  %vm4888 = vweird.f32 %v4882
  %vm4889 = vmor %vm4887, %vm4888
  %v4890 = vsel %vm4889, %v4882, %v4886
  %v4891 = vand.u32 2147483647, %v4880
  %vm4892 = vcmp.eq.f32.partialorder %v4891, 8.507059e+37
  %v4893 = vand.u32 %v4880, 2147483648
  %v4894 = vor.u32 1.1754944e-38, %v4893
  %v4895 = vsel %vm4892, %v4894, %v4890
  %v4896 = vmul.f32 1.0, %v4895
  %v4897 = vrcp.pop %v4881
  %v4898 = vmul.f32 %v4881, %v4897
  %v4899 = vsub.f32 1.0, %v4898
  %v4900 = vmul.f32 %v4897, %v4899
  %v4901 = vadd.f32 %v4897, %v4900
  %vm4902 = vweird.f32 %v4881
  %vm4903 = vweird.f32 %v4897
  %vm4904 = vmor %vm4902, %vm4903
  %v4905 = vsel %vm4904, %v4897, %v4901
  %v4906 = vand.u32 2147483647, %v4881
  %vm4907 = vcmp.eq.f32.partialorder %v4906, 8.507059e+37
  %v4908 = vand.u32 %v4881, 2147483648
  %v4909 = vor.u32 1.1754944e-38, %v4908
  %v4910 = vsel %vm4907, %v4909, %v4905
  %v4911 = vmul.f32 1.0, %v4910
  %v4912 = vtanh.pop %v4830
  %v4913 = vtanh.pop %v4834
  %v4914 = vxor.u32 %v4831, 2147483648
  %v4915 = vxor.u32 %v4835, 2147483648
  %v4916 = vmul.f32 %v4914, 1.442695
  %v4917 = vpow.pop %v4916
  %v4918 = vmul.f32 %v4915, 1.442695
  %v4919 = vpow.pop %v4918
  %v4920 = vadd.f32 %v4917, 1.0
  %v4921 = vadd.f32 %v4919, 1.0
  %v4922 = vrcp.pop %v4920
  %v4923 = vmul.f32 %v4920, %v4922
  %v4924 = vsub.f32 1.0, %v4923
  %v4925 = vmul.f32 %v4922, %v4924
  %v4926 = vadd.f32 %v4922, %v4925
  %vm4927 = vweird.f32 %v4920
  %vm4928 = vweird.f32 %v4922
  %vm4929 = vmor %vm4927, %vm4928
  %v4930 = vsel %vm4929, %v4922, %v4926
  %v4931 = vand.u32 2147483647, %v4920
  %vm4932 = vcmp.eq.f32.partialorder %v4931, 8.507059e+37
  %v4933 = vand.u32 %v4920, 2147483648
  %v4934 = vor.u32 1.1754944e-38, %v4933
  %v4935 = vsel %vm4932, %v4934, %v4930
  %v4936 = vmul.f32 1.0, %v4935
  %v4937 = vrcp.pop %v4921
  %v4938 = vmul.f32 %v4921, %v4937
  %v4939 = vsub.f32 1.0, %v4938
  %v4940 = vmul.f32 %v4937, %v4939
  %v4941 = vadd.f32 %v4937, %v4940
  %vm4942 = vweird.f32 %v4921
  %vm4943 = vweird.f32 %v4937
  %vm4944 = vmor %vm4942, %vm4943
  %v4945 = vsel %vm4944, %v4937, %v4941
  %v4946 = vand.u32 2147483647, %v4921
  %vm4947 = vcmp.eq.f32.partialorder %v4946, 8.507059e+37
  %v4948 = vand.u32 %v4921, 2147483648
  %v4949 = vor.u32 1.1754944e-38, %v4948
  %v4950 = vsel %vm4947, %v4949, %v4945
  %v4951 = vmul.f32 1.0, %v4950
  %v4952 = vmul.f32 %v4896, %v4750
  %v4953 = vmul.f32 %v4911, %v4751
  %v4954 = vmul.f32 %v4858, %v4912
  %v4955 = vmul.f32 %v4873, %v4913
  %v4956 = vadd.f32 %v4952, %v4954
  %v4957 = vadd.f32 %v4953, %v4955
  %v4958 = vtanh.pop %v4956
  %v4959 = vtanh.pop %v4957
  %v4960 = vmul.f32 %v4936, %v4958
  %v4961 = vmul.f32 %v4951, %v4959
  %s4962 = scalar_lea.vmem %s4, 112
  %4963 = vst [vmem:[%s4962] sm:$0xff] %v4960
  %4964 = vst [vmem:[%s4962 + $0x8] sm:$0xff] %v4961
  %4965 = vst [vmem:[%s3152] sm:$0xff] %v4960
  %4966 = vst [vmem:[%s3152 + $0x8] sm:$0xff] %v4961
  %4967 = vst [vmem:[%s3155] sm:$0xff] %v4956
  %4968 = vst [vmem:[%s3155 + $0x8] sm:$0xff] %v4957
  // Predicated region
  $region22: #{encoder_attention_forward.1} parent=0 // pred_check
    %p4969 = pneg %p20
  $region23: #{encoder_attention_forward.1} parent=0 // pred_check_branch
    %4971 = sbr.rel (%p4969) target = $region25
  $region24: #{encoder_attention_forward.1} parent=0 // pred_region
    %v4972 = vld [vmem:[#allocation2] sm:$0xff]
    %v4973 = vld [vmem:[#allocation2 + $0x8] sm:$0xff]
    %v4974 = vld [vmem:[#allocation2 + $0x10] sm:$0xff]
    %v4975 = vld [vmem:[#allocation2 + $0x18] sm:$0xff]
    %4976 = vst [vmem:[%s5] sm:$0xff] %v4972
    %4977 = vst [vmem:[%s5 + $0x8] sm:$0xff] %v4973
    %4978 = vst [vmem:[%s5 + $0x10] sm:$0xff] %v4974
    %4979 = vst [vmem:[%s5 + $0x18] sm:$0xff] %v4975
    %v4980 = vld [vmem:[#allocation3] sm:$0xff]
    %v4981 = vld [vmem:[#allocation3 + $0x8] sm:$0xff]
    %v4982 = vld [vmem:[#allocation3 + $0x10] sm:$0xff]
    %v4983 = vld [vmem:[#allocation3 + $0x18] sm:$0xff]
    %4984 = vst [vmem:[%s6] sm:$0xff] %v4980
    %4985 = vst [vmem:[%s6 + $0x8] sm:$0xff] %v4981
    %4986 = vst [vmem:[%s6 + $0x10] sm:$0xff] %v4982
    %4987 = vst [vmem:[%s6 + $0x18] sm:$0xff] %v4983
  $region25: #{encoder_attention_forward.1} parent=0 // pred_fallthru
    _
  // Predicated region
  $region26: #{encoder_attention_forward.1} parent=0 // pred_check
    _
  $region27: #{encoder_attention_forward.1} parent=0 // pred_check_branch
    %4989 = sbr.rel (0) target = $region29
  $region28: #{encoder_attention_forward.1} parent=0 // pred_region
    _
  $region29: #{encoder_attention_forward.1} parent=0 // pred_fallthru
    _
  // Predicated region
  $region30: #{encoder_attention_forward.1} parent=0 // pred_check
    _
  $region31: #{encoder_attention_forward.1} parent=0 // pred_check_branch
    %4991 = sbr.rel (0) target = $region33
  $region32: #{encoder_attention_forward.1} parent=0 // pred_region
    _
  $region33: #{encoder_attention_forward.1} parent=0 // pred_fallthru
    _
  // Predicated region
  $region34: #{encoder_attention_forward.1} parent=0 // pred_check
    _
  $region35: #{encoder_attention_forward.1} parent=0 // pred_check_branch
    %4993 = sbr.rel (0) target = $region37
  $region36: #{encoder_attention_forward.1} parent=0 // pred_region
    _
  $region37: #{encoder_attention_forward.1} parent=0 // pred_fallthru
    _
  // Predicated region
  $region38: #{encoder_attention_forward.1} parent=0 // pred_check
    _
  $region39: #{encoder_attention_forward.1} parent=0 // pred_check_branch
    %4995 = sbr.rel (0) target = $region41
  $region40: #{encoder_attention_forward.1} parent=0 // pred_region
    _
  $region41: #{encoder_attention_forward.1} parent=0 // pred_fallthru
    _
  // Predicated region
  $region42: #{encoder_attention_forward.1} parent=0 // pred_check
    _
  $region43: #{encoder_attention_forward.1} parent=0 // pred_check_branch
    %4997 = sbr.rel (0) target = $region45
  $region44: #{encoder_attention_forward.1} parent=0 // pred_region
    _
  $region45: #{encoder_attention_forward.1} parent=0 // pred_fallthru
    _
  // Predicated region
  $region46: #{encoder_attention_forward.1} parent=0 // pred_check
    _
  $region47: #{encoder_attention_forward.1} parent=0 // pred_check_branch
    %4999 = sbr.rel (0) target = $region49
  $region48: #{encoder_attention_forward.1} parent=0 // pred_region
    _
  $region49: #{encoder_attention_forward.1} parent=0 // pred_fallthru
    _

</llo_original>
